<compile_context>
chip_gen: v5e
topology: v5e:2x2
jax: 0.10.0
libtpu: 0.0.40
codegen_flags: <defaults>
</compile_context>

<pallas_src>
import jax
import jax.numpy as jnp
from jax import lax
from jax.experimental import pallas as pl
from jax.experimental.pallas import tpu as pltpu

OB_NUM = 16                 # observation dim (ob_num in the PyTorch script)
AC_NUM = 8                  # action dim (ac_num in the PyTorch script)
H1, H1_PAD = 400, 512
H2, H2_PAD = 300, 384
OUT, OUT_PAD = 1, 128       # OUT_PAD only pads the fc3 matmul, never the output store
EPS = 1e-5


def _bf16_vpu_available() -> bool:
    """bf16 VALUs exist on v6e/v7x; v5e and older emulate bf16 elementwise math."""
    try:
        kind = jax.devices()[0].device_kind.lower()
    except Exception:
        return False
    return not any(tag in kind for tag in ("v2", "v3", "v4", "v5"))


# Compile-time choice of the BN/ReLU epilogue dtype (f32 on v5e, bf16 on v6e/v7x).
ACT_DTYPE = jnp.bfloat16 if _bf16_vpu_available() else jnp.float32


def _to_mxu(v):
    """Cast to bfloat16 for the MXU if not already."""
    return v if v.dtype == jnp.bfloat16 else v.astype(jnp.bfloat16)


def _batchnorm(h, gamma, beta, act_dtype):
    """Training-mode BatchNorm1d with per-group batch statistics.

    h: (Gb, B, N) float32 — stats over axis=1 (the batch of each group).
    gamma/beta: (1, N).  Mean/var/rsqrt stay f32 (EUP rsqrt); the big (B, N)
    scale/shift apply pass runs in `act_dtype`.  Padded feature columns
    (all-zero h, gamma=0, beta=0) stay exactly zero.
    """
    mean = jnp.mean(h, axis=1, keepdims=True)                 # (Gb, 1, N)
    mean_sq = jnp.mean(h * h, axis=1, keepdims=True)
    var = jnp.maximum(mean_sq - mean * mean, 0.0)             # biased batch var
    inv = lax.rsqrt(var + EPS)                                # EUP slot
    scale = gamma * inv                                       # (Gb, 1, N) f32
    shift = beta - mean * scale
    return (h.astype(act_dtype) * scale.astype(act_dtype)
            + shift.astype(act_dtype))                        # one (B, N) VPU pass


def net2_kernel(x_ref, a_ref,
                g0_ref, be0_ref,
                w1_ref, g1_ref, be1_ref,
                w2s_ref, w2a_ref, b2_ref,
                w3_ref, b3_ref,
                o_ref):
    gb, bsz, _ = x_ref.shape
    rows = gb * bsz

    # bn0 (per-group batch statistics)
    h0 = _batchnorm(x_ref[...], g0_ref[...], be0_ref[...], ACT_DTYPE)

    # fc1 — bias omitted on purpose: it cancels exactly against bn1's mean
    # subtraction.  bf16 MXU inputs, f32 accumulation.
    h1 = jnp.dot(_to_mxu(h0).reshape(rows, OB_NUM), w1_ref[...],
                 preferred_element_type=jnp.float32)

    # bn1 -> relu (per-group stats, fused scale/shift epilogue in ACT_DTYPE)
    h1 = _batchnorm(h1.reshape(gb, bsz, H1_PAD), g1_ref[...], be1_ref[...],
                    ACT_DTYPE)
    h1 = jnp.maximum(h1, 0.0).reshape(rows, H1_PAD)

    # fc2_state(x) + fc2_action(a) -> relu.  Both biases pre-summed into b2.
    # The two dots are adjacent and summed into one f32 accumulator (v7x MRB
    # can accumulate in place).
    h2 = (jnp.dot(_to_mxu(h1), w2s_ref[...], preferred_element_type=jnp.float32)
          + jnp.dot(a_ref[...].reshape(rows, AC_NUM), w2a_ref[...],
                    preferred_element_type=jnp.float32)
          + b2_ref[...])
    h2 = jnp.maximum(h2, 0.0)

    # fc3 — the matmul is lane-padded (H2_PAD x OUT_PAD) for clean MXU tiles,
    # but only the single real column is stored back (no padded HBM writeback).
    out = jnp.dot(_to_mxu(h2), w3_ref[...], preferred_element_type=jnp.float32)
    out = out[:, :OUT] + b3_ref[:, :OUT]
    o_ref[...] = out.reshape(gb, bsz, OUT).astype(o_ref.dtype)


def _pick_group_block(G):
    """Largest group block (<=8) dividing G, preferring an even grid length so
    v7x can shard the parallel axis across both TensorCores."""
    for gbk in (8, 4, 2, 1):
        if G % gbk == 0 and (G // gbk) % 2 == 0:
            return gbk
    for gbk in (8, 4, 2, 1):
        if G % gbk == 0:
            return gbk
    return 1


def net2_forward(x, a, params, *, group_block=None):
    """x: (G, B, OB_NUM) f32, a: (G, B, AC_NUM).

    Each slice along the leading axis is an *independent* batch (its own
    BatchNorm statistics) — equivalent to G separate PyTorch forward calls.
    Returns (G, B, 1) float32.
    """
    G, B, ob = x.shape
    assert ob == OB_NUM
    assert a.shape == (G, B, AC_NUM)
    assert B % 8 == 0, "batch per group must be a multiple of 8 (sublane)"

    gbk = _pick_group_block(G) if group_block is None else group_block
    assert G % gbk == 0

    # Pre-cast actions to bf16 (halves the action DMA, removes in-kernel cast).
    a_bf16 = a if a.dtype == jnp.bfloat16 else a.astype(jnp.bfloat16)

    weight_args = (
        params["g0"], params["be0"],
        params["w1"], params["g1"], params["be1"],
        params["w2s"], params["w2a"], params["b2"],
        params["w3"], params["b3"],
    )

    def whole(arr):
        # All params are 2-D; same block every grid step -> DMA'd once, resident.
        return pl.BlockSpec(arr.shape, lambda g: (0, 0))

    out = pl.pallas_call(
        net2_kernel,
        out_shape=jax.ShapeDtypeStruct((G, B, OUT), jnp.float32),
        grid=(G // gbk,),
        in_specs=[
            pl.BlockSpec((gbk, B, OB_NUM), lambda g: (g, 0, 0)),
            pl.BlockSpec((gbk, B, AC_NUM), lambda g: (g, 0, 0)),
        ] + [whole(w) for w in weight_args],
        out_specs=pl.BlockSpec((gbk, B, OUT), lambda g: (g, 0, 0)),
        compiler_params=pltpu.CompilerParams(
            dimension_semantics=("parallel",)),
    )(x, a_bf16, *weight_args)

    return out


def init_params(key):
    """PyTorch-default init, stored padded, pre-transposed, weights in bf16.

    Linear: W, b ~ U(-1/sqrt(fan_in), 1/sqrt(fan_in)); weights stored as
    (in_features, out_features) so y = x @ W + b, zero-padded to lane-aligned
    shapes.  BatchNorm: gamma=1, beta=0 (gamma=0 in padded lanes -> inert).
    fc2_state / fc2_action biases are pre-summed into b2 (exact fold).
    b1 is kept only for the pure-JAX reference (the kernel drops it, since it
    cancels against bn1).
    """
    ks = jax.random.split(key, 8)

    def linear(kw, kb, fan_in, fan_out, pad_in, pad_out):
        bound = 1.0 / (fan_in ** 0.5)
        w = jax.random.uniform(kw, (fan_in, fan_out), jnp.float32, -bound, bound)
        b = jax.random.uniform(kb, (1, fan_out), jnp.float32, -bound, bound)
        w_pad = jnp.zeros((pad_in, pad_out), jnp.float32).at[:fan_in, :fan_out].set(w)
        b_pad = jnp.zeros((1, pad_out), jnp.float32).at[:, :fan_out].set(b)
        return w_pad, b_pad

    w1, b1 = linear(ks[0], ks[1], OB_NUM, H1, OB_NUM, H1_PAD)
    w2s, b2s = linear(ks[2], ks[3], H1, H2, H1_PAD, H2_PAD)
    w2a, b2a = linear(ks[4], ks[5], AC_NUM, H2, AC_NUM, H2_PAD)
    w3, b3 = linear(ks[6], ks[7], H2, OUT, H2_PAD, OUT_PAD)

    def bn(n, n_pad):
        g = jnp.zeros((1, n_pad), jnp.float32).at[:, :n].set(1.0)
        be = jnp.zeros((1, n_pad), jnp.float32)
        return g, be

    g0, be0 = bn(OB_NUM, OB_NUM)
    g1, be1 = bn(H1, H1_PAD)

    return dict(
        w1=w1.astype(jnp.bfloat16), b1=b1,
        w2s=w2s.astype(jnp.bfloat16), w2a=w2a.astype(jnp.bfloat16),
        b2=b2s + b2a,
        w3=w3.astype(jnp.bfloat16), b3=b3,
        g0=g0, be0=be0, g1=g1, be1=be1,
    )


def net2_reference(x, a, params):
    """Pure-JAX reference with the same padding / bf16-weight quantization.

    Keeps the fc1 bias (as PyTorch does) to verify that dropping it inside the
    kernel is an exact transformation.
    """
    def bn(h, g, be):
        mean = jnp.mean(h, axis=0, keepdims=True)
        var = jnp.mean((h - mean) ** 2, axis=0, keepdims=True)
        return g * (h - mean) * lax.rsqrt(var + EPS) + be

    def one(xg, ag):
        f32 = jnp.float32
        h = bn(xg, params["g0"], params["be0"])
        h = jnp.dot(h.astype(jnp.bfloat16), params["w1"],
                    preferred_element_type=f32) + params["b1"]
        h = jnp.maximum(bn(h, params["g1"], params["be1"]), 0.0)
        h = (jnp.dot(h.astype(jnp.bfloat16), params["w2s"],
                     preferred_element_type=f32)
             + jnp.dot(ag.astype(jnp.bfloat16), params["w2a"],
                       preferred_element_type=f32)
             + params["b2"])
        h = jnp.maximum(h, 0.0)
        out = jnp.dot(h.astype(jnp.bfloat16), params["w3"],
                      preferred_element_type=f32) + params["b3"]
        return out[:, :OUT]

    return jax.vmap(one)(x, a)


if __name__ == "__main__":
    key = jax.random.PRNGKey(0)
    k_x, k_a, k_p = jax.random.split(key, 3)

    G, B = 4, 128          # 4 independent batches of 128 rows each
    x = jax.random.normal(k_x, (G, B, OB_NUM), jnp.float32)
    a = jax.random.normal(k_a, (G, B, AC_NUM), jnp.float32)
    params = init_params(k_p)

    out = net2_forward(x, a, params)
    out = jax.block_until_ready(out)

    assert out.shape == (G, B, OUT)
    assert bool(jnp.all(jnp.isfinite(out)))

    ref = net2_reference(x, a, params)
    assert bool(jnp.allclose(out, ref, rtol=1e-2, atol=2e-2))

    print("KERNEL_OK")
</pallas_src>

<mosaic_0001>
module attributes {stable_mosaic.version = 11 : i64} {
  func.func @net2_kernel(%arg0: i32, %arg1: memref<2x128x16xf32, #tpu.memory_space<vmem>>, %arg2: memref<2x128x8xbf16, #tpu.memory_space<vmem>>, %arg3: memref<1x16xf32, #tpu.memory_space<vmem>>, %arg4: memref<1x16xf32, #tpu.memory_space<vmem>>, %arg5: memref<16x512xbf16, #tpu.memory_space<vmem>>, %arg6: memref<1x512xf32, #tpu.memory_space<vmem>>, %arg7: memref<1x512xf32, #tpu.memory_space<vmem>>, %arg8: memref<512x384xbf16, #tpu.memory_space<vmem>>, %arg9: memref<8x384xbf16, #tpu.memory_space<vmem>>, %arg10: memref<1x384xf32, #tpu.memory_space<vmem>>, %arg11: memref<384x128xbf16, #tpu.memory_space<vmem>>, %arg12: memref<1x128xf32, #tpu.memory_space<vmem>>, %arg13: memref<2x128x1xf32, #tpu.memory_space<vmem>>) attributes {dimension_semantics = [#tpu.dimension_semantics<parallel>], iteration_bounds = array<i64: 2>, scalar_prefetch = 0 : i64, scratch_operands = 0 : i64, tpu.core_type = #tpu.core_type<tc>, window_params = [{transform_indices = @transform_0, window_bounds = array<i64: 2, 128, 16>}, {transform_indices = @transform_1, window_bounds = array<i64: 2, 128, 8>}, {pipeline_mode = #tpu.pipeline_mode<synchronous>, transform_indices = @transform_2, window_bounds = array<i64: 1, 16>}, {pipeline_mode = #tpu.pipeline_mode<synchronous>, transform_indices = @transform_3, window_bounds = array<i64: 1, 16>}, {pipeline_mode = #tpu.pipeline_mode<synchronous>, transform_indices = @transform_4, window_bounds = array<i64: 16, 512>}, {pipeline_mode = #tpu.pipeline_mode<synchronous>, transform_indices = @transform_5, window_bounds = array<i64: 1, 512>}, {pipeline_mode = #tpu.pipeline_mode<synchronous>, transform_indices = @transform_6, window_bounds = array<i64: 1, 512>}, {pipeline_mode = #tpu.pipeline_mode<synchronous>, transform_indices = @transform_7, window_bounds = array<i64: 512, 384>}, {pipeline_mode = #tpu.pipeline_mode<synchronous>, transform_indices = @transform_8, window_bounds = array<i64: 8, 384>}, {pipeline_mode = #tpu.pipeline_mode<synchronous>, transform_indices = @transform_9, window_bounds = array<i64: 1, 384>}, {pipeline_mode = #tpu.pipeline_mode<synchronous>, transform_indices = @transform_10, window_bounds = array<i64: 384, 128>}, {pipeline_mode = #tpu.pipeline_mode<synchronous>, transform_indices = @transform_11, window_bounds = array<i64: 1, 128>}, {transform_indices = @transform_12, window_bounds = array<i64: 2, 128, 1>}]} {
    %c0 = arith.constant 0 : index
    %c0_0 = arith.constant 0 : index
    %c0_1 = arith.constant 0 : index
    %0 = vector.load %arg1[%c0, %c0_0, %c0_1] : memref<2x128x16xf32, #tpu.memory_space<vmem>>, vector<2x128x16xf32>
    %c0_2 = arith.constant 0 : index
    %c0_3 = arith.constant 0 : index
    %1 = vector.load %arg3[%c0_2, %c0_3] : memref<1x16xf32, #tpu.memory_space<vmem>>, vector<1x16xf32>
    %c0_4 = arith.constant 0 : index
    %c0_5 = arith.constant 0 : index
    %2 = vector.load %arg4[%c0_4, %c0_5] : memref<1x16xf32, #tpu.memory_space<vmem>>, vector<1x16xf32>
    %cst = arith.constant dense<0.000000e+00> : vector<2x16xf32>
    %3 = vector.multi_reduction <add>, %0, %cst [1] : vector<2x128x16xf32> to vector<2x16xf32>
    %4 = vector.shape_cast %3 : vector<2x16xf32> to vector<2x1x16xf32>
    %cst_6 = arith.constant 1.280000e+02 : f32
    %5 = vector.broadcast %cst_6 : f32 to vector<2x1x16xf32>
    %6 = arith.divf %4, %5 : vector<2x1x16xf32>
    %7 = arith.mulf %0, %0 : vector<2x128x16xf32>
    %cst_7 = arith.constant dense<0.000000e+00> : vector<2x16xf32>
    %8 = vector.multi_reduction <add>, %7, %cst_7 [1] : vector<2x128x16xf32> to vector<2x16xf32>
    %9 = vector.shape_cast %8 : vector<2x16xf32> to vector<2x1x16xf32>
    %cst_8 = arith.constant 1.280000e+02 : f32
    %10 = vector.broadcast %cst_8 : f32 to vector<2x1x16xf32>
    %11 = arith.divf %9, %10 : vector<2x1x16xf32>
    %12 = arith.mulf %6, %6 : vector<2x1x16xf32>
    %13 = arith.subf %11, %12 : vector<2x1x16xf32>
    %cst_9 = arith.constant 0.000000e+00 : f32
    %14 = vector.broadcast %cst_9 : f32 to vector<2x1x16xf32>
    %15 = arith.maximumf %13, %14 : vector<2x1x16xf32>
    %cst_10 = arith.constant 9.99999974E-6 : f32
    %16 = vector.broadcast %cst_10 : f32 to vector<2x1x16xf32>
    %17 = arith.addf %15, %16 : vector<2x1x16xf32>
    %18 = math.rsqrt %17 : vector<2x1x16xf32>
    %19 = vector.shape_cast %1 : vector<1x16xf32> to vector<1x1x16xf32>
    %20 = vector.broadcast %19 : vector<1x1x16xf32> to vector<2x1x16xf32>
    %21 = arith.mulf %20, %18 : vector<2x1x16xf32>
    %22 = arith.mulf %6, %21 : vector<2x1x16xf32>
    %23 = vector.shape_cast %2 : vector<1x16xf32> to vector<1x1x16xf32>
    %24 = vector.broadcast %23 : vector<1x1x16xf32> to vector<2x1x16xf32>
    %25 = arith.subf %24, %22 : vector<2x1x16xf32>
    %26 = arith.truncf %0 : vector<2x128x16xf32> to vector<2x128x16xbf16>
    %27 = arith.truncf %21 : vector<2x1x16xf32> to vector<2x1x16xbf16>
    %28 = vector.broadcast %27 : vector<2x1x16xbf16> to vector<2x128x16xbf16>
    %29 = arith.mulf %26, %28 : vector<2x128x16xbf16>
    %30 = arith.truncf %25 : vector<2x1x16xf32> to vector<2x1x16xbf16>
    %31 = vector.broadcast %30 : vector<2x1x16xbf16> to vector<2x128x16xbf16>
    %32 = arith.addf %29, %31 : vector<2x128x16xbf16>
    %33 = vector.shape_cast %32 : vector<2x128x16xbf16> to vector<256x16xbf16>
    %c0_11 = arith.constant 0 : index
    %c0_12 = arith.constant 0 : index
    %34 = vector.load %arg5[%c0_11, %c0_12] : memref<16x512xbf16, #tpu.memory_space<vmem>>, vector<16x512xbf16>
    %cst_13 = arith.constant dense<0.000000e+00> : vector<256x512xf32>
    %35 = tpu.matmul %33, %34, %cst_13 {dimension_numbers = #tpu.dot_dimension_numbers<[1], [0], [0], [1], [0, 0, 1, 1], [], []>} : vector<256x16xbf16>, vector<16x512xbf16>, vector<256x512xf32> -> vector<256x512xf32>
    %36 = vector.shape_cast %35 : vector<256x512xf32> to vector<2x128x512xf32>
    %c0_14 = arith.constant 0 : index
    %c0_15 = arith.constant 0 : index
    %37 = vector.load %arg6[%c0_14, %c0_15] : memref<1x512xf32, #tpu.memory_space<vmem>>, vector<1x512xf32>
    %c0_16 = arith.constant 0 : index
    %c0_17 = arith.constant 0 : index
    %38 = vector.load %arg7[%c0_16, %c0_17] : memref<1x512xf32, #tpu.memory_space<vmem>>, vector<1x512xf32>
    %cst_18 = arith.constant dense<0.000000e+00> : vector<2x512xf32>
    %39 = vector.multi_reduction <add>, %36, %cst_18 [1] : vector<2x128x512xf32> to vector<2x512xf32>
    %40 = vector.shape_cast %39 : vector<2x512xf32> to vector<2x1x512xf32>
    %cst_19 = arith.constant 1.280000e+02 : f32
    %41 = vector.broadcast %cst_19 : f32 to vector<2x1x512xf32>
    %42 = arith.divf %40, %41 : vector<2x1x512xf32>
    %43 = arith.mulf %36, %36 : vector<2x128x512xf32>
    %cst_20 = arith.constant dense<0.000000e+00> : vector<2x512xf32>
    %44 = vector.multi_reduction <add>, %43, %cst_20 [1] : vector<2x128x512xf32> to vector<2x512xf32>
    %45 = vector.shape_cast %44 : vector<2x512xf32> to vector<2x1x512xf32>
    %cst_21 = arith.constant 1.280000e+02 : f32
    %46 = vector.broadcast %cst_21 : f32 to vector<2x1x512xf32>
    %47 = arith.divf %45, %46 : vector<2x1x512xf32>
    %48 = arith.mulf %42, %42 : vector<2x1x512xf32>
    %49 = arith.subf %47, %48 : vector<2x1x512xf32>
    %cst_22 = arith.constant 0.000000e+00 : f32
    %50 = vector.broadcast %cst_22 : f32 to vector<2x1x512xf32>
    %51 = arith.maximumf %49, %50 : vector<2x1x512xf32>
    %cst_23 = arith.constant 9.99999974E-6 : f32
    %52 = vector.broadcast %cst_23 : f32 to vector<2x1x512xf32>
    %53 = arith.addf %51, %52 : vector<2x1x512xf32>
    %54 = math.rsqrt %53 : vector<2x1x512xf32>
    %55 = vector.shape_cast %37 : vector<1x512xf32> to vector<1x1x512xf32>
    %56 = vector.broadcast %55 : vector<1x1x512xf32> to vector<2x1x512xf32>
    %57 = arith.mulf %56, %54 : vector<2x1x512xf32>
    %58 = arith.mulf %42, %57 : vector<2x1x512xf32>
    %59 = vector.shape_cast %38 : vector<1x512xf32> to vector<1x1x512xf32>
    %60 = vector.broadcast %59 : vector<1x1x512xf32> to vector<2x1x512xf32>
    %61 = arith.subf %60, %58 : vector<2x1x512xf32>
    %62 = arith.truncf %36 : vector<2x128x512xf32> to vector<2x128x512xbf16>
    %63 = arith.truncf %57 : vector<2x1x512xf32> to vector<2x1x512xbf16>
    %64 = vector.broadcast %63 : vector<2x1x512xbf16> to vector<2x128x512xbf16>
    %65 = arith.mulf %62, %64 : vector<2x128x512xbf16>
    %66 = arith.truncf %61 : vector<2x1x512xf32> to vector<2x1x512xbf16>
    %67 = vector.broadcast %66 : vector<2x1x512xbf16> to vector<2x128x512xbf16>
    %68 = arith.addf %65, %67 : vector<2x128x512xbf16>
    %cst_24 = arith.constant 0.000000e+00 : bf16
    %69 = vector.broadcast %cst_24 : bf16 to vector<2x128x512xbf16>
    %70 = arith.maximumf %68, %69 : vector<2x128x512xbf16>
    %71 = vector.shape_cast %70 : vector<2x128x512xbf16> to vector<256x512xbf16>
    %c0_25 = arith.constant 0 : index
    %c0_26 = arith.constant 0 : index
    %72 = vector.load %arg8[%c0_25, %c0_26] : memref<512x384xbf16, #tpu.memory_space<vmem>>, vector<512x384xbf16>
    %cst_27 = arith.constant dense<0.000000e+00> : vector<256x384xf32>
    %73 = tpu.matmul %71, %72, %cst_27 {dimension_numbers = #tpu.dot_dimension_numbers<[1], [0], [0], [1], [0, 0, 1, 1], [], []>} : vector<256x512xbf16>, vector<512x384xbf16>, vector<256x384xf32> -> vector<256x384xf32>
    %c0_28 = arith.constant 0 : index
    %c0_29 = arith.constant 0 : index
    %c0_30 = arith.constant 0 : index
    %74 = vector.load %arg2[%c0_28, %c0_29, %c0_30] : memref<2x128x8xbf16, #tpu.memory_space<vmem>>, vector<2x128x8xbf16>
    %75 = vector.shape_cast %74 : vector<2x128x8xbf16> to vector<256x8xbf16>
    %c0_31 = arith.constant 0 : index
    %c0_32 = arith.constant 0 : index
    %76 = vector.load %arg9[%c0_31, %c0_32] : memref<8x384xbf16, #tpu.memory_space<vmem>>, vector<8x384xbf16>
    %cst_33 = arith.constant dense<0.000000e+00> : vector<256x384xf32>
    %77 = tpu.matmul %75, %76, %cst_33 {dimension_numbers = #tpu.dot_dimension_numbers<[1], [0], [0], [1], [0, 0, 1, 1], [], []>} : vector<256x8xbf16>, vector<8x384xbf16>, vector<256x384xf32> -> vector<256x384xf32>
    %78 = arith.addf %73, %77 : vector<256x384xf32>
    %c0_34 = arith.constant 0 : index
    %c0_35 = arith.constant 0 : index
    %79 = vector.load %arg10[%c0_34, %c0_35] : memref<1x384xf32, #tpu.memory_space<vmem>>, vector<1x384xf32>
    %80 = vector.broadcast %79 : vector<1x384xf32> to vector<256x384xf32>
    %81 = arith.addf %78, %80 : vector<256x384xf32>
    %cst_36 = arith.constant 0.000000e+00 : f32
    %82 = vector.broadcast %cst_36 : f32 to vector<256x384xf32>
    %83 = arith.maximumf %81, %82 : vector<256x384xf32>
    %84 = arith.truncf %83 : vector<256x384xf32> to vector<256x384xbf16>
    %c0_37 = arith.constant 0 : index
    %c0_38 = arith.constant 0 : index
    %85 = vector.load %arg11[%c0_37, %c0_38] : memref<384x128xbf16, #tpu.memory_space<vmem>>, vector<384x128xbf16>
    %cst_39 = arith.constant dense<0.000000e+00> : vector<256x128xf32>
    %86 = tpu.matmul %84, %85, %cst_39 {dimension_numbers = #tpu.dot_dimension_numbers<[1], [0], [0], [1], [0, 0, 1, 1], [], []>} : vector<256x384xbf16>, vector<384x128xbf16>, vector<256x128xf32> -> vector<256x128xf32>
    %87 = vector.extract_strided_slice %86 {offsets = [0, 0], sizes = [256, 1], strides = [1, 1]} : vector<256x128xf32> to vector<256x1xf32>
    %c0_40 = arith.constant 0 : index
    %c0_41 = arith.constant 0 : index
    %88 = vector.load %arg12[%c0_40, %c0_41] : memref<1x128xf32, #tpu.memory_space<vmem>>, vector<1x1xf32>
    %89 = vector.broadcast %88 : vector<1x1xf32> to vector<256x1xf32>
    %90 = arith.addf %87, %89 : vector<256x1xf32>
    %91 = vector.shape_cast %90 : vector<256x1xf32> to vector<2x128x1xf32>
    %c0_42 = arith.constant 0 : index
    %c0_43 = arith.constant 0 : index
    %c0_44 = arith.constant 0 : index
    %92 = vector.load %arg13[%c0_42, %c0_43, %c0_44] : memref<2x128x1xf32, #tpu.memory_space<vmem>>, vector<2x128x1xf32>
    tpu.vector_store %arg13[%c0_42, %c0_43, %c0_44], %91 {strides = array<i32>} : memref<2x128x1xf32, #tpu.memory_space<vmem>>, vector<2x128x1xf32>,
    return
  }
  func.func @transform_0(%arg0: i32) -> (i32, i32, i32) {
    %c0_i32 = arith.constant 0 : i32
    %c0_i32_0 = arith.constant 0 : i32
    %c0_i32_1 = arith.constant 0 : i32
    return %arg0, %c0_i32, %c0_i32_0 : i32, i32, i32
  }
  func.func @transform_1(%arg0: i32) -> (i32, i32, i32) {
    %c0_i32 = arith.constant 0 : i32
    %c0_i32_0 = arith.constant 0 : i32
    %c0_i32_1 = arith.constant 0 : i32
    return %arg0, %c0_i32, %c0_i32_0 : i32, i32, i32
  }
  func.func @transform_2(%arg0: i32) -> (i32, i32) {
    %c0_i32 = arith.constant 0 : i32
    %c0_i32_0 = arith.constant 0 : i32
    %c0_i32_1 = arith.constant 0 : i32
    return %c0_i32, %c0_i32_0 : i32, i32
  }
  func.func @transform_3(%arg0: i32) -> (i32, i32) {
    %c0_i32 = arith.constant 0 : i32
    %c0_i32_0 = arith.constant 0 : i32
    %c0_i32_1 = arith.constant 0 : i32
    return %c0_i32, %c0_i32_0 : i32, i32
  }
  func.func @transform_4(%arg0: i32) -> (i32, i32) {
    %c0_i32 = arith.constant 0 : i32
    %c0_i32_0 = arith.constant 0 : i32
    %c0_i32_1 = arith.constant 0 : i32
    return %c0_i32, %c0_i32_0 : i32, i32
  }
  func.func @transform_5(%arg0: i32) -> (i32, i32) {
    %c0_i32 = arith.constant 0 : i32
    %c0_i32_0 = arith.constant 0 : i32
    %c0_i32_1 = arith.constant 0 : i32
    return %c0_i32, %c0_i32_0 : i32, i32
  }
  func.func @transform_6(%arg0: i32) -> (i32, i32) {
    %c0_i32 = arith.constant 0 : i32
    %c0_i32_0 = arith.constant 0 : i32
    %c0_i32_1 = arith.constant 0 : i32
    return %c0_i32, %c0_i32_0 : i32, i32
  }
  func.func @transform_7(%arg0: i32) -> (i32, i32) {
    %c0_i32 = arith.constant 0 : i32
    %c0_i32_0 = arith.constant 0 : i32
    %c0_i32_1 = arith.constant 0 : i32
    return %c0_i32, %c0_i32_0 : i32, i32
  }
  func.func @transform_8(%arg0: i32) -> (i32, i32) {
    %c0_i32 = arith.constant 0 : i32
    %c0_i32_0 = arith.constant 0 : i32
    %c0_i32_1 = arith.constant 0 : i32
    return %c0_i32, %c0_i32_0 : i32, i32
  }
  func.func @transform_9(%arg0: i32) -> (i32, i32) {
    %c0_i32 = arith.constant 0 : i32
    %c0_i32_0 = arith.constant 0 : i32
    %c0_i32_1 = arith.constant 0 : i32
    return %c0_i32, %c0_i32_0 : i32, i32
  }
  func.func @transform_10(%arg0: i32) -> (i32, i32) {
    %c0_i32 = arith.constant 0 : i32
    %c0_i32_0 = arith.constant 0 : i32
    %c0_i32_1 = arith.constant 0 : i32
    return %c0_i32, %c0_i32_0 : i32, i32
  }
  func.func @transform_11(%arg0: i32) -> (i32, i32) {
    %c0_i32 = arith.constant 0 : i32
    %c0_i32_0 = arith.constant 0 : i32
    %c0_i32_1 = arith.constant 0 : i32
    return %c0_i32, %c0_i32_0 : i32, i32
  }
  func.func @transform_12(%arg0: i32) -> (i32, i32, i32) {
    %c0_i32 = arith.constant 0 : i32
    %c0_i32_0 = arith.constant 0 : i32
    %c0_i32_1 = arith.constant 0 : i32
    return %arg0, %c0_i32, %c0_i32_0 : i32, i32, i32
  }
}

</mosaic_0001>

<llo_original>
// kernel: tpu_custom_call.1
$region0: #{tpu_custom_call.1}
  #allocation0 [shape = 'u32[]', space=smem, size = 0x4, offset = 0x4, fixed_abs, tag = 'smem constant byte address 0x4 - core index']
  #allocation1 [shape = 'u32[72,128]{1,0:T(1,128)}', space=vmem, size = 0x9000, scoped, tag = 'internal scratch']
  %s0 = inlined_call_operand.vmem [shape: f32[4,128,16], index: 0, kind: input, shape index: {}]
  %s1 = inlined_call_operand.vmem [shape: bf16[4,128,8], index: 1, kind: input, shape index: {}]
  %s2 = inlined_call_operand.hbm [shape: f32[1,16], index: 2, kind: input, shape index: {}]
  %s3 = inlined_call_operand.hbm [shape: f32[1,16], index: 3, kind: input, shape index: {}]
  %s4 = inlined_call_operand.hbm [shape: bf16[16,512], index: 4, kind: input, shape index: {}]
  %s5 = inlined_call_operand.vmem [shape: f32[1,512], index: 5, kind: input, shape index: {}]
  %s6 = inlined_call_operand.hbm [shape: f32[1,512], index: 6, kind: input, shape index: {}]
  %s7 = inlined_call_operand.vmem [shape: bf16[512,384], index: 7, kind: input, shape index: {}]
  %s8 = inlined_call_operand.vmem [shape: bf16[8,384], index: 8, kind: input, shape index: {}]
  %s9 = inlined_call_operand.vmem [shape: f32[1,384], index: 9, kind: input, shape index: {}]
  %s10 = inlined_call_operand.hbm [shape: bf16[384,128], index: 10, kind: input, shape index: {}]
  %s11 = inlined_call_operand.vmem [shape: f32[1,128], index: 11, kind: input, shape index: {}]
  %s12 = inlined_call_operand.vmem [shape: f32[4,128,1], index: 12, kind: output, shape index: {}]
  %s13 = sld [smem:[#allocation0]]
  $region101: #{tpu_custom_call.1} parent=0
    _
  %s15 = ssub.s32 1, %s13
  %s16 = scalar_select 0, %s15, %s13
  $region1: #{tpu_custom_call.1} parent=0
    #allocation2 [shape = 'u8[512]{0}', space=vmem, size = 0x400, scoped, tag = 'input window, operand 2, single buffered']
    #allocation3 [shape = 's32[2]{0}', space=sflag, size = 0x8, scoped, tag = 'scoped memory for tpu_custom_call.1']
    #allocation4 [shape = 'u8[512]{0}', space=vmem, size = 0x400, scoped, tag = 'input window, operand 3, single buffered']
    #allocation5 [shape = 's32[1]{0}', space=sflag, size = 0x4, scoped, tag = 'scoped memory for tpu_custom_call.1']
    #allocation6 [shape = 'u8[16384]{0}', space=vmem, size = 0x4000, scoped, tag = 'input window, operand 4, single buffered']
    #allocation7 [shape = 'u8[2048]{0}', space=vmem, size = 0x800, scoped, tag = 'input window, operand 6, single buffered']
    #allocation8 [shape = 's32[1]{0}', space=sflag, size = 0x4, scoped, tag = 'scoped memory for tpu_custom_call.1']
    #allocation9 [shape = 'u8[98304]{0}', space=vmem, size = 0x18000, scoped, tag = 'input window, operand 10, single buffered']
    %17 = vsyncpa [#allocation3], 0
    %18 = vsyncpa [#allocation5], 0
    %19 = vsyncpa [#allocation8], 0
    loop: start=0, step=1, limit=4
    $region2: #{tpu_custom_call.1} parent=1 // loop_pre_header
      _
    $region3: #{tpu_custom_call.1} parent=1 // loop_header
      %s21 = sphi 0, %s25
      %p22 = scmp.ge.s32.totalorder %s21, 4
      %s31 = sphi 0, %s33
      %s34 = sphi 0, %s31
      %s35 = sphi 0, %s34
      %s51 = sphi 0, %s35
      %s57 = sphi 0, %s59
      %s60 = sphi 0, %s57
      %s61 = sphi 0, %s60
      %s77 = sphi 0, %s61
      %s81 = sphi 0, %s81
      %s83 = sphi 0, %s81
      %s84 = sphi 0, %s83
      %s98 = sphi 0, %s84
      %s102 = sphi 0, %s102
      %s104 = sphi 0, %s102
      %s105 = sphi 0, %s104
      %s119 = sphi 0, %s105
      %s123 = sphi 0, %s123
      %s125 = sphi 0, %s123
      %s126 = sphi 0, %s125
      %s140 = sphi 0, %s126
      %s144 = sphi 0, %s144
      %s146 = sphi 0, %s144
      %s147 = sphi 0, %s146
      %s161 = sphi 0, %s147
      %s165 = sphi 0, %s165
      %s167 = sphi 0, %s165
      %s168 = sphi 0, %s167
      %s182 = sphi 0, %s168
      %s186 = sphi 0, %s186
      %s188 = sphi 0, %s186
      %s189 = sphi 0, %s188
      %s203 = sphi 0, %s189
      %s207 = sphi 0, %s207
      %s209 = sphi 0, %s207
      %s210 = sphi 0, %s209
      %s224 = sphi 0, %s210
      %s228 = sphi 0, %s228
      %s230 = sphi 0, %s228
      %s231 = sphi 0, %s230
      %s245 = sphi 0, %s231
      %s249 = sphi 0, %s249
      %s251 = sphi 0, %s249
      %s252 = sphi 0, %s251
      %s266 = sphi 0, %s252
      %s270 = sphi 0, %s270
      %s272 = sphi 0, %s270
      %s273 = sphi 0, %s272
      %s287 = sphi 0, %s273
      %s293 = sphi 0, %s295
      %s296 = sphi 0, %s293
      %s297 = sphi 0, %s296
      %s313 = sphi 0, %s297
    $region4: #{tpu_custom_call.1} parent=1 // loop_header_branch
      %24 = sbr.rel (%p22) target = $region8
    $region5: #{tpu_custom_call.1} parent=1 // loop_body
      %s26 = ssub.s32 %s21, 1
      %s27 = ssub.s32 %s21, 2
      %s28 = sadd.s32 %s21, 1
      %s29 = ssub.s32 %s21, %s28
      %p30 = scmp.eq.s32.totalorder %s29, 0
      %s32 = sadd.s32 %s31, 1
      %s33 = scalar_select %p30, %s31, %s32
      %p36 = pneg %p30
      %p37 = scmp.eq.s32.totalorder %s21, 1
      %p38 = por %p36, %p37
      %p39 = scmp.ne.s32.totalorder %s31, %s34
      %p40 = scmp.eq.s32.totalorder %s21, 0
      %p41 = por %p39, %p40
      %p42 = scmp.ne.s32.totalorder %s31, %s34
      %p43 = scmp.eq.s32.totalorder %s26, 1
      %p44 = por %p42, %p43
      %p45 = scmp.ne.s32.totalorder %s34, %s35
      %p46 = scmp.eq.s32.totalorder %s26, 0
      %p47 = por %p45, %p46
      %p48 = scmp.ne.s32.totalorder %s34, %s35
      %p49 = scmp.eq.s32.totalorder %s27, 1
      %p50 = por %p48, %p49
      %p52 = scmp.ne.s32.totalorder %s35, %s51
      %p53 = scmp.eq.s32.totalorder %s27, 0
      %p54 = por %p52, %p53
      %s55 = ssub.s32 %s21, %s28
      %p56 = scmp.eq.s32.totalorder %s55, 0
      %s58 = sadd.s32 %s57, 1
      %s59 = scalar_select %p56, %s57, %s58
      %p62 = pneg %p56
      %p63 = scmp.eq.s32.totalorder %s21, 1
      %p64 = por %p62, %p63
      %p65 = scmp.ne.s32.totalorder %s57, %s60
      %p66 = scmp.eq.s32.totalorder %s21, 0
      %p67 = por %p65, %p66
      %p68 = scmp.ne.s32.totalorder %s57, %s60
      %p69 = scmp.eq.s32.totalorder %s26, 1
      %p70 = por %p68, %p69
      %p71 = scmp.ne.s32.totalorder %s60, %s61
      %p72 = scmp.eq.s32.totalorder %s26, 0
      %p73 = por %p71, %p72
      %p74 = scmp.ne.s32.totalorder %s60, %s61
      %p75 = scmp.eq.s32.totalorder %s27, 1
      %p76 = por %p74, %p75
      %p78 = scmp.ne.s32.totalorder %s61, %s77
      %p79 = scmp.eq.s32.totalorder %s27, 0
      %p80 = por %p78, %p79
      %s82 = sadd.s32 %s81, 1
      %p85 = scmp.eq.s32.totalorder %s21, 1
      %p86 = scmp.ne.s32.totalorder %s81, %s83
      %p87 = scmp.eq.s32.totalorder %s21, 0
      %p88 = por %p86, %p87
      %p89 = scmp.ne.s32.totalorder %s81, %s83
      %p90 = scmp.eq.s32.totalorder %s26, 1
      %p91 = por %p89, %p90
      %p92 = scmp.ne.s32.totalorder %s83, %s84
      %p93 = scmp.eq.s32.totalorder %s26, 0
      %p94 = por %p92, %p93
      %p95 = scmp.ne.s32.totalorder %s83, %s84
      %p96 = scmp.eq.s32.totalorder %s27, 1
      %p97 = por %p95, %p96
      %p99 = scmp.ne.s32.totalorder %s84, %s98
      %p100 = scmp.eq.s32.totalorder %s27, 0
      %p101 = por %p99, %p100
      %s103 = sadd.s32 %s102, 1
      %p106 = scmp.eq.s32.totalorder %s21, 1
      %p107 = scmp.ne.s32.totalorder %s102, %s104
      %p108 = scmp.eq.s32.totalorder %s21, 0
      %p109 = por %p107, %p108
      %p110 = scmp.ne.s32.totalorder %s102, %s104
      %p111 = scmp.eq.s32.totalorder %s26, 1
      %p112 = por %p110, %p111
      %p113 = scmp.ne.s32.totalorder %s104, %s105
      %p114 = scmp.eq.s32.totalorder %s26, 0
      %p115 = por %p113, %p114
      %p116 = scmp.ne.s32.totalorder %s104, %s105
      %p117 = scmp.eq.s32.totalorder %s27, 1
      %p118 = por %p116, %p117
      %p120 = scmp.ne.s32.totalorder %s105, %s119
      %p121 = scmp.eq.s32.totalorder %s27, 0
      %p122 = por %p120, %p121
      %s124 = sadd.s32 %s123, 1
      %p127 = scmp.eq.s32.totalorder %s21, 1
      %p128 = scmp.ne.s32.totalorder %s123, %s125
      %p129 = scmp.eq.s32.totalorder %s21, 0
      %p130 = por %p128, %p129
      %p131 = scmp.ne.s32.totalorder %s123, %s125
      %p132 = scmp.eq.s32.totalorder %s26, 1
      %p133 = por %p131, %p132
      %p134 = scmp.ne.s32.totalorder %s125, %s126
      %p135 = scmp.eq.s32.totalorder %s26, 0
      %p136 = por %p134, %p135
      %p137 = scmp.ne.s32.totalorder %s125, %s126
      %p138 = scmp.eq.s32.totalorder %s27, 1
      %p139 = por %p137, %p138
      %p141 = scmp.ne.s32.totalorder %s126, %s140
      %p142 = scmp.eq.s32.totalorder %s27, 0
      %p143 = por %p141, %p142
      %s145 = sadd.s32 %s144, 1
      %p148 = scmp.eq.s32.totalorder %s21, 1
      %p149 = scmp.ne.s32.totalorder %s144, %s146
      %p150 = scmp.eq.s32.totalorder %s21, 0
      %p151 = por %p149, %p150
      %p152 = scmp.ne.s32.totalorder %s144, %s146
      %p153 = scmp.eq.s32.totalorder %s26, 1
      %p154 = por %p152, %p153
      %p155 = scmp.ne.s32.totalorder %s146, %s147
      %p156 = scmp.eq.s32.totalorder %s26, 0
      %p157 = por %p155, %p156
      %p158 = scmp.ne.s32.totalorder %s146, %s147
      %p159 = scmp.eq.s32.totalorder %s27, 1
      %p160 = por %p158, %p159
      %p162 = scmp.ne.s32.totalorder %s147, %s161
      %p163 = scmp.eq.s32.totalorder %s27, 0
      %p164 = por %p162, %p163
      %s166 = sadd.s32 %s165, 1
      %p169 = scmp.eq.s32.totalorder %s21, 1
      %p170 = scmp.ne.s32.totalorder %s165, %s167
      %p171 = scmp.eq.s32.totalorder %s21, 0
      %p172 = por %p170, %p171
      %p173 = scmp.ne.s32.totalorder %s165, %s167
      %p174 = scmp.eq.s32.totalorder %s26, 1
      %p175 = por %p173, %p174
      %p176 = scmp.ne.s32.totalorder %s167, %s168
      %p177 = scmp.eq.s32.totalorder %s26, 0
      %p178 = por %p176, %p177
      %p179 = scmp.ne.s32.totalorder %s167, %s168
      %p180 = scmp.eq.s32.totalorder %s27, 1
      %p181 = por %p179, %p180
      %p183 = scmp.ne.s32.totalorder %s168, %s182
      %p184 = scmp.eq.s32.totalorder %s27, 0
      %p185 = por %p183, %p184
      %s187 = sadd.s32 %s186, 1
      %p190 = scmp.eq.s32.totalorder %s21, 1
      %p191 = scmp.ne.s32.totalorder %s186, %s188
      %p192 = scmp.eq.s32.totalorder %s21, 0
      %p193 = por %p191, %p192
      %p194 = scmp.ne.s32.totalorder %s186, %s188
      %p195 = scmp.eq.s32.totalorder %s26, 1
      %p196 = por %p194, %p195
      %p197 = scmp.ne.s32.totalorder %s188, %s189
      %p198 = scmp.eq.s32.totalorder %s26, 0
      %p199 = por %p197, %p198
      %p200 = scmp.ne.s32.totalorder %s188, %s189
      %p201 = scmp.eq.s32.totalorder %s27, 1
      %p202 = por %p200, %p201
      %p204 = scmp.ne.s32.totalorder %s189, %s203
      %p205 = scmp.eq.s32.totalorder %s27, 0
      %p206 = por %p204, %p205
      %s208 = sadd.s32 %s207, 1
      %p211 = scmp.eq.s32.totalorder %s21, 1
      %p212 = scmp.ne.s32.totalorder %s207, %s209
      %p213 = scmp.eq.s32.totalorder %s21, 0
      %p214 = por %p212, %p213
      %p215 = scmp.ne.s32.totalorder %s207, %s209
      %p216 = scmp.eq.s32.totalorder %s26, 1
      %p217 = por %p215, %p216
      %p218 = scmp.ne.s32.totalorder %s209, %s210
      %p219 = scmp.eq.s32.totalorder %s26, 0
      %p220 = por %p218, %p219
      %p221 = scmp.ne.s32.totalorder %s209, %s210
      %p222 = scmp.eq.s32.totalorder %s27, 1
      %p223 = por %p221, %p222
      %p225 = scmp.ne.s32.totalorder %s210, %s224
      %p226 = scmp.eq.s32.totalorder %s27, 0
      %p227 = por %p225, %p226
      %s229 = sadd.s32 %s228, 1
      %p232 = scmp.eq.s32.totalorder %s21, 1
      %p233 = scmp.ne.s32.totalorder %s228, %s230
      %p234 = scmp.eq.s32.totalorder %s21, 0
      %p235 = por %p233, %p234
      %p236 = scmp.ne.s32.totalorder %s228, %s230
      %p237 = scmp.eq.s32.totalorder %s26, 1
      %p238 = por %p236, %p237
      %p239 = scmp.ne.s32.totalorder %s230, %s231
      %p240 = scmp.eq.s32.totalorder %s26, 0
      %p241 = por %p239, %p240
      %p242 = scmp.ne.s32.totalorder %s230, %s231
      %p243 = scmp.eq.s32.totalorder %s27, 1
      %p244 = por %p242, %p243
      %p246 = scmp.ne.s32.totalorder %s231, %s245
      %p247 = scmp.eq.s32.totalorder %s27, 0
      %p248 = por %p246, %p247
      %s250 = sadd.s32 %s249, 1
      %p253 = scmp.eq.s32.totalorder %s21, 1
      %p254 = scmp.ne.s32.totalorder %s249, %s251
      %p255 = scmp.eq.s32.totalorder %s21, 0
      %p256 = por %p254, %p255
      %p257 = scmp.ne.s32.totalorder %s249, %s251
      %p258 = scmp.eq.s32.totalorder %s26, 1
      %p259 = por %p257, %p258
      %p260 = scmp.ne.s32.totalorder %s251, %s252
      %p261 = scmp.eq.s32.totalorder %s26, 0
      %p262 = por %p260, %p261
      %p263 = scmp.ne.s32.totalorder %s251, %s252
      %p264 = scmp.eq.s32.totalorder %s27, 1
      %p265 = por %p263, %p264
      %p267 = scmp.ne.s32.totalorder %s252, %s266
      %p268 = scmp.eq.s32.totalorder %s27, 0
      %p269 = por %p267, %p268
      %s271 = sadd.s32 %s270, 1
      %p274 = scmp.eq.s32.totalorder %s21, 1
      %p275 = scmp.ne.s32.totalorder %s270, %s272
      %p276 = scmp.eq.s32.totalorder %s21, 0
      %p277 = por %p275, %p276
      %p278 = scmp.ne.s32.totalorder %s270, %s272
      %p279 = scmp.eq.s32.totalorder %s26, 1
      %p280 = por %p278, %p279
      %p281 = scmp.ne.s32.totalorder %s272, %s273
      %p282 = scmp.eq.s32.totalorder %s26, 0
      %p283 = por %p281, %p282
      %p284 = scmp.ne.s32.totalorder %s272, %s273
      %p285 = scmp.eq.s32.totalorder %s27, 1
      %p286 = por %p284, %p285
      %p288 = scmp.ne.s32.totalorder %s273, %s287
      %p289 = scmp.eq.s32.totalorder %s27, 0
      %p290 = por %p288, %p289
      %s291 = ssub.s32 %s21, %s28
      %p292 = scmp.eq.s32.totalorder %s291, 0
      %s294 = sadd.s32 %s293, 1
      %s295 = scalar_select %p292, %s293, %s294
      %p298 = pneg %p292
      %p299 = scmp.eq.s32.totalorder %s21, 1
      %p300 = por %p298, %p299
      %p301 = scmp.ne.s32.totalorder %s293, %s296
      %p302 = scmp.eq.s32.totalorder %s21, 0
      %p303 = por %p301, %p302
      %p304 = scmp.ne.s32.totalorder %s293, %s296
      %p305 = scmp.eq.s32.totalorder %s26, 1
      %p306 = por %p304, %p305
      %p307 = scmp.ne.s32.totalorder %s296, %s297
      %p308 = scmp.eq.s32.totalorder %s26, 0
      %p309 = por %p307, %p308
      %p310 = scmp.ne.s32.totalorder %s296, %s297
      %p311 = scmp.eq.s32.totalorder %s27, 1
      %p312 = por %p310, %p311
      %p314 = scmp.ne.s32.totalorder %s297, %s313
      %p315 = scmp.eq.s32.totalorder %s27, 0
      %p316 = por %p314, %p315
      %p317 = scmp.le.s32.totalorder 1, %s21
      %p318 = scmp.lt.s32.totalorder %s21, 3
      %p319 = pnand %p317, %p318
      %p320 = pneg %p319
      // Predicated region
      $region9: #{tpu_custom_call.1} parent=5 // pred_check
        _
      $region10: #{tpu_custom_call.1} parent=5 // pred_check_branch
        %322 = sbr.rel (%p319) target = $region12
      $region11: #{tpu_custom_call.1} parent=5 // pred_region
        %s323 = ssub.s32 %s21, 1
        // Predicated region
        $region13: #{tpu_custom_call.1} parent=11 // pred_check
          %p324 = pneg %p94
        $region14: #{tpu_custom_call.1} parent=11 // pred_check_branch
          %326 = sbr.rel (%p324) target = $region16
        $region15: #{tpu_custom_call.1} parent=11 // pred_region
          %328 = vsyncadd [#allocation3], 0
          %s330 = sshll.u32 %s2, 4
          %s331 = int_to_ptr.hbm [resolvable:$true] %s330
          %s332 = sshll.u32 [#allocation2], 4
          %s333 = int_to_ptr.vmem [resolvable:$true] %s332
          %335 = dma.hbm_to_vmem [thread:$0]  %s331, 16, %s333, [#allocation3]
        $region16: #{tpu_custom_call.1} parent=11 // pred_fallthru
          _
        // Predicated region
        $region17: #{tpu_custom_call.1} parent=11 // pred_check
          %p336 = pneg %p115
        $region18: #{tpu_custom_call.1} parent=11 // pred_check_branch
          %338 = sbr.rel (%p336) target = $region20
        $region19: #{tpu_custom_call.1} parent=11 // pred_region
          %340 = vsyncadd [#allocation5], 0
          %s342 = sshll.u32 %s3, 4
          %s343 = int_to_ptr.hbm [resolvable:$true] %s342
          %s344 = sshll.u32 [#allocation4], 4
          %s345 = int_to_ptr.vmem [resolvable:$true] %s344
          %347 = dma.hbm_to_vmem [thread:$0]  %s343, 16, %s345, [#allocation5]
        $region20: #{tpu_custom_call.1} parent=11 // pred_fallthru
          _
        // Predicated region
        $region21: #{tpu_custom_call.1} parent=11 // pred_check
          %p348 = pneg %p136
        $region22: #{tpu_custom_call.1} parent=11 // pred_check_branch
          %350 = sbr.rel (%p348) target = $region24
        $region23: #{tpu_custom_call.1} parent=11 // pred_region
          %352 = vsyncadd [#allocation5], 0
          %s353 = sshll.u32 %s4, 4
          %s354 = int_to_ptr.hbm [resolvable:$true] %s353
          %s355 = sshll.u32 [#allocation6], 4
          %s356 = int_to_ptr.vmem [resolvable:$true] %s355
          %361 = dma.hbm_to_vmem [thread:$0]  %s354, 512, %s356, [#allocation5], 256, 256, 16
        $region24: #{tpu_custom_call.1} parent=11 // pred_fallthru
          _
        // Predicated region
        $region25: #{tpu_custom_call.1} parent=11 // pred_check
          %p362 = pneg %p157
        $region26: #{tpu_custom_call.1} parent=11 // pred_check_branch
          %364 = sbr.rel (%p362) target = $region28
        $region27: #{tpu_custom_call.1} parent=11 // pred_region
          _
        $region28: #{tpu_custom_call.1} parent=11 // pred_fallthru
          _
        // Predicated region
        $region29: #{tpu_custom_call.1} parent=11 // pred_check
          %p365 = pneg %p178
        $region30: #{tpu_custom_call.1} parent=11 // pred_check_branch
          %367 = sbr.rel (%p365) target = $region32
        $region31: #{tpu_custom_call.1} parent=11 // pred_region
          %369 = vsyncadd [#allocation8], 0
          %s371 = sshll.u32 %s6, 4
          %s372 = int_to_ptr.hbm [resolvable:$true] %s371
          %s373 = sshll.u32 [#allocation7], 4
          %s374 = int_to_ptr.vmem [resolvable:$true] %s373
          %376 = dma.hbm_to_vmem [thread:$0]  %s372, 64, %s374, [#allocation8]
        $region32: #{tpu_custom_call.1} parent=11 // pred_fallthru
          _
        // Predicated region
        $region33: #{tpu_custom_call.1} parent=11 // pred_check
          %p377 = pneg %p199
        $region34: #{tpu_custom_call.1} parent=11 // pred_check_branch
          %379 = sbr.rel (%p377) target = $region36
        $region35: #{tpu_custom_call.1} parent=11 // pred_region
          _
        $region36: #{tpu_custom_call.1} parent=11 // pred_fallthru
          _
        // Predicated region
        $region37: #{tpu_custom_call.1} parent=11 // pred_check
          %p380 = pneg %p220
        $region38: #{tpu_custom_call.1} parent=11 // pred_check_branch
          %382 = sbr.rel (%p380) target = $region40
        $region39: #{tpu_custom_call.1} parent=11 // pred_region
          _
        $region40: #{tpu_custom_call.1} parent=11 // pred_fallthru
          _
        // Predicated region
        $region41: #{tpu_custom_call.1} parent=11 // pred_check
          %p383 = pneg %p241
        $region42: #{tpu_custom_call.1} parent=11 // pred_check_branch
          %385 = sbr.rel (%p383) target = $region44
        $region43: #{tpu_custom_call.1} parent=11 // pred_region
          _
        $region44: #{tpu_custom_call.1} parent=11 // pred_fallthru
          _
        // Predicated region
        $region45: #{tpu_custom_call.1} parent=11 // pred_check
          %p386 = pneg %p262
        $region46: #{tpu_custom_call.1} parent=11 // pred_check_branch
          %388 = sbr.rel (%p386) target = $region48
        $region47: #{tpu_custom_call.1} parent=11 // pred_region
          %390 = vsyncadd [#allocation8], 0
          %s391 = sshll.u32 %s10, 4
          %s392 = int_to_ptr.hbm [resolvable:$true] %s391
          %s393 = sshll.u32 [#allocation9], 4
          %s394 = int_to_ptr.vmem [resolvable:$true] %s393
          %399 = dma.hbm_to_vmem [thread:$0]  %s392, 3072, %s394, [#allocation8], 64, 64, 4
        $region48: #{tpu_custom_call.1} parent=11 // pred_fallthru
          _
        // Predicated region
        $region49: #{tpu_custom_call.1} parent=11 // pred_check
          %p400 = pneg %p283
        $region50: #{tpu_custom_call.1} parent=11 // pred_check_branch
          %402 = sbr.rel (%p400) target = $region52
        $region51: #{tpu_custom_call.1} parent=11 // pred_region
          _
        $region52: #{tpu_custom_call.1} parent=11 // pred_fallthru
          _
      $region12: #{tpu_custom_call.1} parent=5 // pred_fallthru
        _
      %p403 = scmp.lt.s32.totalorder %s21, 2
      // Predicated region
      $region53: #{tpu_custom_call.1} parent=5 // pred_check
        %p404 = pneg %p403
      $region54: #{tpu_custom_call.1} parent=5 // pred_check_branch
        %406 = sbr.rel (%p404) target = $region56
      $region55: #{tpu_custom_call.1} parent=5 // pred_region
        // Predicated region
        $region57: #{tpu_custom_call.1} parent=55 // pred_check
          %p407 = pneg %p41
        $region58: #{tpu_custom_call.1} parent=55 // pred_check_branch
          %409 = sbr.rel (%p407) target = $region60
        $region59: #{tpu_custom_call.1} parent=55 // pred_region
          %s410 = smul.u32 2, %s21
          %p411 = scmp.lt.s32.totalorder %s410, 3
          %s412 = scalar_select %p411, %s410, 3
          %s413 = smul.addr %s412, 16
          %s414 = smul.addr %s413, 8
          %s415 = scalar_lea.vmem %s0, %s414
          %s416 = smul.u32 2, %s21
        $region60: #{tpu_custom_call.1} parent=55 // pred_fallthru
          _
        // Predicated region
        $region61: #{tpu_custom_call.1} parent=55 // pred_check
          %p417 = pneg %p67
        $region62: #{tpu_custom_call.1} parent=55 // pred_check_branch
          %419 = sbr.rel (%p417) target = $region64
        $region63: #{tpu_custom_call.1} parent=55 // pred_region
          %s420 = smul.u32 2, %s21
          %p421 = scmp.lt.s32.totalorder %s420, 3
          %s422 = scalar_select %p421, %s420, 3
          %s423 = smul.addr %s422, 16
          %s424 = smul.addr %s423, 4
          %s425 = scalar_lea.vmem %s1, %s424
          %s426 = smul.u32 2, %s21
        $region64: #{tpu_custom_call.1} parent=55 // pred_fallthru
          _
      $region56: #{tpu_custom_call.1} parent=5 // pred_fallthru
        _
      %p427 = scmp.le.s32.totalorder 1, %s21
      %p428 = scmp.lt.s32.totalorder %s21, 3
      %p429 = pnand %p427, %p428
      %p430 = pneg %p429
      // Predicated region
      $region65: #{tpu_custom_call.1} parent=5 // pred_check
        _
      $region66: #{tpu_custom_call.1} parent=5 // pred_check_branch
        %432 = sbr.rel (%p429) target = $region68
      $region67: #{tpu_custom_call.1} parent=5 // pred_region
        %s433 = ssub.s32 %s21, 1
        // Predicated region
        $region69: #{tpu_custom_call.1} parent=67 // pred_check
          %p434 = pneg %p94
        $region70: #{tpu_custom_call.1} parent=67 // pred_check_branch
          %436 = sbr.rel (%p434) target = $region72
        $region71: #{tpu_custom_call.1} parent=67 // pred_region
          %438 = dma.done [#allocation3], 16
        $region72: #{tpu_custom_call.1} parent=67 // pred_fallthru
          _
        // Predicated region
        $region73: #{tpu_custom_call.1} parent=67 // pred_check
          %p439 = pneg %p115
        $region74: #{tpu_custom_call.1} parent=67 // pred_check_branch
          %441 = sbr.rel (%p439) target = $region76
        $region75: #{tpu_custom_call.1} parent=67 // pred_region
          %443 = dma.done [#allocation5], 16
        $region76: #{tpu_custom_call.1} parent=67 // pred_fallthru
          _
        // Predicated region
        $region77: #{tpu_custom_call.1} parent=67 // pred_check
          %p444 = pneg %p136
        $region78: #{tpu_custom_call.1} parent=67 // pred_check_branch
          %446 = sbr.rel (%p444) target = $region80
        $region79: #{tpu_custom_call.1} parent=67 // pred_region
          %448 = dma.done [#allocation5], 512
        $region80: #{tpu_custom_call.1} parent=67 // pred_fallthru
          _
        // Predicated region
        $region81: #{tpu_custom_call.1} parent=67 // pred_check
          %p449 = pneg %p178
        $region82: #{tpu_custom_call.1} parent=67 // pred_check_branch
          %451 = sbr.rel (%p449) target = $region84
        $region83: #{tpu_custom_call.1} parent=67 // pred_region
          %453 = dma.done [#allocation8], 64
        $region84: #{tpu_custom_call.1} parent=67 // pred_fallthru
          _
        // Predicated region
        $region85: #{tpu_custom_call.1} parent=67 // pred_check
          %p454 = pneg %p262
        $region86: #{tpu_custom_call.1} parent=67 // pred_check_branch
          %456 = sbr.rel (%p454) target = $region88
        $region87: #{tpu_custom_call.1} parent=67 // pred_region
          %458 = dma.done [#allocation8], 3072
        $region88: #{tpu_custom_call.1} parent=67 // pred_fallthru
          _
        %s459 = smul.u32 2, %s26
        %p460 = scmp.lt.s32.totalorder %s459, 3
        %s461 = scalar_select %p460, %s459, 3
        %s462 = smul.addr %s461, 16
        %s463 = smul.addr %s462, 8
        %s464 = scalar_lea.vmem %s0, %s463
        %p465 = pneg %p47
        %p466 = pneg %p44
        %s467 = smul.u32 2, %s26
        %p468 = scmp.lt.s32.totalorder %s467, 3
        %s469 = scalar_select %p468, %s467, 3
        %s470 = smul.addr %s469, 16
        %s471 = smul.addr %s470, 4
        %s472 = scalar_lea.vmem %s1, %s471
        %p473 = pneg %p73
        %p474 = pneg %p70
        %p475 = pneg %p94
        %p476 = pneg %p91
        %p477 = pneg %p115
        %p478 = pneg %p112
        %p479 = pneg %p136
        %p480 = pneg %p133
        %p481 = pneg %p157
        %p482 = pneg %p154
        %p483 = pneg %p178
        %p484 = pneg %p175
        %p485 = pneg %p199
        %p486 = pneg %p196
        %p487 = pneg %p220
        %p488 = pneg %p217
        %p489 = pneg %p241
        %p490 = pneg %p238
        %p491 = pneg %p262
        %p492 = pneg %p259
        %p493 = pneg %p283
        %p494 = pneg %p280
        %p495 = pneg %p309
        %p496 = pneg %p306
        %s497 = smul.u32 2, %s26
        %p498 = scmp.lt.s32.totalorder %s497, 3
        %s499 = scalar_select %p498, %s497, 3
        %s500 = smul.addr %s499, 16
        %s501 = smul.addr %s500, 8
        %s502 = scalar_lea.vmem %s12, %s501
        %s503 = smul.u32 2, %s26
        %p504 = scmp.lt.s32.totalorder %s503, 3
        %s505 = scalar_select %p504, %s503, 3
        %s506 = smul.addr %s505, 16
        %s507 = smul.addr %s506, 8
        %s508 = scalar_lea.vmem %s0, %s507
        %s509 = smul.u32 2, %s26
        %s510 = smul.u32 2, %s26
        %p511 = scmp.lt.s32.totalorder %s510, 3
        %s512 = scalar_select %p511, %s510, 3
        %s513 = smul.addr %s512, 16
        %s514 = smul.addr %s513, 4
        %s515 = scalar_lea.vmem %s1, %s514
        %s516 = smul.u32 2, %s26
        %s517 = smul.u32 2, %s26
        %p518 = scmp.lt.s32.totalorder %s517, 3
        %s519 = scalar_select %p518, %s517, 3
        %s520 = smul.addr %s519, 16
        %s521 = smul.addr %s520, 8
        %s522 = scalar_lea.vmem %s12, %s521
        %s523 = smul.u32 2, %s26
        %v525 = vld [vmem:[%s508] sm:$0xff]
        %v526 = vld [vmem:[%s508 + $0x8] sm:$0xff]
        %v527 = vld [vmem:[%s508 + $0x10] sm:$0xff]
        %v528 = vld [vmem:[%s508 + $0x18] sm:$0xff]
        %v529 = vld [vmem:[%s508 + $0x20] sm:$0xff]
        %v530 = vld [vmem:[%s508 + $0x28] sm:$0xff]
        %v531 = vld [vmem:[%s508 + $0x30] sm:$0xff]
        %v532 = vld [vmem:[%s508 + $0x38] sm:$0xff]
        %v533 = vld [vmem:[%s508 + $0x40] sm:$0xff]
        %v534 = vld [vmem:[%s508 + $0x48] sm:$0xff]
        %v535 = vld [vmem:[%s508 + $0x50] sm:$0xff]
        %v536 = vld [vmem:[%s508 + $0x58] sm:$0xff]
        %v537 = vld [vmem:[%s508 + $0x60] sm:$0xff]
        %v538 = vld [vmem:[%s508 + $0x68] sm:$0xff]
        %v539 = vld [vmem:[%s508 + $0x70] sm:$0xff]
        %v540 = vld [vmem:[%s508 + $0x78] sm:$0xff]
        %v541 = vld [vmem:[%s508 + $0x80] sm:$0xff]
        %v542 = vld [vmem:[%s508 + $0x88] sm:$0xff]
        %v543 = vld [vmem:[%s508 + $0x90] sm:$0xff]
        %v544 = vld [vmem:[%s508 + $0x98] sm:$0xff]
        %v545 = vld [vmem:[%s508 + $0xa0] sm:$0xff]
        %v546 = vld [vmem:[%s508 + $0xa8] sm:$0xff]
        %v547 = vld [vmem:[%s508 + $0xb0] sm:$0xff]
        %v548 = vld [vmem:[%s508 + $0xb8] sm:$0xff]
        %v549 = vld [vmem:[%s508 + $0xc0] sm:$0xff]
        %v550 = vld [vmem:[%s508 + $0xc8] sm:$0xff]
        %v551 = vld [vmem:[%s508 + $0xd0] sm:$0xff]
        %v552 = vld [vmem:[%s508 + $0xd8] sm:$0xff]
        %v553 = vld [vmem:[%s508 + $0xe0] sm:$0xff]
        %v554 = vld [vmem:[%s508 + $0xe8] sm:$0xff]
        %v555 = vld [vmem:[%s508 + $0xf0] sm:$0xff]
        %v556 = vld [vmem:[%s508 + $0xf8] sm:$0xff]
        %v557 = vld [vmem:[#allocation2] sm:$0x1]
        %v558 = vld [vmem:[#allocation4] sm:$0x1]
        %vm559 = vcmask 130048
        %v560 = vsel %vm559, %v525, 0.0
        %v561 = vsel %vm559, %v526, 0.0
        %v562 = vadd.f32 %v560, %v561
        %v563 = vsel %vm559, %v527, 0.0
        %v564 = vadd.f32 %v562, %v563
        %v565 = vsel %vm559, %v528, 0.0
        %v566 = vadd.f32 %v564, %v565
        %v567 = vsel %vm559, %v529, 0.0
        %v568 = vadd.f32 %v566, %v567
        %v569 = vsel %vm559, %v530, 0.0
        %v570 = vadd.f32 %v568, %v569
        %v571 = vsel %vm559, %v531, 0.0
        %v572 = vadd.f32 %v570, %v571
        %v573 = vsel %vm559, %v532, 0.0
        %v574 = vadd.f32 %v572, %v573
        %v575 = vsel %vm559, %v533, 0.0
        %v576 = vadd.f32 %v574, %v575
        %v577 = vsel %vm559, %v534, 0.0
        %v578 = vadd.f32 %v576, %v577
        %v579 = vsel %vm559, %v535, 0.0
        %v580 = vadd.f32 %v578, %v579
        %v581 = vsel %vm559, %v536, 0.0
        %v582 = vadd.f32 %v580, %v581
        %v583 = vsel %vm559, %v537, 0.0
        %v584 = vadd.f32 %v582, %v583
        %v585 = vsel %vm559, %v538, 0.0
        %v586 = vadd.f32 %v584, %v585
        %v587 = vsel %vm559, %v539, 0.0
        %v588 = vadd.f32 %v586, %v587
        %v589 = vsel %vm559, %v540, 0.0
        %v590 = vadd.f32 %v588, %v589
        %v591 = vrot.slane %v590, 4
        %v592 = vadd.f32 %v590, %v591
        %v593 = vrot.slane %v592, 2
        %v594 = vadd.f32 %v592, %v593
        %v595 = vrot.slane %v594, 1
        %v596 = vadd.f32 %v594, %v595
        %v597 = vsel %vm559, %v541, 0.0
        %v598 = vsel %vm559, %v542, 0.0
        %v599 = vadd.f32 %v597, %v598
        %v600 = vsel %vm559, %v543, 0.0
        %v601 = vadd.f32 %v599, %v600
        %v602 = vsel %vm559, %v544, 0.0
        %v603 = vadd.f32 %v601, %v602
        %v604 = vsel %vm559, %v545, 0.0
        %v605 = vadd.f32 %v603, %v604
        %v606 = vsel %vm559, %v546, 0.0
        %v607 = vadd.f32 %v605, %v606
        %v608 = vsel %vm559, %v547, 0.0
        %v609 = vadd.f32 %v607, %v608
        %v610 = vsel %vm559, %v548, 0.0
        %v611 = vadd.f32 %v609, %v610
        %v612 = vsel %vm559, %v549, 0.0
        %v613 = vadd.f32 %v611, %v612
        %v614 = vsel %vm559, %v550, 0.0
        %v615 = vadd.f32 %v613, %v614
        %v616 = vsel %vm559, %v551, 0.0
        %v617 = vadd.f32 %v615, %v616
        %v618 = vsel %vm559, %v552, 0.0
        %v619 = vadd.f32 %v617, %v618
        %v620 = vsel %vm559, %v553, 0.0
        %v621 = vadd.f32 %v619, %v620
        %v622 = vsel %vm559, %v554, 0.0
        %v623 = vadd.f32 %v621, %v622
        %v624 = vsel %vm559, %v555, 0.0
        %v625 = vadd.f32 %v623, %v624
        %v626 = vsel %vm559, %v556, 0.0
        %v627 = vadd.f32 %v625, %v626
        %v628 = vrot.slane %v627, 4
        %v629 = vadd.f32 %v627, %v628
        %v630 = vrot.slane %v629, 2
        %v631 = vadd.f32 %v629, %v630
        %v632 = vrot.slane %v631, 1
        %v633 = vadd.f32 %v631, %v632
        %v634 = vrcp.pop 128.0
        %v635 = vmul.f32 128.0, %v634
        %v636 = vsub.f32 1.0, %v635
        %v637 = vmul.f32 %v634, %v636
        %v638 = vadd.f32 %v634, %v637
        %vm639 = vweird.f32 %v634
        %v640 = vsel %vm639, %v634, %v638
        %v641 = vmul.f32 %v596, %v640
        %v642 = vmul.f32 %v633, %v640
        %v643 = vmul.f32 %v525, %v525
        %v644 = vmul.f32 %v526, %v526
        %v645 = vmul.f32 %v527, %v527
        %v646 = vmul.f32 %v528, %v528
        %v647 = vmul.f32 %v529, %v529
        %v648 = vmul.f32 %v530, %v530
        %v649 = vmul.f32 %v531, %v531
        %v650 = vmul.f32 %v532, %v532
        %v651 = vmul.f32 %v533, %v533
        %v652 = vmul.f32 %v534, %v534
        %v653 = vmul.f32 %v535, %v535
        %v654 = vmul.f32 %v536, %v536
        %v655 = vmul.f32 %v537, %v537
        %v656 = vmul.f32 %v538, %v538
        %v657 = vmul.f32 %v539, %v539
        %v658 = vmul.f32 %v540, %v540
        %v659 = vmul.f32 %v541, %v541
        %v660 = vmul.f32 %v542, %v542
        %v661 = vmul.f32 %v543, %v543
        %v662 = vmul.f32 %v544, %v544
        %v663 = vmul.f32 %v545, %v545
        %v664 = vmul.f32 %v546, %v546
        %v665 = vmul.f32 %v547, %v547
        %v666 = vmul.f32 %v548, %v548
        %v667 = vmul.f32 %v549, %v549
        %v668 = vmul.f32 %v550, %v550
        %v669 = vmul.f32 %v551, %v551
        %v670 = vmul.f32 %v552, %v552
        %v671 = vmul.f32 %v553, %v553
        %v672 = vmul.f32 %v554, %v554
        %v673 = vmul.f32 %v555, %v555
        %v674 = vmul.f32 %v556, %v556
        %v675 = vsel %vm559, %v643, 0.0
        %v676 = vsel %vm559, %v644, 0.0
        %v677 = vadd.f32 %v675, %v676
        %v678 = vsel %vm559, %v645, 0.0
        %v679 = vadd.f32 %v677, %v678
        %v680 = vsel %vm559, %v646, 0.0
        %v681 = vadd.f32 %v679, %v680
        %v682 = vsel %vm559, %v647, 0.0
        %v683 = vadd.f32 %v681, %v682
        %v684 = vsel %vm559, %v648, 0.0
        %v685 = vadd.f32 %v683, %v684
        %v686 = vsel %vm559, %v649, 0.0
        %v687 = vadd.f32 %v685, %v686
        %v688 = vsel %vm559, %v650, 0.0
        %v689 = vadd.f32 %v687, %v688
        %v690 = vsel %vm559, %v651, 0.0
        %v691 = vadd.f32 %v689, %v690
        %v692 = vsel %vm559, %v652, 0.0
        %v693 = vadd.f32 %v691, %v692
        %v694 = vsel %vm559, %v653, 0.0
        %v695 = vadd.f32 %v693, %v694
        %v696 = vsel %vm559, %v654, 0.0
        %v697 = vadd.f32 %v695, %v696
        %v698 = vsel %vm559, %v655, 0.0
        %v699 = vadd.f32 %v697, %v698
        %v700 = vsel %vm559, %v656, 0.0
        %v701 = vadd.f32 %v699, %v700
        %v702 = vsel %vm559, %v657, 0.0
        %v703 = vadd.f32 %v701, %v702
        %v704 = vsel %vm559, %v658, 0.0
        %v705 = vadd.f32 %v703, %v704
        %v706 = vrot.slane %v705, 4
        %v707 = vadd.f32 %v705, %v706
        %v708 = vrot.slane %v707, 2
        %v709 = vadd.f32 %v707, %v708
        %v710 = vrot.slane %v709, 1
        %v711 = vadd.f32 %v709, %v710
        %v712 = vsel %vm559, %v659, 0.0
        %v713 = vsel %vm559, %v660, 0.0
        %v714 = vadd.f32 %v712, %v713
        %v715 = vsel %vm559, %v661, 0.0
        %v716 = vadd.f32 %v714, %v715
        %v717 = vsel %vm559, %v662, 0.0
        %v718 = vadd.f32 %v716, %v717
        %v719 = vsel %vm559, %v663, 0.0
        %v720 = vadd.f32 %v718, %v719
        %v721 = vsel %vm559, %v664, 0.0
        %v722 = vadd.f32 %v720, %v721
        %v723 = vsel %vm559, %v665, 0.0
        %v724 = vadd.f32 %v722, %v723
        %v725 = vsel %vm559, %v666, 0.0
        %v726 = vadd.f32 %v724, %v725
        %v727 = vsel %vm559, %v667, 0.0
        %v728 = vadd.f32 %v726, %v727
        %v729 = vsel %vm559, %v668, 0.0
        %v730 = vadd.f32 %v728, %v729
        %v731 = vsel %vm559, %v669, 0.0
        %v732 = vadd.f32 %v730, %v731
        %v733 = vsel %vm559, %v670, 0.0
        %v734 = vadd.f32 %v732, %v733
        %v735 = vsel %vm559, %v671, 0.0
        %v736 = vadd.f32 %v734, %v735
        %v737 = vsel %vm559, %v672, 0.0
        %v738 = vadd.f32 %v736, %v737
        %v739 = vsel %vm559, %v673, 0.0
        %v740 = vadd.f32 %v738, %v739
        %v741 = vsel %vm559, %v674, 0.0
        %v742 = vadd.f32 %v740, %v741
        %v743 = vrot.slane %v742, 4
        %v744 = vadd.f32 %v742, %v743
        %v745 = vrot.slane %v744, 2
        %v746 = vadd.f32 %v744, %v745
        %v747 = vrot.slane %v746, 1
        %v748 = vadd.f32 %v746, %v747
        %v749 = vmul.f32 %v711, %v640
        %v750 = vmul.f32 %v748, %v640
        %v751 = vmul.f32 %v641, %v641
        %v752 = vmul.f32 %v642, %v642
        %v753 = vsub.f32 %v749, %v751
        %v754 = vsub.f32 %v750, %v752
        %v755 = vmax.f32 %v753, 0.0
        %v756 = vmax.f32 %v754, 0.0
        %v757 = vadd.f32 %v755, 1e-05
        %v758 = vadd.f32 %v756, 1e-05
        %v759 = vrsqrt.pop %v757
        %v760 = vmul.f32 %v759, %v757
        %v761 = vmul.f32 %v760, %v759
        %v762 = vmul.f32 0.5, %v761
        %v763 = vsub.f32 1.5, %v762
        %v764 = vmul.f32 %v759, %v763
        %vm765 = vweird.f32 %v757
        %vm766 = vweird.f32 %v759
        %vm767 = vmor %vm765, %vm766
        %v768 = vsel %vm767, %v759, %v764
        %v769 = vrsqrt.pop %v758
        %v770 = vmul.f32 %v769, %v758
        %v771 = vmul.f32 %v770, %v769
        %v772 = vmul.f32 0.5, %v771
        %v773 = vsub.f32 1.5, %v772
        %v774 = vmul.f32 %v769, %v773
        %vm775 = vweird.f32 %v758
        %vm776 = vweird.f32 %v769
        %vm777 = vmor %vm775, %vm776
        %v778 = vsel %vm777, %v769, %v774
        %v779 = vmul.f32 %v557, %v768
        %v780 = vmul.f32 %v557, %v778
        %v781 = vmul.f32 %v641, %v779
        %v782 = vmul.f32 %v642, %v780
        %v783 = vsub.f32 %v558, %v781
        %v784 = vsub.f32 %v558, %v782
        %v785 = vpack.c.bf16 %v525, %v525
        %v786 = vpack.c.bf16 %v526, %v526
        %v787 = vpack.c.bf16 %v527, %v527
        %v788 = vpack.c.bf16 %v528, %v528
        %v789 = vpack.c.bf16 %v529, %v529
        %v790 = vpack.c.bf16 %v530, %v530
        %v791 = vpack.c.bf16 %v531, %v531
        %v792 = vpack.c.bf16 %v532, %v532
        %v793 = vpack.c.bf16 %v533, %v533
        %v794 = vpack.c.bf16 %v534, %v534
        %v795 = vpack.c.bf16 %v535, %v535
        %v796 = vpack.c.bf16 %v536, %v536
        %v797 = vpack.c.bf16 %v537, %v537
        %v798 = vpack.c.bf16 %v538, %v538
        %v799 = vpack.c.bf16 %v539, %v539
        %v800 = vpack.c.bf16 %v540, %v540
        %v801 = vpack.c.bf16 %v541, %v541
        %v802 = vpack.c.bf16 %v542, %v542
        %v803 = vpack.c.bf16 %v543, %v543
        %v804 = vpack.c.bf16 %v544, %v544
        %v805 = vpack.c.bf16 %v545, %v545
        %v806 = vpack.c.bf16 %v546, %v546
        %v807 = vpack.c.bf16 %v547, %v547
        %v808 = vpack.c.bf16 %v548, %v548
        %v809 = vpack.c.bf16 %v549, %v549
        %v810 = vpack.c.bf16 %v550, %v550
        %v811 = vpack.c.bf16 %v551, %v551
        %v812 = vpack.c.bf16 %v552, %v552
        %v813 = vpack.c.bf16 %v553, %v553
        %v814 = vpack.c.bf16 %v554, %v554
        %v815 = vpack.c.bf16 %v555, %v555
        %v816 = vpack.c.bf16 %v556, %v556
        %v817 = vpack.c.bf16 %v779, %v779
        %v818 = vpack.c.bf16 %v780, %v780
        %v820 = vpack.i.b16 %v817, %v817
        %v822 = vperm.slane %v820, 0
        %v824 = vpack.i.b16 %v818, %v818
        %v826 = vperm.slane %v824, 0
        %v827 = vunpack.c.l.bf16 %v785
        %v828 = vunpack.c.l.bf16 %v786
        %v829 = vunpack.c.l.bf16 %v787
        %v830 = vunpack.c.l.bf16 %v788
        %v831 = vunpack.c.l.bf16 %v789
        %v832 = vunpack.c.l.bf16 %v790
        %v833 = vunpack.c.l.bf16 %v791
        %v834 = vunpack.c.l.bf16 %v792
        %v835 = vunpack.c.l.bf16 %v793
        %v836 = vunpack.c.l.bf16 %v794
        %v837 = vunpack.c.l.bf16 %v795
        %v838 = vunpack.c.l.bf16 %v796
        %v839 = vunpack.c.l.bf16 %v797
        %v840 = vunpack.c.l.bf16 %v798
        %v841 = vunpack.c.l.bf16 %v799
        %v842 = vunpack.c.l.bf16 %v800
        %v843 = vunpack.c.l.bf16 %v801
        %v844 = vunpack.c.l.bf16 %v802
        %v845 = vunpack.c.l.bf16 %v803
        %v846 = vunpack.c.l.bf16 %v804
        %v847 = vunpack.c.l.bf16 %v805
        %v848 = vunpack.c.l.bf16 %v806
        %v849 = vunpack.c.l.bf16 %v807
        %v850 = vunpack.c.l.bf16 %v808
        %v851 = vunpack.c.l.bf16 %v809
        %v852 = vunpack.c.l.bf16 %v810
        %v853 = vunpack.c.l.bf16 %v811
        %v854 = vunpack.c.l.bf16 %v812
        %v855 = vunpack.c.l.bf16 %v813
        %v856 = vunpack.c.l.bf16 %v814
        %v857 = vunpack.c.l.bf16 %v815
        %v858 = vunpack.c.l.bf16 %v816
        %v859 = vunpack.c.l.bf16 %v822
        %v860 = vunpack.c.l.bf16 %v826
        %v861 = vmul.f32 %v827, %v859
        %v862 = vmul.f32 %v828, %v859
        %v863 = vmul.f32 %v829, %v859
        %v864 = vmul.f32 %v830, %v859
        %v865 = vmul.f32 %v831, %v859
        %v866 = vmul.f32 %v832, %v859
        %v867 = vmul.f32 %v833, %v859
        %v868 = vmul.f32 %v834, %v859
        %v869 = vmul.f32 %v835, %v859
        %v870 = vmul.f32 %v836, %v859
        %v871 = vmul.f32 %v837, %v859
        %v872 = vmul.f32 %v838, %v859
        %v873 = vmul.f32 %v839, %v859
        %v874 = vmul.f32 %v840, %v859
        %v875 = vmul.f32 %v841, %v859
        %v876 = vmul.f32 %v842, %v859
        %v877 = vmul.f32 %v843, %v860
        %v878 = vmul.f32 %v844, %v860
        %v879 = vmul.f32 %v845, %v860
        %v880 = vmul.f32 %v846, %v860
        %v881 = vmul.f32 %v847, %v860
        %v882 = vmul.f32 %v848, %v860
        %v883 = vmul.f32 %v849, %v860
        %v884 = vmul.f32 %v850, %v860
        %v885 = vmul.f32 %v851, %v860
        %v886 = vmul.f32 %v852, %v860
        %v887 = vmul.f32 %v853, %v860
        %v888 = vmul.f32 %v854, %v860
        %v889 = vmul.f32 %v855, %v860
        %v890 = vmul.f32 %v856, %v860
        %v891 = vmul.f32 %v857, %v860
        %v892 = vmul.f32 %v858, %v860
        %v893 = vpack.c.bf16 %v861, %v861
        %v894 = vpack.c.bf16 %v862, %v862
        %v895 = vpack.c.bf16 %v863, %v863
        %v896 = vpack.c.bf16 %v864, %v864
        %v897 = vpack.c.bf16 %v865, %v865
        %v898 = vpack.c.bf16 %v866, %v866
        %v899 = vpack.c.bf16 %v867, %v867
        %v900 = vpack.c.bf16 %v868, %v868
        %v901 = vpack.c.bf16 %v869, %v869
        %v902 = vpack.c.bf16 %v870, %v870
        %v903 = vpack.c.bf16 %v871, %v871
        %v904 = vpack.c.bf16 %v872, %v872
        %v905 = vpack.c.bf16 %v873, %v873
        %v906 = vpack.c.bf16 %v874, %v874
        %v907 = vpack.c.bf16 %v875, %v875
        %v908 = vpack.c.bf16 %v876, %v876
        %v909 = vpack.c.bf16 %v877, %v877
        %v910 = vpack.c.bf16 %v878, %v878
        %v911 = vpack.c.bf16 %v879, %v879
        %v912 = vpack.c.bf16 %v880, %v880
        %v913 = vpack.c.bf16 %v881, %v881
        %v914 = vpack.c.bf16 %v882, %v882
        %v915 = vpack.c.bf16 %v883, %v883
        %v916 = vpack.c.bf16 %v884, %v884
        %v917 = vpack.c.bf16 %v885, %v885
        %v918 = vpack.c.bf16 %v886, %v886
        %v919 = vpack.c.bf16 %v887, %v887
        %v920 = vpack.c.bf16 %v888, %v888
        %v921 = vpack.c.bf16 %v889, %v889
        %v922 = vpack.c.bf16 %v890, %v890
        %v923 = vpack.c.bf16 %v891, %v891
        %v924 = vpack.c.bf16 %v892, %v892
        %v925 = vpack.c.bf16 %v783, %v783
        %v926 = vpack.c.bf16 %v784, %v784
        %v928 = vpack.i.b16 %v925, %v925
        %v930 = vperm.slane %v928, 0
        %v932 = vpack.i.b16 %v926, %v926
        %v934 = vperm.slane %v932, 0
        %v935 = vunpack.c.l.bf16 %v893
        %v936 = vunpack.c.l.bf16 %v894
        %v937 = vunpack.c.l.bf16 %v895
        %v938 = vunpack.c.l.bf16 %v896
        %v939 = vunpack.c.l.bf16 %v897
        %v940 = vunpack.c.l.bf16 %v898
        %v941 = vunpack.c.l.bf16 %v899
        %v942 = vunpack.c.l.bf16 %v900
        %v943 = vunpack.c.l.bf16 %v901
        %v944 = vunpack.c.l.bf16 %v902
        %v945 = vunpack.c.l.bf16 %v903
        %v946 = vunpack.c.l.bf16 %v904
        %v947 = vunpack.c.l.bf16 %v905
        %v948 = vunpack.c.l.bf16 %v906
        %v949 = vunpack.c.l.bf16 %v907
        %v950 = vunpack.c.l.bf16 %v908
        %v951 = vunpack.c.l.bf16 %v909
        %v952 = vunpack.c.l.bf16 %v910
        %v953 = vunpack.c.l.bf16 %v911
        %v954 = vunpack.c.l.bf16 %v912
        %v955 = vunpack.c.l.bf16 %v913
        %v956 = vunpack.c.l.bf16 %v914
        %v957 = vunpack.c.l.bf16 %v915
        %v958 = vunpack.c.l.bf16 %v916
        %v959 = vunpack.c.l.bf16 %v917
        %v960 = vunpack.c.l.bf16 %v918
        %v961 = vunpack.c.l.bf16 %v919
        %v962 = vunpack.c.l.bf16 %v920
        %v963 = vunpack.c.l.bf16 %v921
        %v964 = vunpack.c.l.bf16 %v922
        %v965 = vunpack.c.l.bf16 %v923
        %v966 = vunpack.c.l.bf16 %v924
        %v967 = vunpack.c.l.bf16 %v930
        %v968 = vunpack.c.l.bf16 %v934
        %v969 = vadd.f32 %v935, %v967
        %v970 = vadd.f32 %v936, %v967
        %v971 = vadd.f32 %v937, %v967
        %v972 = vadd.f32 %v938, %v967
        %v973 = vadd.f32 %v939, %v967
        %v974 = vadd.f32 %v940, %v967
        %v975 = vadd.f32 %v941, %v967
        %v976 = vadd.f32 %v942, %v967
        %v977 = vadd.f32 %v943, %v967
        %v978 = vadd.f32 %v944, %v967
        %v979 = vadd.f32 %v945, %v967
        %v980 = vadd.f32 %v946, %v967
        %v981 = vadd.f32 %v947, %v967
        %v982 = vadd.f32 %v948, %v967
        %v983 = vadd.f32 %v949, %v967
        %v984 = vadd.f32 %v950, %v967
        %v985 = vadd.f32 %v951, %v968
        %v986 = vadd.f32 %v952, %v968
        %v987 = vadd.f32 %v953, %v968
        %v988 = vadd.f32 %v954, %v968
        %v989 = vadd.f32 %v955, %v968
        %v990 = vadd.f32 %v956, %v968
        %v991 = vadd.f32 %v957, %v968
        %v992 = vadd.f32 %v958, %v968
        %v993 = vadd.f32 %v959, %v968
        %v994 = vadd.f32 %v960, %v968
        %v995 = vadd.f32 %v961, %v968
        %v996 = vadd.f32 %v962, %v968
        %v997 = vadd.f32 %v963, %v968
        %v998 = vadd.f32 %v964, %v968
        %v999 = vadd.f32 %v965, %v968
        %v1000 = vadd.f32 %v966, %v968
        %v1001 = vpack.c.bf16 %v969, %v969
        %v1002 = vpack.c.bf16 %v970, %v970
        %v1003 = vpack.c.bf16 %v971, %v971
        %v1004 = vpack.c.bf16 %v972, %v972
        %v1005 = vpack.c.bf16 %v973, %v973
        %v1006 = vpack.c.bf16 %v974, %v974
        %v1007 = vpack.c.bf16 %v975, %v975
        %v1008 = vpack.c.bf16 %v976, %v976
        %v1009 = vpack.c.bf16 %v977, %v977
        %v1010 = vpack.c.bf16 %v978, %v978
        %v1011 = vpack.c.bf16 %v979, %v979
        %v1012 = vpack.c.bf16 %v980, %v980
        %v1013 = vpack.c.bf16 %v981, %v981
        %v1014 = vpack.c.bf16 %v982, %v982
        %v1015 = vpack.c.bf16 %v983, %v983
        %v1016 = vpack.c.bf16 %v984, %v984
        %v1017 = vpack.c.bf16 %v985, %v985
        %v1018 = vpack.c.bf16 %v986, %v986
        %v1019 = vpack.c.bf16 %v987, %v987
        %v1020 = vpack.c.bf16 %v988, %v988
        %v1021 = vpack.c.bf16 %v989, %v989
        %v1022 = vpack.c.bf16 %v990, %v990
        %v1023 = vpack.c.bf16 %v991, %v991
        %v1024 = vpack.c.bf16 %v992, %v992
        %v1025 = vpack.c.bf16 %v993, %v993
        %v1026 = vpack.c.bf16 %v994, %v994
        %v1027 = vpack.c.bf16 %v995, %v995
        %v1028 = vpack.c.bf16 %v996, %v996
        %v1029 = vpack.c.bf16 %v997, %v997
        %v1030 = vpack.c.bf16 %v998, %v998
        %v1031 = vpack.c.bf16 %v999, %v999
        %v1032 = vpack.c.bf16 %v1000, %v1000
        %v1033 = vld [vmem:[#allocation6] sm:$0xff]
        %v1034 = vld [vmem:[#allocation6 + $0x8] sm:$0xff]
        %v1035 = vld [vmem:[#allocation6 + $0x10] sm:$0xff]
        %v1036 = vld [vmem:[#allocation6 + $0x18] sm:$0xff]
        %v1069 = vunpack.c.l.b16 %v1001
        %v1070 = vunpack.c.l.b16 %v1002
        %v1071 = vunpack.c.l.b16 %v1003
        %v1072 = vunpack.c.l.b16 %v1004
        %v1073 = vunpack.c.l.b16 %v1005
        %v1074 = vunpack.c.l.b16 %v1006
        %v1075 = vunpack.c.l.b16 %v1007
        %v1076 = vunpack.c.l.b16 %v1008
        %v1077 = vunpack.c.l.b16 %v1009
        %v1078 = vunpack.c.l.b16 %v1010
        %v1079 = vunpack.c.l.b16 %v1011
        %v1080 = vunpack.c.l.b16 %v1012
        %v1081 = vunpack.c.l.b16 %v1013
        %v1082 = vunpack.c.l.b16 %v1014
        %v1083 = vunpack.c.l.b16 %v1015
        %v1084 = vunpack.c.l.b16 %v1016
        %v1085 = vunpack.c.l.b16 %v1017
        %v1086 = vunpack.c.l.b16 %v1018
        %v1087 = vunpack.c.l.b16 %v1019
        %v1088 = vunpack.c.l.b16 %v1020
        %v1089 = vunpack.c.l.b16 %v1021
        %v1090 = vunpack.c.l.b16 %v1022
        %v1091 = vunpack.c.l.b16 %v1023
        %v1092 = vunpack.c.l.b16 %v1024
        %v1093 = vunpack.c.l.b16 %v1025
        %v1094 = vunpack.c.l.b16 %v1026
        %v1095 = vunpack.c.l.b16 %v1027
        %v1096 = vunpack.c.l.b16 %v1028
        %v1097 = vunpack.c.l.b16 %v1029
        %v1098 = vunpack.c.l.b16 %v1030
        %v1099 = vunpack.c.l.b16 %v1031
        %v1100 = vunpack.c.l.b16 %v1032
        %v1101 = vpack.c.b16 %v1070, %v1069
        %v1102 = vpack.c.b16 %v1072, %v1071
        %v1103 = vpack.c.b16 %v1074, %v1073
        %v1104 = vpack.c.b16 %v1076, %v1075
        %v1105 = vpack.c.b16 %v1078, %v1077
        %v1106 = vpack.c.b16 %v1080, %v1079
        %v1107 = vpack.c.b16 %v1082, %v1081
        %v1108 = vpack.c.b16 %v1084, %v1083
        %v1109 = vpack.c.b16 %v1086, %v1085
        %v1110 = vpack.c.b16 %v1088, %v1087
        %v1111 = vpack.c.b16 %v1090, %v1089
        %v1112 = vpack.c.b16 %v1092, %v1091
        %v1113 = vpack.c.b16 %v1094, %v1093
        %v1114 = vpack.c.b16 %v1096, %v1095
        %v1115 = vpack.c.b16 %v1098, %v1097
        %v1116 = vpack.c.b16 %v1100, %v1099
        %v1121 = vunpack.c.l.b16 %v1033
        %v1122 = vunpack.c.h.b16 %v1033
        %v1123 = vunpack.c.l.b16 %v1034
        %v1124 = vunpack.c.h.b16 %v1034
        %v1125 = vunpack.c.l.b16 %v1035
        %v1126 = vunpack.c.h.b16 %v1035
        %v1127 = vunpack.c.l.b16 %v1036
        %v1128 = vunpack.c.h.b16 %v1036
        %v1129 = vpack.c.b16 %v1125, %v1121
        %v1130 = vpack.c.b16 %v1126, %v1122
        %v1131 = vpack.c.b16 %v1127, %v1123
        %v1132 = vpack.c.b16 %v1128, %v1124
        %v1138 = vsel %vm559, %v1101, 0
        %v1141 = vsel %vm559, %v1102, 0
        %v1144 = vsel %vm559, %v1103, 0
        %v1147 = vsel %vm559, %v1104, 0
        %v1150 = vsel %vm559, %v1105, 0
        %v1153 = vsel %vm559, %v1106, 0
        %v1156 = vsel %vm559, %v1107, 0
        %v1159 = vsel %vm559, %v1108, 0
        %v1162 = vsel %vm559, %v1109, 0
        %v1165 = vsel %vm559, %v1110, 0
        %v1168 = vsel %vm559, %v1111, 0
        %v1171 = vsel %vm559, %v1112, 0
        %v1174 = vsel %vm559, %v1113, 0
        %v1177 = vsel %vm559, %v1114, 0
        %v1180 = vsel %vm559, %v1115, 0
        %v1183 = vsel %vm559, %v1116, 0
        %1185 = vmatpush.bf16.msra.mxu0 0
        %1186 = vmatpush.bf16.msra.mxu0 0
        %1187 = vmatpush.bf16.msra.mxu0 0
        %1188 = vmatpush.bf16.msra.mxu0 0
        %1189 = vmatpush.bf16.msra.mxu0 0
        %1190 = vmatpush.bf16.msra.mxu0 0
        %1191 = vmatpush.bf16.msra.mxu0 0
        %1192 = vmatpush.bf16.msra.mxu0 %v1129
        %1193 = vmatmul.bf16.gmra.mxu0 %v1138
        %v1194 = vpop.f32.mrf.mxu0
        %v1195 = vadd.f32 0.0, %v1194
        %v1196 = vpop.f32.mrf.mxu0
        %v1197 = vadd.f32 0.0, %v1196
        %1198 = vmatmul.bf16.gmra.mxu0 %v1141
        %v1199 = vpop.f32.mrf.mxu0
        %v1200 = vadd.f32 0.0, %v1199
        %v1201 = vpop.f32.mrf.mxu0
        %v1202 = vadd.f32 0.0, %v1201
        %1203 = vmatmul.bf16.gmra.mxu0 %v1144
        %v1204 = vpop.f32.mrf.mxu0
        %v1205 = vadd.f32 0.0, %v1204
        %v1206 = vpop.f32.mrf.mxu0
        %v1207 = vadd.f32 0.0, %v1206
        %1208 = vmatmul.bf16.gmra.mxu0 %v1147
        %v1209 = vpop.f32.mrf.mxu0
        %v1210 = vadd.f32 0.0, %v1209
        %v1211 = vpop.f32.mrf.mxu0
        %v1212 = vadd.f32 0.0, %v1211
        %1213 = vmatmul.bf16.gmra.mxu0 %v1150
        %v1214 = vpop.f32.mrf.mxu0
        %v1215 = vadd.f32 0.0, %v1214
        %v1216 = vpop.f32.mrf.mxu0
        %v1217 = vadd.f32 0.0, %v1216
        %1218 = vmatmul.bf16.gmra.mxu0 %v1153
        %v1219 = vpop.f32.mrf.mxu0
        %v1220 = vadd.f32 0.0, %v1219
        %v1221 = vpop.f32.mrf.mxu0
        %v1222 = vadd.f32 0.0, %v1221
        %1223 = vmatmul.bf16.gmra.mxu0 %v1156
        %v1224 = vpop.f32.mrf.mxu0
        %v1225 = vadd.f32 0.0, %v1224
        %v1226 = vpop.f32.mrf.mxu0
        %v1227 = vadd.f32 0.0, %v1226
        %1228 = vmatmul.bf16.gmra.mxu0 %v1159
        %v1229 = vpop.f32.mrf.mxu0
        %v1230 = vadd.f32 0.0, %v1229
        %v1231 = vpop.f32.mrf.mxu0
        %v1232 = vadd.f32 0.0, %v1231
        %1233 = vmatmul.bf16.gmra.mxu0 %v1162
        %v1234 = vpop.f32.mrf.mxu0
        %v1235 = vadd.f32 0.0, %v1234
        %v1236 = vpop.f32.mrf.mxu0
        %v1237 = vadd.f32 0.0, %v1236
        %1238 = vmatmul.bf16.gmra.mxu0 %v1165
        %v1239 = vpop.f32.mrf.mxu0
        %v1240 = vadd.f32 0.0, %v1239
        %v1241 = vpop.f32.mrf.mxu0
        %v1242 = vadd.f32 0.0, %v1241
        %1243 = vmatmul.bf16.gmra.mxu0 %v1168
        %v1244 = vpop.f32.mrf.mxu0
        %v1245 = vadd.f32 0.0, %v1244
        %v1246 = vpop.f32.mrf.mxu0
        %v1247 = vadd.f32 0.0, %v1246
        %1248 = vmatmul.bf16.gmra.mxu0 %v1171
        %v1249 = vpop.f32.mrf.mxu0
        %v1250 = vadd.f32 0.0, %v1249
        %v1251 = vpop.f32.mrf.mxu0
        %v1252 = vadd.f32 0.0, %v1251
        %1253 = vmatmul.bf16.gmra.mxu0 %v1174
        %v1254 = vpop.f32.mrf.mxu0
        %v1255 = vadd.f32 0.0, %v1254
        %v1256 = vpop.f32.mrf.mxu0
        %v1257 = vadd.f32 0.0, %v1256
        %1258 = vmatmul.bf16.gmra.mxu0 %v1177
        %v1259 = vpop.f32.mrf.mxu0
        %v1260 = vadd.f32 0.0, %v1259
        %v1261 = vpop.f32.mrf.mxu0
        %v1262 = vadd.f32 0.0, %v1261
        %1263 = vmatmul.bf16.gmra.mxu0 %v1180
        %v1264 = vpop.f32.mrf.mxu0
        %v1265 = vadd.f32 0.0, %v1264
        %v1266 = vpop.f32.mrf.mxu0
        %v1267 = vadd.f32 0.0, %v1266
        %1268 = vmatmul.bf16.gmra.mxu0 %v1183
        %v1269 = vpop.f32.mrf.mxu0
        %v1270 = vadd.f32 0.0, %v1269
        %v1271 = vpop.f32.mrf.mxu0
        %v1272 = vadd.f32 0.0, %v1271
        %1273 = vdwg.mxu0
        %1274 = vmatpush.bf16.msra.mxu0 0
        %1275 = vmatpush.bf16.msra.mxu0 0
        %1276 = vmatpush.bf16.msra.mxu0 0
        %1277 = vmatpush.bf16.msra.mxu0 0
        %1278 = vmatpush.bf16.msra.mxu0 0
        %1279 = vmatpush.bf16.msra.mxu0 0
        %1280 = vmatpush.bf16.msra.mxu0 0
        %1281 = vmatpush.bf16.msra.mxu0 %v1130
        %1282 = vmatmul.bf16.gmra.mxu0 %v1138
        %v1283 = vpop.f32.mrf.mxu0
        %v1284 = vadd.f32 0.0, %v1283
        %v1285 = vpop.f32.mrf.mxu0
        %v1286 = vadd.f32 0.0, %v1285
        %1287 = vmatmul.bf16.gmra.mxu0 %v1141
        %v1288 = vpop.f32.mrf.mxu0
        %v1289 = vadd.f32 0.0, %v1288
        %v1290 = vpop.f32.mrf.mxu0
        %v1291 = vadd.f32 0.0, %v1290
        %1292 = vmatmul.bf16.gmra.mxu0 %v1144
        %v1293 = vpop.f32.mrf.mxu0
        %v1294 = vadd.f32 0.0, %v1293
        %v1295 = vpop.f32.mrf.mxu0
        %v1296 = vadd.f32 0.0, %v1295
        %1297 = vmatmul.bf16.gmra.mxu0 %v1147
        %v1298 = vpop.f32.mrf.mxu0
        %v1299 = vadd.f32 0.0, %v1298
        %v1300 = vpop.f32.mrf.mxu0
        %v1301 = vadd.f32 0.0, %v1300
        %1302 = vmatmul.bf16.gmra.mxu0 %v1150
        %v1303 = vpop.f32.mrf.mxu0
        %v1304 = vadd.f32 0.0, %v1303
        %v1305 = vpop.f32.mrf.mxu0
        %v1306 = vadd.f32 0.0, %v1305
        %1307 = vmatmul.bf16.gmra.mxu0 %v1153
        %v1308 = vpop.f32.mrf.mxu0
        %v1309 = vadd.f32 0.0, %v1308
        %v1310 = vpop.f32.mrf.mxu0
        %v1311 = vadd.f32 0.0, %v1310
        %1312 = vmatmul.bf16.gmra.mxu0 %v1156
        %v1313 = vpop.f32.mrf.mxu0
        %v1314 = vadd.f32 0.0, %v1313
        %v1315 = vpop.f32.mrf.mxu0
        %v1316 = vadd.f32 0.0, %v1315
        %1317 = vmatmul.bf16.gmra.mxu0 %v1159
        %v1318 = vpop.f32.mrf.mxu0
        %v1319 = vadd.f32 0.0, %v1318
        %v1320 = vpop.f32.mrf.mxu0
        %v1321 = vadd.f32 0.0, %v1320
        %1322 = vmatmul.bf16.gmra.mxu0 %v1162
        %v1323 = vpop.f32.mrf.mxu0
        %v1324 = vadd.f32 0.0, %v1323
        %v1325 = vpop.f32.mrf.mxu0
        %v1326 = vadd.f32 0.0, %v1325
        %1327 = vmatmul.bf16.gmra.mxu0 %v1165
        %v1328 = vpop.f32.mrf.mxu0
        %v1329 = vadd.f32 0.0, %v1328
        %v1330 = vpop.f32.mrf.mxu0
        %v1331 = vadd.f32 0.0, %v1330
        %1332 = vmatmul.bf16.gmra.mxu0 %v1168
        %v1333 = vpop.f32.mrf.mxu0
        %v1334 = vadd.f32 0.0, %v1333
        %v1335 = vpop.f32.mrf.mxu0
        %v1336 = vadd.f32 0.0, %v1335
        %1337 = vmatmul.bf16.gmra.mxu0 %v1171
        %v1338 = vpop.f32.mrf.mxu0
        %v1339 = vadd.f32 0.0, %v1338
        %v1340 = vpop.f32.mrf.mxu0
        %v1341 = vadd.f32 0.0, %v1340
        %1342 = vmatmul.bf16.gmra.mxu0 %v1174
        %v1343 = vpop.f32.mrf.mxu0
        %v1344 = vadd.f32 0.0, %v1343
        %v1345 = vpop.f32.mrf.mxu0
        %v1346 = vadd.f32 0.0, %v1345
        %1347 = vmatmul.bf16.gmra.mxu0 %v1177
        %v1348 = vpop.f32.mrf.mxu0
        %v1349 = vadd.f32 0.0, %v1348
        %v1350 = vpop.f32.mrf.mxu0
        %v1351 = vadd.f32 0.0, %v1350
        %1352 = vmatmul.bf16.gmra.mxu0 %v1180
        %v1353 = vpop.f32.mrf.mxu0
        %v1354 = vadd.f32 0.0, %v1353
        %v1355 = vpop.f32.mrf.mxu0
        %v1356 = vadd.f32 0.0, %v1355
        %1357 = vmatmul.bf16.gmra.mxu0 %v1183
        %v1358 = vpop.f32.mrf.mxu0
        %v1359 = vadd.f32 0.0, %v1358
        %v1360 = vpop.f32.mrf.mxu0
        %v1361 = vadd.f32 0.0, %v1360
        %1362 = vdwg.mxu0
        %1363 = vmatpush.bf16.msra.mxu0 0
        %1364 = vmatpush.bf16.msra.mxu0 0
        %1365 = vmatpush.bf16.msra.mxu0 0
        %1366 = vmatpush.bf16.msra.mxu0 0
        %1367 = vmatpush.bf16.msra.mxu0 0
        %1368 = vmatpush.bf16.msra.mxu0 0
        %1369 = vmatpush.bf16.msra.mxu0 0
        %1370 = vmatpush.bf16.msra.mxu0 %v1131
        %1371 = vmatmul.bf16.gmra.mxu0 %v1138
        %v1372 = vpop.f32.mrf.mxu0
        %v1373 = vadd.f32 0.0, %v1372
        %v1374 = vpop.f32.mrf.mxu0
        %v1375 = vadd.f32 0.0, %v1374
        %1376 = vmatmul.bf16.gmra.mxu0 %v1141
        %v1377 = vpop.f32.mrf.mxu0
        %v1378 = vadd.f32 0.0, %v1377
        %v1379 = vpop.f32.mrf.mxu0
        %v1380 = vadd.f32 0.0, %v1379
        %1381 = vmatmul.bf16.gmra.mxu0 %v1144
        %v1382 = vpop.f32.mrf.mxu0
        %v1383 = vadd.f32 0.0, %v1382
        %v1384 = vpop.f32.mrf.mxu0
        %v1385 = vadd.f32 0.0, %v1384
        %1386 = vmatmul.bf16.gmra.mxu0 %v1147
        %v1387 = vpop.f32.mrf.mxu0
        %v1388 = vadd.f32 0.0, %v1387
        %v1389 = vpop.f32.mrf.mxu0
        %v1390 = vadd.f32 0.0, %v1389
        %1391 = vmatmul.bf16.gmra.mxu0 %v1150
        %v1392 = vpop.f32.mrf.mxu0
        %v1393 = vadd.f32 0.0, %v1392
        %v1394 = vpop.f32.mrf.mxu0
        %v1395 = vadd.f32 0.0, %v1394
        %1396 = vmatmul.bf16.gmra.mxu0 %v1153
        %v1397 = vpop.f32.mrf.mxu0
        %v1398 = vadd.f32 0.0, %v1397
        %v1399 = vpop.f32.mrf.mxu0
        %v1400 = vadd.f32 0.0, %v1399
        %1401 = vmatmul.bf16.gmra.mxu0 %v1156
        %v1402 = vpop.f32.mrf.mxu0
        %v1403 = vadd.f32 0.0, %v1402
        %v1404 = vpop.f32.mrf.mxu0
        %v1405 = vadd.f32 0.0, %v1404
        %1406 = vmatmul.bf16.gmra.mxu0 %v1159
        %v1407 = vpop.f32.mrf.mxu0
        %v1408 = vadd.f32 0.0, %v1407
        %v1409 = vpop.f32.mrf.mxu0
        %v1410 = vadd.f32 0.0, %v1409
        %1411 = vmatmul.bf16.gmra.mxu0 %v1162
        %v1412 = vpop.f32.mrf.mxu0
        %v1413 = vadd.f32 0.0, %v1412
        %v1414 = vpop.f32.mrf.mxu0
        %v1415 = vadd.f32 0.0, %v1414
        %1416 = vmatmul.bf16.gmra.mxu0 %v1165
        %v1417 = vpop.f32.mrf.mxu0
        %v1418 = vadd.f32 0.0, %v1417
        %v1419 = vpop.f32.mrf.mxu0
        %v1420 = vadd.f32 0.0, %v1419
        %1421 = vmatmul.bf16.gmra.mxu0 %v1168
        %v1422 = vpop.f32.mrf.mxu0
        %v1423 = vadd.f32 0.0, %v1422
        %v1424 = vpop.f32.mrf.mxu0
        %v1425 = vadd.f32 0.0, %v1424
        %1426 = vmatmul.bf16.gmra.mxu0 %v1171
        %v1427 = vpop.f32.mrf.mxu0
        %v1428 = vadd.f32 0.0, %v1427
        %v1429 = vpop.f32.mrf.mxu0
        %v1430 = vadd.f32 0.0, %v1429
        %1431 = vmatmul.bf16.gmra.mxu0 %v1174
        %v1432 = vpop.f32.mrf.mxu0
        %v1433 = vadd.f32 0.0, %v1432
        %v1434 = vpop.f32.mrf.mxu0
        %v1435 = vadd.f32 0.0, %v1434
        %1436 = vmatmul.bf16.gmra.mxu0 %v1177
        %v1437 = vpop.f32.mrf.mxu0
        %v1438 = vadd.f32 0.0, %v1437
        %v1439 = vpop.f32.mrf.mxu0
        %v1440 = vadd.f32 0.0, %v1439
        %1441 = vmatmul.bf16.gmra.mxu0 %v1180
        %v1442 = vpop.f32.mrf.mxu0
        %v1443 = vadd.f32 0.0, %v1442
        %v1444 = vpop.f32.mrf.mxu0
        %v1445 = vadd.f32 0.0, %v1444
        %1446 = vmatmul.bf16.gmra.mxu0 %v1183
        %v1447 = vpop.f32.mrf.mxu0
        %v1448 = vadd.f32 0.0, %v1447
        %v1449 = vpop.f32.mrf.mxu0
        %v1450 = vadd.f32 0.0, %v1449
        %1451 = vdwg.mxu0
        %1452 = vmatpush.bf16.msra.mxu0 0
        %1453 = vmatpush.bf16.msra.mxu0 0
        %1454 = vmatpush.bf16.msra.mxu0 0
        %1455 = vmatpush.bf16.msra.mxu0 0
        %1456 = vmatpush.bf16.msra.mxu0 0
        %1457 = vmatpush.bf16.msra.mxu0 0
        %1458 = vmatpush.bf16.msra.mxu0 0
        %1459 = vmatpush.bf16.msra.mxu0 %v1132
        %1460 = vmatmul.bf16.gmra.mxu0 %v1138
        %v1461 = vpop.f32.mrf.mxu0
        %v1462 = vadd.f32 0.0, %v1461
        %v1463 = vpop.f32.mrf.mxu0
        %v1464 = vadd.f32 0.0, %v1463
        %1465 = vmatmul.bf16.gmra.mxu0 %v1141
        %v1466 = vpop.f32.mrf.mxu0
        %v1467 = vadd.f32 0.0, %v1466
        %v1468 = vpop.f32.mrf.mxu0
        %v1469 = vadd.f32 0.0, %v1468
        %1470 = vmatmul.bf16.gmra.mxu0 %v1144
        %v1471 = vpop.f32.mrf.mxu0
        %v1472 = vadd.f32 0.0, %v1471
        %v1473 = vpop.f32.mrf.mxu0
        %v1474 = vadd.f32 0.0, %v1473
        %1475 = vmatmul.bf16.gmra.mxu0 %v1147
        %v1476 = vpop.f32.mrf.mxu0
        %v1477 = vadd.f32 0.0, %v1476
        %v1478 = vpop.f32.mrf.mxu0
        %v1479 = vadd.f32 0.0, %v1478
        %1480 = vmatmul.bf16.gmra.mxu0 %v1150
        %v1481 = vpop.f32.mrf.mxu0
        %v1482 = vadd.f32 0.0, %v1481
        %v1483 = vpop.f32.mrf.mxu0
        %v1484 = vadd.f32 0.0, %v1483
        %1485 = vmatmul.bf16.gmra.mxu0 %v1153
        %v1486 = vpop.f32.mrf.mxu0
        %v1487 = vadd.f32 0.0, %v1486
        %v1488 = vpop.f32.mrf.mxu0
        %v1489 = vadd.f32 0.0, %v1488
        %1490 = vmatmul.bf16.gmra.mxu0 %v1156
        %v1491 = vpop.f32.mrf.mxu0
        %v1492 = vadd.f32 0.0, %v1491
        %v1493 = vpop.f32.mrf.mxu0
        %v1494 = vadd.f32 0.0, %v1493
        %1495 = vmatmul.bf16.gmra.mxu0 %v1159
        %v1496 = vpop.f32.mrf.mxu0
        %v1497 = vadd.f32 0.0, %v1496
        %v1498 = vpop.f32.mrf.mxu0
        %v1499 = vadd.f32 0.0, %v1498
        %1500 = vmatmul.bf16.gmra.mxu0 %v1162
        %v1501 = vpop.f32.mrf.mxu0
        %v1502 = vadd.f32 0.0, %v1501
        %v1503 = vpop.f32.mrf.mxu0
        %v1504 = vadd.f32 0.0, %v1503
        %1505 = vmatmul.bf16.gmra.mxu0 %v1165
        %v1506 = vpop.f32.mrf.mxu0
        %v1507 = vadd.f32 0.0, %v1506
        %v1508 = vpop.f32.mrf.mxu0
        %v1509 = vadd.f32 0.0, %v1508
        %1510 = vmatmul.bf16.gmra.mxu0 %v1168
        %v1511 = vpop.f32.mrf.mxu0
        %v1512 = vadd.f32 0.0, %v1511
        %v1513 = vpop.f32.mrf.mxu0
        %v1514 = vadd.f32 0.0, %v1513
        %1515 = vmatmul.bf16.gmra.mxu0 %v1171
        %v1516 = vpop.f32.mrf.mxu0
        %v1517 = vadd.f32 0.0, %v1516
        %v1518 = vpop.f32.mrf.mxu0
        %v1519 = vadd.f32 0.0, %v1518
        %1520 = vmatmul.bf16.gmra.mxu0 %v1174
        %v1521 = vpop.f32.mrf.mxu0
        %v1522 = vadd.f32 0.0, %v1521
        %v1523 = vpop.f32.mrf.mxu0
        %v1524 = vadd.f32 0.0, %v1523
        %1525 = vmatmul.bf16.gmra.mxu0 %v1177
        %v1526 = vpop.f32.mrf.mxu0
        %v1527 = vadd.f32 0.0, %v1526
        %v1528 = vpop.f32.mrf.mxu0
        %v1529 = vadd.f32 0.0, %v1528
        %1530 = vmatmul.bf16.gmra.mxu0 %v1180
        %v1531 = vpop.f32.mrf.mxu0
        %v1532 = vadd.f32 0.0, %v1531
        %v1533 = vpop.f32.mrf.mxu0
        %v1534 = vadd.f32 0.0, %v1533
        %1535 = vmatmul.bf16.gmra.mxu0 %v1183
        %v1536 = vpop.f32.mrf.mxu0
        %v1537 = vadd.f32 0.0, %v1536
        %v1538 = vpop.f32.mrf.mxu0
        %v1539 = vadd.f32 0.0, %v1538
        %1540 = vdwg.mxu0
        %v1541 = vld [vmem:[%s5] sm:$0xf]
        %v1542 = vld [vmem:[#allocation7] sm:$0xf]
        %v1543 = vadd.f32 %v1195, %v1197
        %v1544 = vadd.f32 %v1543, %v1200
        %v1545 = vadd.f32 %v1544, %v1202
        %v1546 = vadd.f32 %v1545, %v1205
        %v1547 = vadd.f32 %v1546, %v1207
        %v1548 = vadd.f32 %v1547, %v1210
        %v1549 = vadd.f32 %v1548, %v1212
        %v1550 = vadd.f32 %v1549, %v1215
        %v1551 = vadd.f32 %v1550, %v1217
        %v1552 = vadd.f32 %v1551, %v1220
        %v1553 = vadd.f32 %v1552, %v1222
        %v1554 = vadd.f32 %v1553, %v1225
        %v1555 = vadd.f32 %v1554, %v1227
        %v1556 = vadd.f32 %v1555, %v1230
        %v1557 = vadd.f32 %v1556, %v1232
        %v1558 = vrot.slane %v1557, 4
        %v1559 = vadd.f32 %v1557, %v1558
        %v1560 = vrot.slane %v1559, 2
        %v1561 = vadd.f32 %v1559, %v1560
        %v1562 = vrot.slane %v1561, 1
        %v1563 = vadd.f32 %v1561, %v1562
        %v1564 = vadd.f32 %v1284, %v1286
        %v1565 = vadd.f32 %v1564, %v1289
        %v1566 = vadd.f32 %v1565, %v1291
        %v1567 = vadd.f32 %v1566, %v1294
        %v1568 = vadd.f32 %v1567, %v1296
        %v1569 = vadd.f32 %v1568, %v1299
        %v1570 = vadd.f32 %v1569, %v1301
        %v1571 = vadd.f32 %v1570, %v1304
        %v1572 = vadd.f32 %v1571, %v1306
        %v1573 = vadd.f32 %v1572, %v1309
        %v1574 = vadd.f32 %v1573, %v1311
        %v1575 = vadd.f32 %v1574, %v1314
        %v1576 = vadd.f32 %v1575, %v1316
        %v1577 = vadd.f32 %v1576, %v1319
        %v1578 = vadd.f32 %v1577, %v1321
        %v1579 = vrot.slane %v1578, 4
        %v1580 = vadd.f32 %v1578, %v1579
        %v1581 = vrot.slane %v1580, 2
        %v1582 = vadd.f32 %v1580, %v1581
        %v1583 = vrot.slane %v1582, 1
        %v1584 = vadd.f32 %v1582, %v1583
        %v1585 = vadd.f32 %v1373, %v1375
        %v1586 = vadd.f32 %v1585, %v1378
        %v1587 = vadd.f32 %v1586, %v1380
        %v1588 = vadd.f32 %v1587, %v1383
        %v1589 = vadd.f32 %v1588, %v1385
        %v1590 = vadd.f32 %v1589, %v1388
        %v1591 = vadd.f32 %v1590, %v1390
        %v1592 = vadd.f32 %v1591, %v1393
        %v1593 = vadd.f32 %v1592, %v1395
        %v1594 = vadd.f32 %v1593, %v1398
        %v1595 = vadd.f32 %v1594, %v1400
        %v1596 = vadd.f32 %v1595, %v1403
        %v1597 = vadd.f32 %v1596, %v1405
        %v1598 = vadd.f32 %v1597, %v1408
        %v1599 = vadd.f32 %v1598, %v1410
        %v1600 = vrot.slane %v1599, 4
        %v1601 = vadd.f32 %v1599, %v1600
        %v1602 = vrot.slane %v1601, 2
        %v1603 = vadd.f32 %v1601, %v1602
        %v1604 = vrot.slane %v1603, 1
        %v1605 = vadd.f32 %v1603, %v1604
        %v1606 = vadd.f32 %v1462, %v1464
        %v1607 = vadd.f32 %v1606, %v1467
        %v1608 = vadd.f32 %v1607, %v1469
        %v1609 = vadd.f32 %v1608, %v1472
        %v1610 = vadd.f32 %v1609, %v1474
        %v1611 = vadd.f32 %v1610, %v1477
        %v1612 = vadd.f32 %v1611, %v1479
        %v1613 = vadd.f32 %v1612, %v1482
        %v1614 = vadd.f32 %v1613, %v1484
        %v1615 = vadd.f32 %v1614, %v1487
        %v1616 = vadd.f32 %v1615, %v1489
        %v1617 = vadd.f32 %v1616, %v1492
        %v1618 = vadd.f32 %v1617, %v1494
        %v1619 = vadd.f32 %v1618, %v1497
        %v1620 = vadd.f32 %v1619, %v1499
        %v1621 = vrot.slane %v1620, 4
        %v1622 = vadd.f32 %v1620, %v1621
        %v1623 = vrot.slane %v1622, 2
        %v1624 = vadd.f32 %v1622, %v1623
        %v1625 = vrot.slane %v1624, 1
        %v1626 = vadd.f32 %v1624, %v1625
        %v1627 = vadd.f32 %v1235, %v1237
        %v1628 = vadd.f32 %v1627, %v1240
        %v1629 = vadd.f32 %v1628, %v1242
        %v1630 = vadd.f32 %v1629, %v1245
        %v1631 = vadd.f32 %v1630, %v1247
        %v1632 = vadd.f32 %v1631, %v1250
        %v1633 = vadd.f32 %v1632, %v1252
        %v1634 = vadd.f32 %v1633, %v1255
        %v1635 = vadd.f32 %v1634, %v1257
        %v1636 = vadd.f32 %v1635, %v1260
        %v1637 = vadd.f32 %v1636, %v1262
        %v1638 = vadd.f32 %v1637, %v1265
        %v1639 = vadd.f32 %v1638, %v1267
        %v1640 = vadd.f32 %v1639, %v1270
        %v1641 = vadd.f32 %v1640, %v1272
        %v1642 = vrot.slane %v1641, 4
        %v1643 = vadd.f32 %v1641, %v1642
        %v1644 = vrot.slane %v1643, 2
        %v1645 = vadd.f32 %v1643, %v1644
        %v1646 = vrot.slane %v1645, 1
        %v1647 = vadd.f32 %v1645, %v1646
        %v1648 = vadd.f32 %v1324, %v1326
        %v1649 = vadd.f32 %v1648, %v1329
        %v1650 = vadd.f32 %v1649, %v1331
        %v1651 = vadd.f32 %v1650, %v1334
        %v1652 = vadd.f32 %v1651, %v1336
        %v1653 = vadd.f32 %v1652, %v1339
        %v1654 = vadd.f32 %v1653, %v1341
        %v1655 = vadd.f32 %v1654, %v1344
        %v1656 = vadd.f32 %v1655, %v1346
        %v1657 = vadd.f32 %v1656, %v1349
        %v1658 = vadd.f32 %v1657, %v1351
        %v1659 = vadd.f32 %v1658, %v1354
        %v1660 = vadd.f32 %v1659, %v1356
        %v1661 = vadd.f32 %v1660, %v1359
        %v1662 = vadd.f32 %v1661, %v1361
        %v1663 = vrot.slane %v1662, 4
        %v1664 = vadd.f32 %v1662, %v1663
        %v1665 = vrot.slane %v1664, 2
        %v1666 = vadd.f32 %v1664, %v1665
        %v1667 = vrot.slane %v1666, 1
        %v1668 = vadd.f32 %v1666, %v1667
        %v1669 = vadd.f32 %v1413, %v1415
        %v1670 = vadd.f32 %v1669, %v1418
        %v1671 = vadd.f32 %v1670, %v1420
        %v1672 = vadd.f32 %v1671, %v1423
        %v1673 = vadd.f32 %v1672, %v1425
        %v1674 = vadd.f32 %v1673, %v1428
        %v1675 = vadd.f32 %v1674, %v1430
        %v1676 = vadd.f32 %v1675, %v1433
        %v1677 = vadd.f32 %v1676, %v1435
        %v1678 = vadd.f32 %v1677, %v1438
        %v1679 = vadd.f32 %v1678, %v1440
        %v1680 = vadd.f32 %v1679, %v1443
        %v1681 = vadd.f32 %v1680, %v1445
        %v1682 = vadd.f32 %v1681, %v1448
        %v1683 = vadd.f32 %v1682, %v1450
        %v1684 = vrot.slane %v1683, 4
        %v1685 = vadd.f32 %v1683, %v1684
        %v1686 = vrot.slane %v1685, 2
        %v1687 = vadd.f32 %v1685, %v1686
        %v1688 = vrot.slane %v1687, 1
        %v1689 = vadd.f32 %v1687, %v1688
        %v1690 = vadd.f32 %v1502, %v1504
        %v1691 = vadd.f32 %v1690, %v1507
        %v1692 = vadd.f32 %v1691, %v1509
        %v1693 = vadd.f32 %v1692, %v1512
        %v1694 = vadd.f32 %v1693, %v1514
        %v1695 = vadd.f32 %v1694, %v1517
        %v1696 = vadd.f32 %v1695, %v1519
        %v1697 = vadd.f32 %v1696, %v1522
        %v1698 = vadd.f32 %v1697, %v1524
        %v1699 = vadd.f32 %v1698, %v1527
        %v1700 = vadd.f32 %v1699, %v1529
        %v1701 = vadd.f32 %v1700, %v1532
        %v1702 = vadd.f32 %v1701, %v1534
        %v1703 = vadd.f32 %v1702, %v1537
        %v1704 = vadd.f32 %v1703, %v1539
        %v1705 = vrot.slane %v1704, 4
        %v1706 = vadd.f32 %v1704, %v1705
        %v1707 = vrot.slane %v1706, 2
        %v1708 = vadd.f32 %v1706, %v1707
        %v1709 = vrot.slane %v1708, 1
        %v1710 = vadd.f32 %v1708, %v1709
        %v1711 = vmul.f32 %v1563, %v640
        %v1712 = vmul.f32 %v1584, %v640
        %v1713 = vmul.f32 %v1605, %v640
        %v1714 = vmul.f32 %v1626, %v640
        %v1715 = vmul.f32 %v1647, %v640
        %v1716 = vmul.f32 %v1668, %v640
        %v1717 = vmul.f32 %v1689, %v640
        %v1718 = vmul.f32 %v1710, %v640
        %v1719 = vmul.f32 %v1195, %v1195
        %v1720 = vmul.f32 %v1284, %v1284
        %v1721 = vmul.f32 %v1373, %v1373
        %v1722 = vmul.f32 %v1462, %v1462
        %v1723 = vmul.f32 %v1197, %v1197
        %v1724 = vmul.f32 %v1286, %v1286
        %v1725 = vmul.f32 %v1375, %v1375
        %v1726 = vmul.f32 %v1464, %v1464
        %v1727 = vmul.f32 %v1200, %v1200
        %v1728 = vmul.f32 %v1289, %v1289
        %v1729 = vmul.f32 %v1378, %v1378
        %v1730 = vmul.f32 %v1467, %v1467
        %v1731 = vmul.f32 %v1202, %v1202
        %v1732 = vmul.f32 %v1291, %v1291
        %v1733 = vmul.f32 %v1380, %v1380
        %v1734 = vmul.f32 %v1469, %v1469
        %v1735 = vmul.f32 %v1205, %v1205
        %v1736 = vmul.f32 %v1294, %v1294
        %v1737 = vmul.f32 %v1383, %v1383
        %v1738 = vmul.f32 %v1472, %v1472
        %v1739 = vmul.f32 %v1207, %v1207
        %v1740 = vmul.f32 %v1296, %v1296
        %v1741 = vmul.f32 %v1385, %v1385
        %v1742 = vmul.f32 %v1474, %v1474
        %v1743 = vmul.f32 %v1210, %v1210
        %v1744 = vmul.f32 %v1299, %v1299
        %v1745 = vmul.f32 %v1388, %v1388
        %v1746 = vmul.f32 %v1477, %v1477
        %v1747 = vmul.f32 %v1212, %v1212
        %v1748 = vmul.f32 %v1301, %v1301
        %v1749 = vmul.f32 %v1390, %v1390
        %v1750 = vmul.f32 %v1479, %v1479
        %v1751 = vmul.f32 %v1215, %v1215
        %v1752 = vmul.f32 %v1304, %v1304
        %v1753 = vmul.f32 %v1393, %v1393
        %v1754 = vmul.f32 %v1482, %v1482
        %v1755 = vmul.f32 %v1217, %v1217
        %v1756 = vmul.f32 %v1306, %v1306
        %v1757 = vmul.f32 %v1395, %v1395
        %v1758 = vmul.f32 %v1484, %v1484
        %v1759 = vmul.f32 %v1220, %v1220
        %v1760 = vmul.f32 %v1309, %v1309
        %v1761 = vmul.f32 %v1398, %v1398
        %v1762 = vmul.f32 %v1487, %v1487
        %v1763 = vmul.f32 %v1222, %v1222
        %v1764 = vmul.f32 %v1311, %v1311
        %v1765 = vmul.f32 %v1400, %v1400
        %v1766 = vmul.f32 %v1489, %v1489
        %v1767 = vmul.f32 %v1225, %v1225
        %v1768 = vmul.f32 %v1314, %v1314
        %v1769 = vmul.f32 %v1403, %v1403
        %v1770 = vmul.f32 %v1492, %v1492
        %v1771 = vmul.f32 %v1227, %v1227
        %v1772 = vmul.f32 %v1316, %v1316
        %v1773 = vmul.f32 %v1405, %v1405
        %v1774 = vmul.f32 %v1494, %v1494
        %v1775 = vmul.f32 %v1230, %v1230
        %v1776 = vmul.f32 %v1319, %v1319
        %v1777 = vmul.f32 %v1408, %v1408
        %v1778 = vmul.f32 %v1497, %v1497
        %v1779 = vmul.f32 %v1232, %v1232
        %v1780 = vmul.f32 %v1321, %v1321
        %v1781 = vmul.f32 %v1410, %v1410
        %v1782 = vmul.f32 %v1499, %v1499
        %v1783 = vmul.f32 %v1235, %v1235
        %v1784 = vmul.f32 %v1324, %v1324
        %v1785 = vmul.f32 %v1413, %v1413
        %v1786 = vmul.f32 %v1502, %v1502
        %v1787 = vmul.f32 %v1237, %v1237
        %v1788 = vmul.f32 %v1326, %v1326
        %v1789 = vmul.f32 %v1415, %v1415
        %v1790 = vmul.f32 %v1504, %v1504
        %v1791 = vmul.f32 %v1240, %v1240
        %v1792 = vmul.f32 %v1329, %v1329
        %v1793 = vmul.f32 %v1418, %v1418
        %v1794 = vmul.f32 %v1507, %v1507
        %v1795 = vmul.f32 %v1242, %v1242
        %v1796 = vmul.f32 %v1331, %v1331
        %v1797 = vmul.f32 %v1420, %v1420
        %v1798 = vmul.f32 %v1509, %v1509
        %v1799 = vmul.f32 %v1245, %v1245
        %v1800 = vmul.f32 %v1334, %v1334
        %v1801 = vmul.f32 %v1423, %v1423
        %v1802 = vmul.f32 %v1512, %v1512
        %v1803 = vmul.f32 %v1247, %v1247
        %v1804 = vmul.f32 %v1336, %v1336
        %v1805 = vmul.f32 %v1425, %v1425
        %v1806 = vmul.f32 %v1514, %v1514
        %v1807 = vmul.f32 %v1250, %v1250
        %v1808 = vmul.f32 %v1339, %v1339
        %v1809 = vmul.f32 %v1428, %v1428
        %v1810 = vmul.f32 %v1517, %v1517
        %v1811 = vmul.f32 %v1252, %v1252
        %v1812 = vmul.f32 %v1341, %v1341
        %v1813 = vmul.f32 %v1430, %v1430
        %v1814 = vmul.f32 %v1519, %v1519
        %v1815 = vmul.f32 %v1255, %v1255
        %v1816 = vmul.f32 %v1344, %v1344
        %v1817 = vmul.f32 %v1433, %v1433
        %v1818 = vmul.f32 %v1522, %v1522
        %v1819 = vmul.f32 %v1257, %v1257
        %v1820 = vmul.f32 %v1346, %v1346
        %v1821 = vmul.f32 %v1435, %v1435
        %v1822 = vmul.f32 %v1524, %v1524
        %v1823 = vmul.f32 %v1260, %v1260
        %v1824 = vmul.f32 %v1349, %v1349
        %v1825 = vmul.f32 %v1438, %v1438
        %v1826 = vmul.f32 %v1527, %v1527
        %v1827 = vmul.f32 %v1262, %v1262
        %v1828 = vmul.f32 %v1351, %v1351
        %v1829 = vmul.f32 %v1440, %v1440
        %v1830 = vmul.f32 %v1529, %v1529
        %v1831 = vmul.f32 %v1265, %v1265
        %v1832 = vmul.f32 %v1354, %v1354
        %v1833 = vmul.f32 %v1443, %v1443
        %v1834 = vmul.f32 %v1532, %v1532
        %v1835 = vmul.f32 %v1267, %v1267
        %v1836 = vmul.f32 %v1356, %v1356
        %v1837 = vmul.f32 %v1445, %v1445
        %v1838 = vmul.f32 %v1534, %v1534
        %v1839 = vmul.f32 %v1270, %v1270
        %v1840 = vmul.f32 %v1359, %v1359
        %v1841 = vmul.f32 %v1448, %v1448
        %v1842 = vmul.f32 %v1537, %v1537
        %v1843 = vmul.f32 %v1272, %v1272
        %v1844 = vmul.f32 %v1361, %v1361
        %v1845 = vmul.f32 %v1450, %v1450
        %v1846 = vmul.f32 %v1539, %v1539
        %v1847 = vadd.f32 %v1719, %v1723
        %v1848 = vadd.f32 %v1847, %v1727
        %v1849 = vadd.f32 %v1848, %v1731
        %v1850 = vadd.f32 %v1849, %v1735
        %v1851 = vadd.f32 %v1850, %v1739
        %v1852 = vadd.f32 %v1851, %v1743
        %v1853 = vadd.f32 %v1852, %v1747
        %v1854 = vadd.f32 %v1853, %v1751
        %v1855 = vadd.f32 %v1854, %v1755
        %v1856 = vadd.f32 %v1855, %v1759
        %v1857 = vadd.f32 %v1856, %v1763
        %v1858 = vadd.f32 %v1857, %v1767
        %v1859 = vadd.f32 %v1858, %v1771
        %v1860 = vadd.f32 %v1859, %v1775
        %v1861 = vadd.f32 %v1860, %v1779
        %v1862 = vrot.slane %v1861, 4
        %v1863 = vadd.f32 %v1861, %v1862
        %v1864 = vrot.slane %v1863, 2
        %v1865 = vadd.f32 %v1863, %v1864
        %v1866 = vrot.slane %v1865, 1
        %v1867 = vadd.f32 %v1865, %v1866
        %v1868 = vadd.f32 %v1720, %v1724
        %v1869 = vadd.f32 %v1868, %v1728
        %v1870 = vadd.f32 %v1869, %v1732
        %v1871 = vadd.f32 %v1870, %v1736
        %v1872 = vadd.f32 %v1871, %v1740
        %v1873 = vadd.f32 %v1872, %v1744
        %v1874 = vadd.f32 %v1873, %v1748
        %v1875 = vadd.f32 %v1874, %v1752
        %v1876 = vadd.f32 %v1875, %v1756
        %v1877 = vadd.f32 %v1876, %v1760
        %v1878 = vadd.f32 %v1877, %v1764
        %v1879 = vadd.f32 %v1878, %v1768
        %v1880 = vadd.f32 %v1879, %v1772
        %v1881 = vadd.f32 %v1880, %v1776
        %v1882 = vadd.f32 %v1881, %v1780
        %v1883 = vrot.slane %v1882, 4
        %v1884 = vadd.f32 %v1882, %v1883
        %v1885 = vrot.slane %v1884, 2
        %v1886 = vadd.f32 %v1884, %v1885
        %v1887 = vrot.slane %v1886, 1
        %v1888 = vadd.f32 %v1886, %v1887
        %v1889 = vadd.f32 %v1721, %v1725
        %v1890 = vadd.f32 %v1889, %v1729
        %v1891 = vadd.f32 %v1890, %v1733
        %v1892 = vadd.f32 %v1891, %v1737
        %v1893 = vadd.f32 %v1892, %v1741
        %v1894 = vadd.f32 %v1893, %v1745
        %v1895 = vadd.f32 %v1894, %v1749
        %v1896 = vadd.f32 %v1895, %v1753
        %v1897 = vadd.f32 %v1896, %v1757
        %v1898 = vadd.f32 %v1897, %v1761
        %v1899 = vadd.f32 %v1898, %v1765
        %v1900 = vadd.f32 %v1899, %v1769
        %v1901 = vadd.f32 %v1900, %v1773
        %v1902 = vadd.f32 %v1901, %v1777
        %v1903 = vadd.f32 %v1902, %v1781
        %v1904 = vrot.slane %v1903, 4
        %v1905 = vadd.f32 %v1903, %v1904
        %v1906 = vrot.slane %v1905, 2
        %v1907 = vadd.f32 %v1905, %v1906
        %v1908 = vrot.slane %v1907, 1
        %v1909 = vadd.f32 %v1907, %v1908
        %v1910 = vadd.f32 %v1722, %v1726
        %v1911 = vadd.f32 %v1910, %v1730
        %v1912 = vadd.f32 %v1911, %v1734
        %v1913 = vadd.f32 %v1912, %v1738
        %v1914 = vadd.f32 %v1913, %v1742
        %v1915 = vadd.f32 %v1914, %v1746
        %v1916 = vadd.f32 %v1915, %v1750
        %v1917 = vadd.f32 %v1916, %v1754
        %v1918 = vadd.f32 %v1917, %v1758
        %v1919 = vadd.f32 %v1918, %v1762
        %v1920 = vadd.f32 %v1919, %v1766
        %v1921 = vadd.f32 %v1920, %v1770
        %v1922 = vadd.f32 %v1921, %v1774
        %v1923 = vadd.f32 %v1922, %v1778
        %v1924 = vadd.f32 %v1923, %v1782
        %v1925 = vrot.slane %v1924, 4
        %v1926 = vadd.f32 %v1924, %v1925
        %v1927 = vrot.slane %v1926, 2
        %v1928 = vadd.f32 %v1926, %v1927
        %v1929 = vrot.slane %v1928, 1
        %v1930 = vadd.f32 %v1928, %v1929
        %v1931 = vadd.f32 %v1783, %v1787
        %v1932 = vadd.f32 %v1931, %v1791
        %v1933 = vadd.f32 %v1932, %v1795
        %v1934 = vadd.f32 %v1933, %v1799
        %v1935 = vadd.f32 %v1934, %v1803
        %v1936 = vadd.f32 %v1935, %v1807
        %v1937 = vadd.f32 %v1936, %v1811
        %v1938 = vadd.f32 %v1937, %v1815
        %v1939 = vadd.f32 %v1938, %v1819
        %v1940 = vadd.f32 %v1939, %v1823
        %v1941 = vadd.f32 %v1940, %v1827
        %v1942 = vadd.f32 %v1941, %v1831
        %v1943 = vadd.f32 %v1942, %v1835
        %v1944 = vadd.f32 %v1943, %v1839
        %v1945 = vadd.f32 %v1944, %v1843
        %v1946 = vrot.slane %v1945, 4
        %v1947 = vadd.f32 %v1945, %v1946
        %v1948 = vrot.slane %v1947, 2
        %v1949 = vadd.f32 %v1947, %v1948
        %v1950 = vrot.slane %v1949, 1
        %v1951 = vadd.f32 %v1949, %v1950
        %v1952 = vadd.f32 %v1784, %v1788
        %v1953 = vadd.f32 %v1952, %v1792
        %v1954 = vadd.f32 %v1953, %v1796
        %v1955 = vadd.f32 %v1954, %v1800
        %v1956 = vadd.f32 %v1955, %v1804
        %v1957 = vadd.f32 %v1956, %v1808
        %v1958 = vadd.f32 %v1957, %v1812
        %v1959 = vadd.f32 %v1958, %v1816
        %v1960 = vadd.f32 %v1959, %v1820
        %v1961 = vadd.f32 %v1960, %v1824
        %v1962 = vadd.f32 %v1961, %v1828
        %v1963 = vadd.f32 %v1962, %v1832
        %v1964 = vadd.f32 %v1963, %v1836
        %v1965 = vadd.f32 %v1964, %v1840
        %v1966 = vadd.f32 %v1965, %v1844
        %v1967 = vrot.slane %v1966, 4
        %v1968 = vadd.f32 %v1966, %v1967
        %v1969 = vrot.slane %v1968, 2
        %v1970 = vadd.f32 %v1968, %v1969
        %v1971 = vrot.slane %v1970, 1
        %v1972 = vadd.f32 %v1970, %v1971
        %v1973 = vadd.f32 %v1785, %v1789
        %v1974 = vadd.f32 %v1973, %v1793
        %v1975 = vadd.f32 %v1974, %v1797
        %v1976 = vadd.f32 %v1975, %v1801
        %v1977 = vadd.f32 %v1976, %v1805
        %v1978 = vadd.f32 %v1977, %v1809
        %v1979 = vadd.f32 %v1978, %v1813
        %v1980 = vadd.f32 %v1979, %v1817
        %v1981 = vadd.f32 %v1980, %v1821
        %v1982 = vadd.f32 %v1981, %v1825
        %v1983 = vadd.f32 %v1982, %v1829
        %v1984 = vadd.f32 %v1983, %v1833
        %v1985 = vadd.f32 %v1984, %v1837
        %v1986 = vadd.f32 %v1985, %v1841
        %v1987 = vadd.f32 %v1986, %v1845
        %v1988 = vrot.slane %v1987, 4
        %v1989 = vadd.f32 %v1987, %v1988
        %v1990 = vrot.slane %v1989, 2
        %v1991 = vadd.f32 %v1989, %v1990
        %v1992 = vrot.slane %v1991, 1
        %v1993 = vadd.f32 %v1991, %v1992
        %v1994 = vadd.f32 %v1786, %v1790
        %v1995 = vadd.f32 %v1994, %v1794
        %v1996 = vadd.f32 %v1995, %v1798
        %v1997 = vadd.f32 %v1996, %v1802
        %v1998 = vadd.f32 %v1997, %v1806
        %v1999 = vadd.f32 %v1998, %v1810
        %v2000 = vadd.f32 %v1999, %v1814
        %v2001 = vadd.f32 %v2000, %v1818
        %v2002 = vadd.f32 %v2001, %v1822
        %v2003 = vadd.f32 %v2002, %v1826
        %v2004 = vadd.f32 %v2003, %v1830
        %v2005 = vadd.f32 %v2004, %v1834
        %v2006 = vadd.f32 %v2005, %v1838
        %v2007 = vadd.f32 %v2006, %v1842
        %v2008 = vadd.f32 %v2007, %v1846
        %v2009 = vrot.slane %v2008, 4
        %v2010 = vadd.f32 %v2008, %v2009
        %v2011 = vrot.slane %v2010, 2
        %v2012 = vadd.f32 %v2010, %v2011
        %v2013 = vrot.slane %v2012, 1
        %v2014 = vadd.f32 %v2012, %v2013
        %v2015 = vmul.f32 %v1867, %v640
        %v2016 = vmul.f32 %v1888, %v640
        %v2017 = vmul.f32 %v1909, %v640
        %v2018 = vmul.f32 %v1930, %v640
        %v2019 = vmul.f32 %v1951, %v640
        %v2020 = vmul.f32 %v1972, %v640
        %v2021 = vmul.f32 %v1993, %v640
        %v2022 = vmul.f32 %v2014, %v640
        %v2023 = vmul.f32 %v1711, %v1711
        %v2024 = vmul.f32 %v1712, %v1712
        %v2025 = vmul.f32 %v1713, %v1713
        %v2026 = vmul.f32 %v1714, %v1714
        %v2027 = vmul.f32 %v1715, %v1715
        %v2028 = vmul.f32 %v1716, %v1716
        %v2029 = vmul.f32 %v1717, %v1717
        %v2030 = vmul.f32 %v1718, %v1718
        %v2031 = vsub.f32 %v2015, %v2023
        %v2032 = vsub.f32 %v2016, %v2024
        %v2033 = vsub.f32 %v2017, %v2025
        %v2034 = vsub.f32 %v2018, %v2026
        %v2035 = vsub.f32 %v2019, %v2027
        %v2036 = vsub.f32 %v2020, %v2028
        %v2037 = vsub.f32 %v2021, %v2029
        %v2038 = vsub.f32 %v2022, %v2030
        %v2039 = vmax.f32 %v2031, 0.0
        %v2040 = vmax.f32 %v2032, 0.0
        %v2041 = vmax.f32 %v2033, 0.0
        %v2042 = vmax.f32 %v2034, 0.0
        %v2043 = vmax.f32 %v2035, 0.0
        %v2044 = vmax.f32 %v2036, 0.0
        %v2045 = vmax.f32 %v2037, 0.0
        %v2046 = vmax.f32 %v2038, 0.0
        %v2047 = vadd.f32 %v2039, 1e-05
        %v2048 = vadd.f32 %v2040, 1e-05
        %v2049 = vadd.f32 %v2041, 1e-05
        %v2050 = vadd.f32 %v2042, 1e-05
        %v2051 = vadd.f32 %v2043, 1e-05
        %v2052 = vadd.f32 %v2044, 1e-05
        %v2053 = vadd.f32 %v2045, 1e-05
        %v2054 = vadd.f32 %v2046, 1e-05
        %v2055 = vrsqrt.pop %v2047
        %v2056 = vmul.f32 %v2055, %v2047
        %v2057 = vmul.f32 %v2056, %v2055
        %v2058 = vmul.f32 0.5, %v2057
        %v2059 = vsub.f32 1.5, %v2058
        %v2060 = vmul.f32 %v2055, %v2059
        %vm2061 = vweird.f32 %v2047
        %vm2062 = vweird.f32 %v2055
        %vm2063 = vmor %vm2061, %vm2062
        %v2064 = vsel %vm2063, %v2055, %v2060
        %v2065 = vrsqrt.pop %v2048
        %v2066 = vmul.f32 %v2065, %v2048
        %v2067 = vmul.f32 %v2066, %v2065
        %v2068 = vmul.f32 0.5, %v2067
        %v2069 = vsub.f32 1.5, %v2068
        %v2070 = vmul.f32 %v2065, %v2069
        %vm2071 = vweird.f32 %v2048
        %vm2072 = vweird.f32 %v2065
        %vm2073 = vmor %vm2071, %vm2072
        %v2074 = vsel %vm2073, %v2065, %v2070
        %v2075 = vrsqrt.pop %v2049
        %v2076 = vmul.f32 %v2075, %v2049
        %v2077 = vmul.f32 %v2076, %v2075
        %v2078 = vmul.f32 0.5, %v2077
        %v2079 = vsub.f32 1.5, %v2078
        %v2080 = vmul.f32 %v2075, %v2079
        %vm2081 = vweird.f32 %v2049
        %vm2082 = vweird.f32 %v2075
        %vm2083 = vmor %vm2081, %vm2082
        %v2084 = vsel %vm2083, %v2075, %v2080
        %v2085 = vrsqrt.pop %v2050
        %v2086 = vmul.f32 %v2085, %v2050
        %v2087 = vmul.f32 %v2086, %v2085
        %v2088 = vmul.f32 0.5, %v2087
        %v2089 = vsub.f32 1.5, %v2088
        %v2090 = vmul.f32 %v2085, %v2089
        %vm2091 = vweird.f32 %v2050
        %vm2092 = vweird.f32 %v2085
        %vm2093 = vmor %vm2091, %vm2092
        %v2094 = vsel %vm2093, %v2085, %v2090
        %v2095 = vrsqrt.pop %v2051
        %v2096 = vmul.f32 %v2095, %v2051
        %v2097 = vmul.f32 %v2096, %v2095
        %v2098 = vmul.f32 0.5, %v2097
        %v2099 = vsub.f32 1.5, %v2098
        %v2100 = vmul.f32 %v2095, %v2099
        %vm2101 = vweird.f32 %v2051
        %vm2102 = vweird.f32 %v2095
        %vm2103 = vmor %vm2101, %vm2102
        %v2104 = vsel %vm2103, %v2095, %v2100
        %v2105 = vrsqrt.pop %v2052
        %v2106 = vmul.f32 %v2105, %v2052
        %v2107 = vmul.f32 %v2106, %v2105
        %v2108 = vmul.f32 0.5, %v2107
        %v2109 = vsub.f32 1.5, %v2108
        %v2110 = vmul.f32 %v2105, %v2109
        %vm2111 = vweird.f32 %v2052
        %vm2112 = vweird.f32 %v2105
        %vm2113 = vmor %vm2111, %vm2112
        %v2114 = vsel %vm2113, %v2105, %v2110
        %v2115 = vrsqrt.pop %v2053
        %v2116 = vmul.f32 %v2115, %v2053
        %v2117 = vmul.f32 %v2116, %v2115
        %v2118 = vmul.f32 0.5, %v2117
        %v2119 = vsub.f32 1.5, %v2118
        %v2120 = vmul.f32 %v2115, %v2119
        %vm2121 = vweird.f32 %v2053
        %vm2122 = vweird.f32 %v2115
        %vm2123 = vmor %vm2121, %vm2122
        %v2124 = vsel %vm2123, %v2115, %v2120
        %v2125 = vrsqrt.pop %v2054
        %v2126 = vmul.f32 %v2125, %v2054
        %v2127 = vmul.f32 %v2126, %v2125
        %v2128 = vmul.f32 0.5, %v2127
        %v2129 = vsub.f32 1.5, %v2128
        %v2130 = vmul.f32 %v2125, %v2129
        %vm2131 = vweird.f32 %v2054
        %vm2132 = vweird.f32 %v2125
        %vm2133 = vmor %vm2131, %vm2132
        %v2134 = vsel %vm2133, %v2125, %v2130
        %v2143 = vrot.slane %v2074, 7
        %v2144 = vrot.slane %v2084, 6
        %v2145 = vrot.slane %v2094, 5
        %v2146 = vrot.slane %v2114, 7
        %v2147 = vrot.slane %v2124, 6
        %v2148 = vrot.slane %v2134, 5
        %vm2149 = vcmask 1040384
        %v2150 = vsel %vm2149, %v2064, %v2143
        %vm2151 = vcmask 1042434
        %v2152 = vsel %vm2151, %v2144, %v2145
        %vm2153 = vcmask 1041408
        %v2154 = vsel %vm2153, %v2150, %v2152
        %v2155 = vsel %vm2149, %v2104, %v2146
        %v2156 = vsel %vm2151, %v2147, %v2148
        %v2157 = vsel %vm2153, %v2155, %v2156
        %v2160 = vmul.f32 %v1541, %v2154
        %v2161 = vmul.f32 %v1541, %v2157
        %v2164 = vperm.slane %v2160, 0
        %v2165 = vperm.slane %v2160, 1
        %v2166 = vperm.slane %v2160, 2
        %v2167 = vperm.slane %v2160, 3
        %v2168 = vperm.slane %v2161, 0
        %v2169 = vperm.slane %v2161, 1
        %v2170 = vperm.slane %v2161, 2
        %v2171 = vperm.slane %v2161, 3
        %v2180 = vmul.f32 %v1711, %v2164
        %v2181 = vmul.f32 %v1712, %v2165
        %v2182 = vmul.f32 %v1713, %v2166
        %v2183 = vmul.f32 %v1714, %v2167
        %v2184 = vmul.f32 %v1715, %v2168
        %v2185 = vmul.f32 %v1716, %v2169
        %v2186 = vmul.f32 %v1717, %v2170
        %v2187 = vmul.f32 %v1718, %v2171
        %v2196 = vrot.slane %v2181, 7
        %v2197 = vrot.slane %v2182, 6
        %v2198 = vrot.slane %v2183, 5
        %v2199 = vrot.slane %v2185, 7
        %v2200 = vrot.slane %v2186, 6
        %v2201 = vrot.slane %v2187, 5
        %v2202 = vsel %vm2149, %v2180, %v2196
        %v2203 = vsel %vm2151, %v2197, %v2198
        %v2204 = vsel %vm2153, %v2202, %v2203
        %v2205 = vsel %vm2149, %v2184, %v2199
        %v2206 = vsel %vm2151, %v2200, %v2201
        %v2207 = vsel %vm2153, %v2205, %v2206
        %v2210 = vsub.f32 %v1542, %v2204
        %v2211 = vsub.f32 %v1542, %v2207
        %v2212 = vpack.c.bf16 %v1284, %v1195
        %v2213 = vpack.c.bf16 %v1462, %v1373
        %v2214 = vpack.c.bf16 %v1286, %v1197
        %v2215 = vpack.c.bf16 %v1464, %v1375
        %v2216 = vpack.c.bf16 %v1289, %v1200
        %v2217 = vpack.c.bf16 %v1467, %v1378
        %v2218 = vpack.c.bf16 %v1291, %v1202
        %v2219 = vpack.c.bf16 %v1469, %v1380
        %v2220 = vpack.c.bf16 %v1294, %v1205
        %v2221 = vpack.c.bf16 %v1472, %v1383
        %v2222 = vpack.c.bf16 %v1296, %v1207
        %v2223 = vpack.c.bf16 %v1474, %v1385
        %v2224 = vpack.c.bf16 %v1299, %v1210
        %v2225 = vpack.c.bf16 %v1477, %v1388
        %v2226 = vpack.c.bf16 %v1301, %v1212
        %v2227 = vpack.c.bf16 %v1479, %v1390
        %v2228 = vpack.c.bf16 %v1304, %v1215
        %v2229 = vpack.c.bf16 %v1482, %v1393
        %v2230 = vpack.c.bf16 %v1306, %v1217
        %v2231 = vpack.c.bf16 %v1484, %v1395
        %v2232 = vpack.c.bf16 %v1309, %v1220
        %v2233 = vpack.c.bf16 %v1487, %v1398
        %v2234 = vpack.c.bf16 %v1311, %v1222
        %v2235 = vpack.c.bf16 %v1489, %v1400
        %v2236 = vpack.c.bf16 %v1314, %v1225
        %v2237 = vpack.c.bf16 %v1492, %v1403
        %v2238 = vpack.c.bf16 %v1316, %v1227
        %v2239 = vpack.c.bf16 %v1494, %v1405
        %v2240 = vpack.c.bf16 %v1319, %v1230
        %v2241 = vpack.c.bf16 %v1497, %v1408
        %v2242 = vpack.c.bf16 %v1321, %v1232
        %v2243 = vpack.c.bf16 %v1499, %v1410
        %v2244 = vpack.c.bf16 %v1324, %v1235
        %v2245 = vpack.c.bf16 %v1502, %v1413
        %v2246 = vpack.c.bf16 %v1326, %v1237
        %v2247 = vpack.c.bf16 %v1504, %v1415
        %v2248 = vpack.c.bf16 %v1329, %v1240
        %v2249 = vpack.c.bf16 %v1507, %v1418
        %v2250 = vpack.c.bf16 %v1331, %v1242
        %v2251 = vpack.c.bf16 %v1509, %v1420
        %v2252 = vpack.c.bf16 %v1334, %v1245
        %v2253 = vpack.c.bf16 %v1512, %v1423
        %v2254 = vpack.c.bf16 %v1336, %v1247
        %v2255 = vpack.c.bf16 %v1514, %v1425
        %v2256 = vpack.c.bf16 %v1339, %v1250
        %v2257 = vpack.c.bf16 %v1517, %v1428
        %v2258 = vpack.c.bf16 %v1341, %v1252
        %v2259 = vpack.c.bf16 %v1519, %v1430
        %v2260 = vpack.c.bf16 %v1344, %v1255
        %v2261 = vpack.c.bf16 %v1522, %v1433
        %v2262 = vpack.c.bf16 %v1346, %v1257
        %v2263 = vpack.c.bf16 %v1524, %v1435
        %v2264 = vpack.c.bf16 %v1349, %v1260
        %v2265 = vpack.c.bf16 %v1527, %v1438
        %v2266 = vpack.c.bf16 %v1351, %v1262
        %v2267 = vpack.c.bf16 %v1529, %v1440
        %v2268 = vpack.c.bf16 %v1354, %v1265
        %v2269 = vpack.c.bf16 %v1532, %v1443
        %v2270 = vpack.c.bf16 %v1356, %v1267
        %v2271 = vpack.c.bf16 %v1534, %v1445
        %v2272 = vpack.c.bf16 %v1359, %v1270
        %v2273 = vpack.c.bf16 %v1537, %v1448
        %v2274 = vpack.c.bf16 %v1361, %v1272
        %v2275 = vpack.c.bf16 %v1539, %v1450
        %v2276 = vpack.c.bf16 %v2165, %v2164
        %v2277 = vpack.c.bf16 %v2167, %v2166
        %v2278 = vpack.c.bf16 %v2169, %v2168
        %v2279 = vpack.c.bf16 %v2171, %v2170
        %v2284 = vunpack.c.l.b16 %v2276
        %v2285 = vunpack.c.h.b16 %v2276
        %v2286 = vunpack.c.l.b16 %v2277
        %v2287 = vunpack.c.h.b16 %v2277
        %v2288 = vunpack.c.l.b16 %v2278
        %v2289 = vunpack.c.h.b16 %v2278
        %v2290 = vunpack.c.l.b16 %v2279
        %v2291 = vunpack.c.h.b16 %v2279
        %v2292 = vpack.c.b16 %v2284, %v2284
        %v2293 = vpack.c.b16 %v2285, %v2285
        %v2294 = vpack.c.b16 %v2286, %v2286
        %v2295 = vpack.c.b16 %v2287, %v2287
        %v2296 = vpack.c.b16 %v2288, %v2288
        %v2297 = vpack.c.b16 %v2289, %v2289
        %v2298 = vpack.c.b16 %v2290, %v2290
        %v2299 = vpack.c.b16 %v2291, %v2291
        %v2301 = vpack.i.b16 %v2292, %v2292
        %v2303 = vperm.slane %v2301, 0
        %v2305 = vpack.i.b16 %v2293, %v2293
        %v2307 = vperm.slane %v2305, 0
        %v2309 = vpack.i.b16 %v2294, %v2294
        %v2311 = vperm.slane %v2309, 0
        %v2313 = vpack.i.b16 %v2295, %v2295
        %v2315 = vperm.slane %v2313, 0
        %v2317 = vpack.i.b16 %v2296, %v2296
        %v2319 = vperm.slane %v2317, 0
        %v2321 = vpack.i.b16 %v2297, %v2297
        %v2323 = vperm.slane %v2321, 0
        %v2325 = vpack.i.b16 %v2298, %v2298
        %v2327 = vperm.slane %v2325, 0
        %v2329 = vpack.i.b16 %v2299, %v2299
        %v2331 = vperm.slane %v2329, 0
        %v2332 = vunpack.c.l.bf16 %v2212
        %v2333 = vunpack.c.h.bf16 %v2212
        %v2334 = vunpack.c.l.bf16 %v2213
        %v2335 = vunpack.c.h.bf16 %v2213
        %v2336 = vunpack.c.l.bf16 %v2214
        %v2337 = vunpack.c.h.bf16 %v2214
        %v2338 = vunpack.c.l.bf16 %v2215
        %v2339 = vunpack.c.h.bf16 %v2215
        %v2340 = vunpack.c.l.bf16 %v2216
        %v2341 = vunpack.c.h.bf16 %v2216
        %v2342 = vunpack.c.l.bf16 %v2217
        %v2343 = vunpack.c.h.bf16 %v2217
        %v2344 = vunpack.c.l.bf16 %v2218
        %v2345 = vunpack.c.h.bf16 %v2218
        %v2346 = vunpack.c.l.bf16 %v2219
        %v2347 = vunpack.c.h.bf16 %v2219
        %v2348 = vunpack.c.l.bf16 %v2220
        %v2349 = vunpack.c.h.bf16 %v2220
        %v2350 = vunpack.c.l.bf16 %v2221
        %v2351 = vunpack.c.h.bf16 %v2221
        %v2352 = vunpack.c.l.bf16 %v2222
        %v2353 = vunpack.c.h.bf16 %v2222
        %v2354 = vunpack.c.l.bf16 %v2223
        %v2355 = vunpack.c.h.bf16 %v2223
        %v2356 = vunpack.c.l.bf16 %v2224
        %v2357 = vunpack.c.h.bf16 %v2224
        %v2358 = vunpack.c.l.bf16 %v2225
        %v2359 = vunpack.c.h.bf16 %v2225
        %v2360 = vunpack.c.l.bf16 %v2226
        %v2361 = vunpack.c.h.bf16 %v2226
        %v2362 = vunpack.c.l.bf16 %v2227
        %v2363 = vunpack.c.h.bf16 %v2227
        %v2364 = vunpack.c.l.bf16 %v2228
        %v2365 = vunpack.c.h.bf16 %v2228
        %v2366 = vunpack.c.l.bf16 %v2229
        %v2367 = vunpack.c.h.bf16 %v2229
        %v2368 = vunpack.c.l.bf16 %v2230
        %v2369 = vunpack.c.h.bf16 %v2230
        %v2370 = vunpack.c.l.bf16 %v2231
        %v2371 = vunpack.c.h.bf16 %v2231
        %v2372 = vunpack.c.l.bf16 %v2232
        %v2373 = vunpack.c.h.bf16 %v2232
        %v2374 = vunpack.c.l.bf16 %v2233
        %v2375 = vunpack.c.h.bf16 %v2233
        %v2376 = vunpack.c.l.bf16 %v2234
        %v2377 = vunpack.c.h.bf16 %v2234
        %v2378 = vunpack.c.l.bf16 %v2235
        %v2379 = vunpack.c.h.bf16 %v2235
        %v2380 = vunpack.c.l.bf16 %v2236
        %v2381 = vunpack.c.h.bf16 %v2236
        %v2382 = vunpack.c.l.bf16 %v2237
        %v2383 = vunpack.c.h.bf16 %v2237
        %v2384 = vunpack.c.l.bf16 %v2238
        %v2385 = vunpack.c.h.bf16 %v2238
        %v2386 = vunpack.c.l.bf16 %v2239
        %v2387 = vunpack.c.h.bf16 %v2239
        %v2388 = vunpack.c.l.bf16 %v2240
        %v2389 = vunpack.c.h.bf16 %v2240
        %v2390 = vunpack.c.l.bf16 %v2241
        %v2391 = vunpack.c.h.bf16 %v2241
        %v2392 = vunpack.c.l.bf16 %v2242
        %v2393 = vunpack.c.h.bf16 %v2242
        %v2394 = vunpack.c.l.bf16 %v2243
        %v2395 = vunpack.c.h.bf16 %v2243
        %v2396 = vunpack.c.l.bf16 %v2244
        %v2397 = vunpack.c.h.bf16 %v2244
        %v2398 = vunpack.c.l.bf16 %v2245
        %v2399 = vunpack.c.h.bf16 %v2245
        %v2400 = vunpack.c.l.bf16 %v2246
        %v2401 = vunpack.c.h.bf16 %v2246
        %v2402 = vunpack.c.l.bf16 %v2247
        %v2403 = vunpack.c.h.bf16 %v2247
        %v2404 = vunpack.c.l.bf16 %v2248
        %v2405 = vunpack.c.h.bf16 %v2248
        %v2406 = vunpack.c.l.bf16 %v2249
        %v2407 = vunpack.c.h.bf16 %v2249
        %v2408 = vunpack.c.l.bf16 %v2250
        %v2409 = vunpack.c.h.bf16 %v2250
        %v2410 = vunpack.c.l.bf16 %v2251
        %v2411 = vunpack.c.h.bf16 %v2251
        %v2412 = vunpack.c.l.bf16 %v2252
        %v2413 = vunpack.c.h.bf16 %v2252
        %v2414 = vunpack.c.l.bf16 %v2253
        %v2415 = vunpack.c.h.bf16 %v2253
        %v2416 = vunpack.c.l.bf16 %v2254
        %v2417 = vunpack.c.h.bf16 %v2254
        %v2418 = vunpack.c.l.bf16 %v2255
        %v2419 = vunpack.c.h.bf16 %v2255
        %v2420 = vunpack.c.l.bf16 %v2256
        %v2421 = vunpack.c.h.bf16 %v2256
        %v2422 = vunpack.c.l.bf16 %v2257
        %v2423 = vunpack.c.h.bf16 %v2257
        %v2424 = vunpack.c.l.bf16 %v2258
        %v2425 = vunpack.c.h.bf16 %v2258
        %v2426 = vunpack.c.l.bf16 %v2259
        %v2427 = vunpack.c.h.bf16 %v2259
        %v2428 = vunpack.c.l.bf16 %v2260
        %v2429 = vunpack.c.h.bf16 %v2260
        %v2430 = vunpack.c.l.bf16 %v2261
        %v2431 = vunpack.c.h.bf16 %v2261
        %v2432 = vunpack.c.l.bf16 %v2262
        %v2433 = vunpack.c.h.bf16 %v2262
        %v2434 = vunpack.c.l.bf16 %v2263
        %v2435 = vunpack.c.h.bf16 %v2263
        %v2436 = vunpack.c.l.bf16 %v2264
        %v2437 = vunpack.c.h.bf16 %v2264
        %v2438 = vunpack.c.l.bf16 %v2265
        %v2439 = vunpack.c.h.bf16 %v2265
        %v2440 = vunpack.c.l.bf16 %v2266
        %v2441 = vunpack.c.h.bf16 %v2266
        %v2442 = vunpack.c.l.bf16 %v2267
        %v2443 = vunpack.c.h.bf16 %v2267
        %v2444 = vunpack.c.l.bf16 %v2268
        %v2445 = vunpack.c.h.bf16 %v2268
        %v2446 = vunpack.c.l.bf16 %v2269
        %v2447 = vunpack.c.h.bf16 %v2269
        %v2448 = vunpack.c.l.bf16 %v2270
        %v2449 = vunpack.c.h.bf16 %v2270
        %v2450 = vunpack.c.l.bf16 %v2271
        %v2451 = vunpack.c.h.bf16 %v2271
        %v2452 = vunpack.c.l.bf16 %v2272
        %v2453 = vunpack.c.h.bf16 %v2272
        %v2454 = vunpack.c.l.bf16 %v2273
        %v2455 = vunpack.c.h.bf16 %v2273
        %v2456 = vunpack.c.l.bf16 %v2274
        %v2457 = vunpack.c.h.bf16 %v2274
        %v2458 = vunpack.c.l.bf16 %v2275
        %v2459 = vunpack.c.h.bf16 %v2275
        %v2460 = vunpack.c.l.bf16 %v2303
        %v2461 = vunpack.c.l.bf16 %v2307
        %v2462 = vunpack.c.l.bf16 %v2311
        %v2463 = vunpack.c.l.bf16 %v2315
        %v2464 = vunpack.c.l.bf16 %v2319
        %v2465 = vunpack.c.l.bf16 %v2323
        %v2466 = vunpack.c.l.bf16 %v2327
        %v2467 = vunpack.c.l.bf16 %v2331
        %v2468 = vmul.f32 %v2332, %v2460
        %v2469 = vmul.f32 %v2333, %v2461
        %v2470 = vmul.f32 %v2334, %v2462
        %v2471 = vmul.f32 %v2335, %v2463
        %v2472 = vmul.f32 %v2336, %v2460
        %v2473 = vmul.f32 %v2337, %v2461
        %v2474 = vmul.f32 %v2338, %v2462
        %v2475 = vmul.f32 %v2339, %v2463
        %v2476 = vmul.f32 %v2340, %v2460
        %v2477 = vmul.f32 %v2341, %v2461
        %v2478 = vmul.f32 %v2342, %v2462
        %v2479 = vmul.f32 %v2343, %v2463
        %v2480 = vmul.f32 %v2344, %v2460
        %v2481 = vmul.f32 %v2345, %v2461
        %v2482 = vmul.f32 %v2346, %v2462
        %v2483 = vmul.f32 %v2347, %v2463
        %v2484 = vmul.f32 %v2348, %v2460
        %v2485 = vmul.f32 %v2349, %v2461
        %v2486 = vmul.f32 %v2350, %v2462
        %v2487 = vmul.f32 %v2351, %v2463
        %v2488 = vmul.f32 %v2352, %v2460
        %v2489 = vmul.f32 %v2353, %v2461
        %v2490 = vmul.f32 %v2354, %v2462
        %v2491 = vmul.f32 %v2355, %v2463
        %v2492 = vmul.f32 %v2356, %v2460
        %v2493 = vmul.f32 %v2357, %v2461
        %v2494 = vmul.f32 %v2358, %v2462
        %v2495 = vmul.f32 %v2359, %v2463
        %v2496 = vmul.f32 %v2360, %v2460
        %v2497 = vmul.f32 %v2361, %v2461
        %v2498 = vmul.f32 %v2362, %v2462
        %v2499 = vmul.f32 %v2363, %v2463
        %v2500 = vmul.f32 %v2364, %v2460
        %v2501 = vmul.f32 %v2365, %v2461
        %v2502 = vmul.f32 %v2366, %v2462
        %v2503 = vmul.f32 %v2367, %v2463
        %v2504 = vmul.f32 %v2368, %v2460
        %v2505 = vmul.f32 %v2369, %v2461
        %v2506 = vmul.f32 %v2370, %v2462
        %v2507 = vmul.f32 %v2371, %v2463
        %v2508 = vmul.f32 %v2372, %v2460
        %v2509 = vmul.f32 %v2373, %v2461
        %v2510 = vmul.f32 %v2374, %v2462
        %v2511 = vmul.f32 %v2375, %v2463
        %v2512 = vmul.f32 %v2376, %v2460
        %v2513 = vmul.f32 %v2377, %v2461
        %v2514 = vmul.f32 %v2378, %v2462
        %v2515 = vmul.f32 %v2379, %v2463
        %v2516 = vmul.f32 %v2380, %v2460
        %v2517 = vmul.f32 %v2381, %v2461
        %v2518 = vmul.f32 %v2382, %v2462
        %v2519 = vmul.f32 %v2383, %v2463
        %v2520 = vmul.f32 %v2384, %v2460
        %v2521 = vmul.f32 %v2385, %v2461
        %v2522 = vmul.f32 %v2386, %v2462
        %v2523 = vmul.f32 %v2387, %v2463
        %v2524 = vmul.f32 %v2388, %v2460
        %v2525 = vmul.f32 %v2389, %v2461
        %v2526 = vmul.f32 %v2390, %v2462
        %v2527 = vmul.f32 %v2391, %v2463
        %v2528 = vmul.f32 %v2392, %v2460
        %v2529 = vmul.f32 %v2393, %v2461
        %v2530 = vmul.f32 %v2394, %v2462
        %v2531 = vmul.f32 %v2395, %v2463
        %v2532 = vmul.f32 %v2396, %v2464
        %v2533 = vmul.f32 %v2397, %v2465
        %v2534 = vmul.f32 %v2398, %v2466
        %v2535 = vmul.f32 %v2399, %v2467
        %v2536 = vmul.f32 %v2400, %v2464
        %v2537 = vmul.f32 %v2401, %v2465
        %v2538 = vmul.f32 %v2402, %v2466
        %v2539 = vmul.f32 %v2403, %v2467
        %v2540 = vmul.f32 %v2404, %v2464
        %v2541 = vmul.f32 %v2405, %v2465
        %v2542 = vmul.f32 %v2406, %v2466
        %v2543 = vmul.f32 %v2407, %v2467
        %v2544 = vmul.f32 %v2408, %v2464
        %v2545 = vmul.f32 %v2409, %v2465
        %v2546 = vmul.f32 %v2410, %v2466
        %v2547 = vmul.f32 %v2411, %v2467
        %v2548 = vmul.f32 %v2412, %v2464
        %v2549 = vmul.f32 %v2413, %v2465
        %v2550 = vmul.f32 %v2414, %v2466
        %v2551 = vmul.f32 %v2415, %v2467
        %v2552 = vmul.f32 %v2416, %v2464
        %v2553 = vmul.f32 %v2417, %v2465
        %v2554 = vmul.f32 %v2418, %v2466
        %v2555 = vmul.f32 %v2419, %v2467
        %v2556 = vmul.f32 %v2420, %v2464
        %v2557 = vmul.f32 %v2421, %v2465
        %v2558 = vmul.f32 %v2422, %v2466
        %v2559 = vmul.f32 %v2423, %v2467
        %v2560 = vmul.f32 %v2424, %v2464
        %v2561 = vmul.f32 %v2425, %v2465
        %v2562 = vmul.f32 %v2426, %v2466
        %v2563 = vmul.f32 %v2427, %v2467
        %v2564 = vmul.f32 %v2428, %v2464
        %v2565 = vmul.f32 %v2429, %v2465
        %v2566 = vmul.f32 %v2430, %v2466
        %v2567 = vmul.f32 %v2431, %v2467
        %v2568 = vmul.f32 %v2432, %v2464
        %v2569 = vmul.f32 %v2433, %v2465
        %v2570 = vmul.f32 %v2434, %v2466
        %v2571 = vmul.f32 %v2435, %v2467
        %v2572 = vmul.f32 %v2436, %v2464
        %v2573 = vmul.f32 %v2437, %v2465
        %v2574 = vmul.f32 %v2438, %v2466
        %v2575 = vmul.f32 %v2439, %v2467
        %v2576 = vmul.f32 %v2440, %v2464
        %v2577 = vmul.f32 %v2441, %v2465
        %v2578 = vmul.f32 %v2442, %v2466
        %v2579 = vmul.f32 %v2443, %v2467
        %v2580 = vmul.f32 %v2444, %v2464
        %v2581 = vmul.f32 %v2445, %v2465
        %v2582 = vmul.f32 %v2446, %v2466
        %v2583 = vmul.f32 %v2447, %v2467
        %v2584 = vmul.f32 %v2448, %v2464
        %v2585 = vmul.f32 %v2449, %v2465
        %v2586 = vmul.f32 %v2450, %v2466
        %v2587 = vmul.f32 %v2451, %v2467
        %v2588 = vmul.f32 %v2452, %v2464
        %v2589 = vmul.f32 %v2453, %v2465
        %v2590 = vmul.f32 %v2454, %v2466
        %v2591 = vmul.f32 %v2455, %v2467
        %v2592 = vmul.f32 %v2456, %v2464
        %v2593 = vmul.f32 %v2457, %v2465
        %v2594 = vmul.f32 %v2458, %v2466
        %v2595 = vmul.f32 %v2459, %v2467
        %v2596 = vpack.c.bf16 %v2469, %v2468
        %v2597 = vpack.c.bf16 %v2471, %v2470
        %v2598 = vpack.c.bf16 %v2473, %v2472
        %v2599 = vpack.c.bf16 %v2475, %v2474
        %v2600 = vpack.c.bf16 %v2477, %v2476
        %v2601 = vpack.c.bf16 %v2479, %v2478
        %v2602 = vpack.c.bf16 %v2481, %v2480
        %v2603 = vpack.c.bf16 %v2483, %v2482
        %v2604 = vpack.c.bf16 %v2485, %v2484
        %v2605 = vpack.c.bf16 %v2487, %v2486
        %v2606 = vpack.c.bf16 %v2489, %v2488
        %v2607 = vpack.c.bf16 %v2491, %v2490
        %v2608 = vpack.c.bf16 %v2493, %v2492
        %v2609 = vpack.c.bf16 %v2495, %v2494
        %v2610 = vpack.c.bf16 %v2497, %v2496
        %v2611 = vpack.c.bf16 %v2499, %v2498
        %v2612 = vpack.c.bf16 %v2501, %v2500
        %v2613 = vpack.c.bf16 %v2503, %v2502
        %v2614 = vpack.c.bf16 %v2505, %v2504
        %v2615 = vpack.c.bf16 %v2507, %v2506
        %v2616 = vpack.c.bf16 %v2509, %v2508
        %v2617 = vpack.c.bf16 %v2511, %v2510
        %v2618 = vpack.c.bf16 %v2513, %v2512
        %v2619 = vpack.c.bf16 %v2515, %v2514
        %v2620 = vpack.c.bf16 %v2517, %v2516
        %v2621 = vpack.c.bf16 %v2519, %v2518
        %v2622 = vpack.c.bf16 %v2521, %v2520
        %v2623 = vpack.c.bf16 %v2523, %v2522
        %v2624 = vpack.c.bf16 %v2525, %v2524
        %v2625 = vpack.c.bf16 %v2527, %v2526
        %v2626 = vpack.c.bf16 %v2529, %v2528
        %v2627 = vpack.c.bf16 %v2531, %v2530
        %v2628 = vpack.c.bf16 %v2533, %v2532
        %v2629 = vpack.c.bf16 %v2535, %v2534
        %v2630 = vpack.c.bf16 %v2537, %v2536
        %v2631 = vpack.c.bf16 %v2539, %v2538
        %v2632 = vpack.c.bf16 %v2541, %v2540
        %v2633 = vpack.c.bf16 %v2543, %v2542
        %v2634 = vpack.c.bf16 %v2545, %v2544
        %v2635 = vpack.c.bf16 %v2547, %v2546
        %v2636 = vpack.c.bf16 %v2549, %v2548
        %v2637 = vpack.c.bf16 %v2551, %v2550
        %v2638 = vpack.c.bf16 %v2553, %v2552
        %v2639 = vpack.c.bf16 %v2555, %v2554
        %v2640 = vpack.c.bf16 %v2557, %v2556
        %v2641 = vpack.c.bf16 %v2559, %v2558
        %v2642 = vpack.c.bf16 %v2561, %v2560
        %v2643 = vpack.c.bf16 %v2563, %v2562
        %v2644 = vpack.c.bf16 %v2565, %v2564
        %v2645 = vpack.c.bf16 %v2567, %v2566
        %v2646 = vpack.c.bf16 %v2569, %v2568
        %v2647 = vpack.c.bf16 %v2571, %v2570
        %v2648 = vpack.c.bf16 %v2573, %v2572
        %v2649 = vpack.c.bf16 %v2575, %v2574
        %v2650 = vpack.c.bf16 %v2577, %v2576
        %v2651 = vpack.c.bf16 %v2579, %v2578
        %v2652 = vpack.c.bf16 %v2581, %v2580
        %v2653 = vpack.c.bf16 %v2583, %v2582
        %v2654 = vpack.c.bf16 %v2585, %v2584
        %v2655 = vpack.c.bf16 %v2587, %v2586
        %v2656 = vpack.c.bf16 %v2589, %v2588
        %v2657 = vpack.c.bf16 %v2591, %v2590
        %v2658 = vpack.c.bf16 %v2593, %v2592
        %v2659 = vpack.c.bf16 %v2595, %v2594
        %v2662 = vperm.slane %v2210, 0
        %v2663 = vperm.slane %v2210, 1
        %v2664 = vperm.slane %v2210, 2
        %v2665 = vperm.slane %v2210, 3
        %v2666 = vperm.slane %v2211, 0
        %v2667 = vperm.slane %v2211, 1
        %v2668 = vperm.slane %v2211, 2
        %v2669 = vperm.slane %v2211, 3
        %v2678 = vpack.c.bf16 %v2663, %v2662
        %v2679 = vpack.c.bf16 %v2665, %v2664
        %v2680 = vpack.c.bf16 %v2667, %v2666
        %v2681 = vpack.c.bf16 %v2669, %v2668
        %v2686 = vunpack.c.l.b16 %v2678
        %v2687 = vunpack.c.h.b16 %v2678
        %v2688 = vunpack.c.l.b16 %v2679
        %v2689 = vunpack.c.h.b16 %v2679
        %v2690 = vunpack.c.l.b16 %v2680
        %v2691 = vunpack.c.h.b16 %v2680
        %v2692 = vunpack.c.l.b16 %v2681
        %v2693 = vunpack.c.h.b16 %v2681
        %v2694 = vpack.c.b16 %v2686, %v2686
        %v2695 = vpack.c.b16 %v2687, %v2687
        %v2696 = vpack.c.b16 %v2688, %v2688
        %v2697 = vpack.c.b16 %v2689, %v2689
        %v2698 = vpack.c.b16 %v2690, %v2690
        %v2699 = vpack.c.b16 %v2691, %v2691
        %v2700 = vpack.c.b16 %v2692, %v2692
        %v2701 = vpack.c.b16 %v2693, %v2693
        %v2703 = vpack.i.b16 %v2694, %v2694
        %v2705 = vperm.slane %v2703, 0
        %v2707 = vpack.i.b16 %v2695, %v2695
        %v2709 = vperm.slane %v2707, 0
        %v2711 = vpack.i.b16 %v2696, %v2696
        %v2713 = vperm.slane %v2711, 0
        %v2715 = vpack.i.b16 %v2697, %v2697
        %v2717 = vperm.slane %v2715, 0
        %v2719 = vpack.i.b16 %v2698, %v2698
        %v2721 = vperm.slane %v2719, 0
        %v2723 = vpack.i.b16 %v2699, %v2699
        %v2725 = vperm.slane %v2723, 0
        %v2727 = vpack.i.b16 %v2700, %v2700
        %v2729 = vperm.slane %v2727, 0
        %v2731 = vpack.i.b16 %v2701, %v2701
        %v2733 = vperm.slane %v2731, 0
        %v2734 = vunpack.c.l.bf16 %v2596
        %v2735 = vunpack.c.h.bf16 %v2596
        %v2736 = vunpack.c.l.bf16 %v2597
        %v2737 = vunpack.c.h.bf16 %v2597
        %v2738 = vunpack.c.l.bf16 %v2598
        %v2739 = vunpack.c.h.bf16 %v2598
        %v2740 = vunpack.c.l.bf16 %v2599
        %v2741 = vunpack.c.h.bf16 %v2599
        %v2742 = vunpack.c.l.bf16 %v2600
        %v2743 = vunpack.c.h.bf16 %v2600
        %v2744 = vunpack.c.l.bf16 %v2601
        %v2745 = vunpack.c.h.bf16 %v2601
        %v2746 = vunpack.c.l.bf16 %v2602
        %v2747 = vunpack.c.h.bf16 %v2602
        %v2748 = vunpack.c.l.bf16 %v2603
        %v2749 = vunpack.c.h.bf16 %v2603
        %v2750 = vunpack.c.l.bf16 %v2604
        %v2751 = vunpack.c.h.bf16 %v2604
        %v2752 = vunpack.c.l.bf16 %v2605
        %v2753 = vunpack.c.h.bf16 %v2605
        %v2754 = vunpack.c.l.bf16 %v2606
        %v2755 = vunpack.c.h.bf16 %v2606
        %v2756 = vunpack.c.l.bf16 %v2607
        %v2757 = vunpack.c.h.bf16 %v2607
        %v2758 = vunpack.c.l.bf16 %v2608
        %v2759 = vunpack.c.h.bf16 %v2608
        %v2760 = vunpack.c.l.bf16 %v2609
        %v2761 = vunpack.c.h.bf16 %v2609
        %v2762 = vunpack.c.l.bf16 %v2610
        %v2763 = vunpack.c.h.bf16 %v2610
        %v2764 = vunpack.c.l.bf16 %v2611
        %v2765 = vunpack.c.h.bf16 %v2611
        %v2766 = vunpack.c.l.bf16 %v2612
        %v2767 = vunpack.c.h.bf16 %v2612
        %v2768 = vunpack.c.l.bf16 %v2613
        %v2769 = vunpack.c.h.bf16 %v2613
        %v2770 = vunpack.c.l.bf16 %v2614
        %v2771 = vunpack.c.h.bf16 %v2614
        %v2772 = vunpack.c.l.bf16 %v2615
        %v2773 = vunpack.c.h.bf16 %v2615
        %v2774 = vunpack.c.l.bf16 %v2616
        %v2775 = vunpack.c.h.bf16 %v2616
        %v2776 = vunpack.c.l.bf16 %v2617
        %v2777 = vunpack.c.h.bf16 %v2617
        %v2778 = vunpack.c.l.bf16 %v2618
        %v2779 = vunpack.c.h.bf16 %v2618
        %v2780 = vunpack.c.l.bf16 %v2619
        %v2781 = vunpack.c.h.bf16 %v2619
        %v2782 = vunpack.c.l.bf16 %v2620
        %v2783 = vunpack.c.h.bf16 %v2620
        %v2784 = vunpack.c.l.bf16 %v2621
        %v2785 = vunpack.c.h.bf16 %v2621
        %v2786 = vunpack.c.l.bf16 %v2622
        %v2787 = vunpack.c.h.bf16 %v2622
        %v2788 = vunpack.c.l.bf16 %v2623
        %v2789 = vunpack.c.h.bf16 %v2623
        %v2790 = vunpack.c.l.bf16 %v2624
        %v2791 = vunpack.c.h.bf16 %v2624
        %v2792 = vunpack.c.l.bf16 %v2625
        %v2793 = vunpack.c.h.bf16 %v2625
        %v2794 = vunpack.c.l.bf16 %v2626
        %v2795 = vunpack.c.h.bf16 %v2626
        %v2796 = vunpack.c.l.bf16 %v2627
        %v2797 = vunpack.c.h.bf16 %v2627
        %v2798 = vunpack.c.l.bf16 %v2628
        %v2799 = vunpack.c.h.bf16 %v2628
        %v2800 = vunpack.c.l.bf16 %v2629
        %v2801 = vunpack.c.h.bf16 %v2629
        %v2802 = vunpack.c.l.bf16 %v2630
        %v2803 = vunpack.c.h.bf16 %v2630
        %v2804 = vunpack.c.l.bf16 %v2631
        %v2805 = vunpack.c.h.bf16 %v2631
        %v2806 = vunpack.c.l.bf16 %v2632
        %v2807 = vunpack.c.h.bf16 %v2632
        %v2808 = vunpack.c.l.bf16 %v2633
        %v2809 = vunpack.c.h.bf16 %v2633
        %v2810 = vunpack.c.l.bf16 %v2634
        %v2811 = vunpack.c.h.bf16 %v2634
        %v2812 = vunpack.c.l.bf16 %v2635
        %v2813 = vunpack.c.h.bf16 %v2635
        %v2814 = vunpack.c.l.bf16 %v2636
        %v2815 = vunpack.c.h.bf16 %v2636
        %v2816 = vunpack.c.l.bf16 %v2637
        %v2817 = vunpack.c.h.bf16 %v2637
        %v2818 = vunpack.c.l.bf16 %v2638
        %v2819 = vunpack.c.h.bf16 %v2638
        %v2820 = vunpack.c.l.bf16 %v2639
        %v2821 = vunpack.c.h.bf16 %v2639
        %v2822 = vunpack.c.l.bf16 %v2640
        %v2823 = vunpack.c.h.bf16 %v2640
        %v2824 = vunpack.c.l.bf16 %v2641
        %v2825 = vunpack.c.h.bf16 %v2641
        %v2826 = vunpack.c.l.bf16 %v2642
        %v2827 = vunpack.c.h.bf16 %v2642
        %v2828 = vunpack.c.l.bf16 %v2643
        %v2829 = vunpack.c.h.bf16 %v2643
        %v2830 = vunpack.c.l.bf16 %v2644
        %v2831 = vunpack.c.h.bf16 %v2644
        %v2832 = vunpack.c.l.bf16 %v2645
        %v2833 = vunpack.c.h.bf16 %v2645
        %v2834 = vunpack.c.l.bf16 %v2646
        %v2835 = vunpack.c.h.bf16 %v2646
        %v2836 = vunpack.c.l.bf16 %v2647
        %v2837 = vunpack.c.h.bf16 %v2647
        %v2838 = vunpack.c.l.bf16 %v2648
        %v2839 = vunpack.c.h.bf16 %v2648
        %v2840 = vunpack.c.l.bf16 %v2649
        %v2841 = vunpack.c.h.bf16 %v2649
        %v2842 = vunpack.c.l.bf16 %v2650
        %v2843 = vunpack.c.h.bf16 %v2650
        %v2844 = vunpack.c.l.bf16 %v2651
        %v2845 = vunpack.c.h.bf16 %v2651
        %v2846 = vunpack.c.l.bf16 %v2652
        %v2847 = vunpack.c.h.bf16 %v2652
        %v2848 = vunpack.c.l.bf16 %v2653
        %v2849 = vunpack.c.h.bf16 %v2653
        %v2850 = vunpack.c.l.bf16 %v2654
        %v2851 = vunpack.c.h.bf16 %v2654
        %v2852 = vunpack.c.l.bf16 %v2655
        %v2853 = vunpack.c.h.bf16 %v2655
        %v2854 = vunpack.c.l.bf16 %v2656
        %v2855 = vunpack.c.h.bf16 %v2656
        %v2856 = vunpack.c.l.bf16 %v2657
        %v2857 = vunpack.c.h.bf16 %v2657
        %v2858 = vunpack.c.l.bf16 %v2658
        %v2859 = vunpack.c.h.bf16 %v2658
        %v2860 = vunpack.c.l.bf16 %v2659
        %v2861 = vunpack.c.h.bf16 %v2659
        %v2862 = vunpack.c.l.bf16 %v2705
        %v2863 = vunpack.c.l.bf16 %v2709
        %v2864 = vunpack.c.l.bf16 %v2713
        %v2865 = vunpack.c.l.bf16 %v2717
        %v2866 = vunpack.c.l.bf16 %v2721
        %v2867 = vunpack.c.l.bf16 %v2725
        %v2868 = vunpack.c.l.bf16 %v2729
        %v2869 = vunpack.c.l.bf16 %v2733
        %v2870 = vadd.f32 %v2734, %v2862
        %v2871 = vadd.f32 %v2735, %v2863
        %v2872 = vadd.f32 %v2736, %v2864
        %v2873 = vadd.f32 %v2737, %v2865
        %v2874 = vadd.f32 %v2738, %v2862
        %v2875 = vadd.f32 %v2739, %v2863
        %v2876 = vadd.f32 %v2740, %v2864
        %v2877 = vadd.f32 %v2741, %v2865
        %v2878 = vadd.f32 %v2742, %v2862
        %v2879 = vadd.f32 %v2743, %v2863
        %v2880 = vadd.f32 %v2744, %v2864
        %v2881 = vadd.f32 %v2745, %v2865
        %v2882 = vadd.f32 %v2746, %v2862
        %v2883 = vadd.f32 %v2747, %v2863
        %v2884 = vadd.f32 %v2748, %v2864
        %v2885 = vadd.f32 %v2749, %v2865
        %v2886 = vadd.f32 %v2750, %v2862
        %v2887 = vadd.f32 %v2751, %v2863
        %v2888 = vadd.f32 %v2752, %v2864
        %v2889 = vadd.f32 %v2753, %v2865
        %v2890 = vadd.f32 %v2754, %v2862
        %v2891 = vadd.f32 %v2755, %v2863
        %v2892 = vadd.f32 %v2756, %v2864
        %v2893 = vadd.f32 %v2757, %v2865
        %v2894 = vadd.f32 %v2758, %v2862
        %v2895 = vadd.f32 %v2759, %v2863
        %v2896 = vadd.f32 %v2760, %v2864
        %v2897 = vadd.f32 %v2761, %v2865
        %v2898 = vadd.f32 %v2762, %v2862
        %v2899 = vadd.f32 %v2763, %v2863
        %v2900 = vadd.f32 %v2764, %v2864
        %v2901 = vadd.f32 %v2765, %v2865
        %v2902 = vadd.f32 %v2766, %v2862
        %v2903 = vadd.f32 %v2767, %v2863
        %v2904 = vadd.f32 %v2768, %v2864
        %v2905 = vadd.f32 %v2769, %v2865
        %v2906 = vadd.f32 %v2770, %v2862
        %v2907 = vadd.f32 %v2771, %v2863
        %v2908 = vadd.f32 %v2772, %v2864
        %v2909 = vadd.f32 %v2773, %v2865
        %v2910 = vadd.f32 %v2774, %v2862
        %v2911 = vadd.f32 %v2775, %v2863
        %v2912 = vadd.f32 %v2776, %v2864
        %v2913 = vadd.f32 %v2777, %v2865
        %v2914 = vadd.f32 %v2778, %v2862
        %v2915 = vadd.f32 %v2779, %v2863
        %v2916 = vadd.f32 %v2780, %v2864
        %v2917 = vadd.f32 %v2781, %v2865
        %v2918 = vadd.f32 %v2782, %v2862
        %v2919 = vadd.f32 %v2783, %v2863
        %v2920 = vadd.f32 %v2784, %v2864
        %v2921 = vadd.f32 %v2785, %v2865
        %v2922 = vadd.f32 %v2786, %v2862
        %v2923 = vadd.f32 %v2787, %v2863
        %v2924 = vadd.f32 %v2788, %v2864
        %v2925 = vadd.f32 %v2789, %v2865
        %v2926 = vadd.f32 %v2790, %v2862
        %v2927 = vadd.f32 %v2791, %v2863
        %v2928 = vadd.f32 %v2792, %v2864
        %v2929 = vadd.f32 %v2793, %v2865
        %v2930 = vadd.f32 %v2794, %v2862
        %v2931 = vadd.f32 %v2795, %v2863
        %v2932 = vadd.f32 %v2796, %v2864
        %v2933 = vadd.f32 %v2797, %v2865
        %v2934 = vadd.f32 %v2798, %v2866
        %v2935 = vadd.f32 %v2799, %v2867
        %v2936 = vadd.f32 %v2800, %v2868
        %v2937 = vadd.f32 %v2801, %v2869
        %v2938 = vadd.f32 %v2802, %v2866
        %v2939 = vadd.f32 %v2803, %v2867
        %v2940 = vadd.f32 %v2804, %v2868
        %v2941 = vadd.f32 %v2805, %v2869
        %v2942 = vadd.f32 %v2806, %v2866
        %v2943 = vadd.f32 %v2807, %v2867
        %v2944 = vadd.f32 %v2808, %v2868
        %v2945 = vadd.f32 %v2809, %v2869
        %v2946 = vadd.f32 %v2810, %v2866
        %v2947 = vadd.f32 %v2811, %v2867
        %v2948 = vadd.f32 %v2812, %v2868
        %v2949 = vadd.f32 %v2813, %v2869
        %v2950 = vadd.f32 %v2814, %v2866
        %v2951 = vadd.f32 %v2815, %v2867
        %v2952 = vadd.f32 %v2816, %v2868
        %v2953 = vadd.f32 %v2817, %v2869
        %v2954 = vadd.f32 %v2818, %v2866
        %v2955 = vadd.f32 %v2819, %v2867
        %v2956 = vadd.f32 %v2820, %v2868
        %v2957 = vadd.f32 %v2821, %v2869
        %v2958 = vadd.f32 %v2822, %v2866
        %v2959 = vadd.f32 %v2823, %v2867
        %v2960 = vadd.f32 %v2824, %v2868
        %v2961 = vadd.f32 %v2825, %v2869
        %v2962 = vadd.f32 %v2826, %v2866
        %v2963 = vadd.f32 %v2827, %v2867
        %v2964 = vadd.f32 %v2828, %v2868
        %v2965 = vadd.f32 %v2829, %v2869
        %v2966 = vadd.f32 %v2830, %v2866
        %v2967 = vadd.f32 %v2831, %v2867
        %v2968 = vadd.f32 %v2832, %v2868
        %v2969 = vadd.f32 %v2833, %v2869
        %v2970 = vadd.f32 %v2834, %v2866
        %v2971 = vadd.f32 %v2835, %v2867
        %v2972 = vadd.f32 %v2836, %v2868
        %v2973 = vadd.f32 %v2837, %v2869
        %v2974 = vadd.f32 %v2838, %v2866
        %v2975 = vadd.f32 %v2839, %v2867
        %v2976 = vadd.f32 %v2840, %v2868
        %v2977 = vadd.f32 %v2841, %v2869
        %v2978 = vadd.f32 %v2842, %v2866
        %v2979 = vadd.f32 %v2843, %v2867
        %v2980 = vadd.f32 %v2844, %v2868
        %v2981 = vadd.f32 %v2845, %v2869
        %v2982 = vadd.f32 %v2846, %v2866
        %v2983 = vadd.f32 %v2847, %v2867
        %v2984 = vadd.f32 %v2848, %v2868
        %v2985 = vadd.f32 %v2849, %v2869
        %v2986 = vadd.f32 %v2850, %v2866
        %v2987 = vadd.f32 %v2851, %v2867
        %v2988 = vadd.f32 %v2852, %v2868
        %v2989 = vadd.f32 %v2853, %v2869
        %v2990 = vadd.f32 %v2854, %v2866
        %v2991 = vadd.f32 %v2855, %v2867
        %v2992 = vadd.f32 %v2856, %v2868
        %v2993 = vadd.f32 %v2857, %v2869
        %v2994 = vadd.f32 %v2858, %v2866
        %v2995 = vadd.f32 %v2859, %v2867
        %v2996 = vadd.f32 %v2860, %v2868
        %v2997 = vadd.f32 %v2861, %v2869
        %v2998 = vpack.c.bf16 %v2871, %v2870
        %v2999 = vpack.c.bf16 %v2873, %v2872
        %v3000 = vpack.c.bf16 %v2875, %v2874
        %v3001 = vpack.c.bf16 %v2877, %v2876
        %v3002 = vpack.c.bf16 %v2879, %v2878
        %v3003 = vpack.c.bf16 %v2881, %v2880
        %v3004 = vpack.c.bf16 %v2883, %v2882
        %v3005 = vpack.c.bf16 %v2885, %v2884
        %v3006 = vpack.c.bf16 %v2887, %v2886
        %v3007 = vpack.c.bf16 %v2889, %v2888
        %v3008 = vpack.c.bf16 %v2891, %v2890
        %v3009 = vpack.c.bf16 %v2893, %v2892
        %v3010 = vpack.c.bf16 %v2895, %v2894
        %v3011 = vpack.c.bf16 %v2897, %v2896
        %v3012 = vpack.c.bf16 %v2899, %v2898
        %v3013 = vpack.c.bf16 %v2901, %v2900
        %v3014 = vpack.c.bf16 %v2903, %v2902
        %v3015 = vpack.c.bf16 %v2905, %v2904
        %v3016 = vpack.c.bf16 %v2907, %v2906
        %v3017 = vpack.c.bf16 %v2909, %v2908
        %v3018 = vpack.c.bf16 %v2911, %v2910
        %v3019 = vpack.c.bf16 %v2913, %v2912
        %v3020 = vpack.c.bf16 %v2915, %v2914
        %v3021 = vpack.c.bf16 %v2917, %v2916
        %v3022 = vpack.c.bf16 %v2919, %v2918
        %v3023 = vpack.c.bf16 %v2921, %v2920
        %v3024 = vpack.c.bf16 %v2923, %v2922
        %v3025 = vpack.c.bf16 %v2925, %v2924
        %v3026 = vpack.c.bf16 %v2927, %v2926
        %v3027 = vpack.c.bf16 %v2929, %v2928
        %v3028 = vpack.c.bf16 %v2931, %v2930
        %v3029 = vpack.c.bf16 %v2933, %v2932
        %v3030 = vpack.c.bf16 %v2935, %v2934
        %v3031 = vpack.c.bf16 %v2937, %v2936
        %v3032 = vpack.c.bf16 %v2939, %v2938
        %v3033 = vpack.c.bf16 %v2941, %v2940
        %v3034 = vpack.c.bf16 %v2943, %v2942
        %v3035 = vpack.c.bf16 %v2945, %v2944
        %v3036 = vpack.c.bf16 %v2947, %v2946
        %v3037 = vpack.c.bf16 %v2949, %v2948
        %v3038 = vpack.c.bf16 %v2951, %v2950
        %v3039 = vpack.c.bf16 %v2953, %v2952
        %v3040 = vpack.c.bf16 %v2955, %v2954
        %v3041 = vpack.c.bf16 %v2957, %v2956
        %v3042 = vpack.c.bf16 %v2959, %v2958
        %v3043 = vpack.c.bf16 %v2961, %v2960
        %v3044 = vpack.c.bf16 %v2963, %v2962
        %v3045 = vpack.c.bf16 %v2965, %v2964
        %v3046 = vpack.c.bf16 %v2967, %v2966
        %v3047 = vpack.c.bf16 %v2969, %v2968
        %v3048 = vpack.c.bf16 %v2971, %v2970
        %v3049 = vpack.c.bf16 %v2973, %v2972
        %v3050 = vpack.c.bf16 %v2975, %v2974
        %v3051 = vpack.c.bf16 %v2977, %v2976
        %v3052 = vpack.c.bf16 %v2979, %v2978
        %v3053 = vpack.c.bf16 %v2981, %v2980
        %v3054 = vpack.c.bf16 %v2983, %v2982
        %v3055 = vpack.c.bf16 %v2985, %v2984
        %v3056 = vpack.c.bf16 %v2987, %v2986
        %v3057 = vpack.c.bf16 %v2989, %v2988
        %v3058 = vpack.c.bf16 %v2991, %v2990
        %v3059 = vpack.c.bf16 %v2993, %v2992
        %v3060 = vpack.c.bf16 %v2995, %v2994
        %v3061 = vpack.c.bf16 %v2997, %v2996
        %v3062 = vunpack.c.l.bf16 %v2998
        %v3063 = vunpack.c.h.bf16 %v2998
        %v3064 = vunpack.c.l.bf16 %v2999
        %v3065 = vunpack.c.h.bf16 %v2999
        %v3066 = vunpack.c.l.bf16 %v3000
        %v3067 = vunpack.c.h.bf16 %v3000
        %v3068 = vunpack.c.l.bf16 %v3001
        %v3069 = vunpack.c.h.bf16 %v3001
        %v3070 = vunpack.c.l.bf16 %v3002
        %v3071 = vunpack.c.h.bf16 %v3002
        %v3072 = vunpack.c.l.bf16 %v3003
        %v3073 = vunpack.c.h.bf16 %v3003
        %v3074 = vunpack.c.l.bf16 %v3004
        %v3075 = vunpack.c.h.bf16 %v3004
        %v3076 = vunpack.c.l.bf16 %v3005
        %v3077 = vunpack.c.h.bf16 %v3005
        %v3078 = vunpack.c.l.bf16 %v3006
        %v3079 = vunpack.c.h.bf16 %v3006
        %v3080 = vunpack.c.l.bf16 %v3007
        %v3081 = vunpack.c.h.bf16 %v3007
        %v3082 = vunpack.c.l.bf16 %v3008
        %v3083 = vunpack.c.h.bf16 %v3008
        %v3084 = vunpack.c.l.bf16 %v3009
        %v3085 = vunpack.c.h.bf16 %v3009
        %v3086 = vunpack.c.l.bf16 %v3010
        %v3087 = vunpack.c.h.bf16 %v3010
        %v3088 = vunpack.c.l.bf16 %v3011
        %v3089 = vunpack.c.h.bf16 %v3011
        %v3090 = vunpack.c.l.bf16 %v3012
        %v3091 = vunpack.c.h.bf16 %v3012
        %v3092 = vunpack.c.l.bf16 %v3013
        %v3093 = vunpack.c.h.bf16 %v3013
        %v3094 = vunpack.c.l.bf16 %v3014
        %v3095 = vunpack.c.h.bf16 %v3014
        %v3096 = vunpack.c.l.bf16 %v3015
        %v3097 = vunpack.c.h.bf16 %v3015
        %v3098 = vunpack.c.l.bf16 %v3016
        %v3099 = vunpack.c.h.bf16 %v3016
        %v3100 = vunpack.c.l.bf16 %v3017
        %v3101 = vunpack.c.h.bf16 %v3017
        %v3102 = vunpack.c.l.bf16 %v3018
        %v3103 = vunpack.c.h.bf16 %v3018
        %v3104 = vunpack.c.l.bf16 %v3019
        %v3105 = vunpack.c.h.bf16 %v3019
        %v3106 = vunpack.c.l.bf16 %v3020
        %v3107 = vunpack.c.h.bf16 %v3020
        %v3108 = vunpack.c.l.bf16 %v3021
        %v3109 = vunpack.c.h.bf16 %v3021
        %v3110 = vunpack.c.l.bf16 %v3022
        %v3111 = vunpack.c.h.bf16 %v3022
        %v3112 = vunpack.c.l.bf16 %v3023
        %v3113 = vunpack.c.h.bf16 %v3023
        %v3114 = vunpack.c.l.bf16 %v3024
        %v3115 = vunpack.c.h.bf16 %v3024
        %v3116 = vunpack.c.l.bf16 %v3025
        %v3117 = vunpack.c.h.bf16 %v3025
        %v3118 = vunpack.c.l.bf16 %v3026
        %v3119 = vunpack.c.h.bf16 %v3026
        %v3120 = vunpack.c.l.bf16 %v3027
        %v3121 = vunpack.c.h.bf16 %v3027
        %v3122 = vunpack.c.l.bf16 %v3028
        %v3123 = vunpack.c.h.bf16 %v3028
        %v3124 = vunpack.c.l.bf16 %v3029
        %v3125 = vunpack.c.h.bf16 %v3029
        %v3126 = vunpack.c.l.bf16 %v3030
        %v3127 = vunpack.c.h.bf16 %v3030
        %v3128 = vunpack.c.l.bf16 %v3031
        %v3129 = vunpack.c.h.bf16 %v3031
        %v3130 = vunpack.c.l.bf16 %v3032
        %v3131 = vunpack.c.h.bf16 %v3032
        %v3132 = vunpack.c.l.bf16 %v3033
        %v3133 = vunpack.c.h.bf16 %v3033
        %v3134 = vunpack.c.l.bf16 %v3034
        %v3135 = vunpack.c.h.bf16 %v3034
        %v3136 = vunpack.c.l.bf16 %v3035
        %v3137 = vunpack.c.h.bf16 %v3035
        %v3138 = vunpack.c.l.bf16 %v3036
        %v3139 = vunpack.c.h.bf16 %v3036
        %v3140 = vunpack.c.l.bf16 %v3037
        %v3141 = vunpack.c.h.bf16 %v3037
        %v3142 = vunpack.c.l.bf16 %v3038
        %v3143 = vunpack.c.h.bf16 %v3038
        %v3144 = vunpack.c.l.bf16 %v3039
        %v3145 = vunpack.c.h.bf16 %v3039
        %v3146 = vunpack.c.l.bf16 %v3040
        %v3147 = vunpack.c.h.bf16 %v3040
        %v3148 = vunpack.c.l.bf16 %v3041
        %v3149 = vunpack.c.h.bf16 %v3041
        %v3150 = vunpack.c.l.bf16 %v3042
        %v3151 = vunpack.c.h.bf16 %v3042
        %v3152 = vunpack.c.l.bf16 %v3043
        %v3153 = vunpack.c.h.bf16 %v3043
        %v3154 = vunpack.c.l.bf16 %v3044
        %v3155 = vunpack.c.h.bf16 %v3044
        %v3156 = vunpack.c.l.bf16 %v3045
        %v3157 = vunpack.c.h.bf16 %v3045
        %v3158 = vunpack.c.l.bf16 %v3046
        %v3159 = vunpack.c.h.bf16 %v3046
        %v3160 = vunpack.c.l.bf16 %v3047
        %v3161 = vunpack.c.h.bf16 %v3047
        %v3162 = vunpack.c.l.bf16 %v3048
        %v3163 = vunpack.c.h.bf16 %v3048
        %v3164 = vunpack.c.l.bf16 %v3049
        %v3165 = vunpack.c.h.bf16 %v3049
        %v3166 = vunpack.c.l.bf16 %v3050
        %v3167 = vunpack.c.h.bf16 %v3050
        %v3168 = vunpack.c.l.bf16 %v3051
        %v3169 = vunpack.c.h.bf16 %v3051
        %v3170 = vunpack.c.l.bf16 %v3052
        %v3171 = vunpack.c.h.bf16 %v3052
        %v3172 = vunpack.c.l.bf16 %v3053
        %v3173 = vunpack.c.h.bf16 %v3053
        %v3174 = vunpack.c.l.bf16 %v3054
        %v3175 = vunpack.c.h.bf16 %v3054
        %v3176 = vunpack.c.l.bf16 %v3055
        %v3177 = vunpack.c.h.bf16 %v3055
        %v3178 = vunpack.c.l.bf16 %v3056
        %v3179 = vunpack.c.h.bf16 %v3056
        %v3180 = vunpack.c.l.bf16 %v3057
        %v3181 = vunpack.c.h.bf16 %v3057
        %v3182 = vunpack.c.l.bf16 %v3058
        %v3183 = vunpack.c.h.bf16 %v3058
        %v3184 = vunpack.c.l.bf16 %v3059
        %v3185 = vunpack.c.h.bf16 %v3059
        %v3186 = vunpack.c.l.bf16 %v3060
        %v3187 = vunpack.c.h.bf16 %v3060
        %v3188 = vunpack.c.l.bf16 %v3061
        %v3189 = vunpack.c.h.bf16 %v3061
        %v3190 = vmax.f32 %v3062, 0.0
        %v3191 = vmax.f32 %v3063, 0.0
        %v3192 = vmax.f32 %v3064, 0.0
        %v3193 = vmax.f32 %v3065, 0.0
        %v3194 = vmax.f32 %v3066, 0.0
        %v3195 = vmax.f32 %v3067, 0.0
        %v3196 = vmax.f32 %v3068, 0.0
        %v3197 = vmax.f32 %v3069, 0.0
        %v3198 = vmax.f32 %v3070, 0.0
        %v3199 = vmax.f32 %v3071, 0.0
        %v3200 = vmax.f32 %v3072, 0.0
        %v3201 = vmax.f32 %v3073, 0.0
        %v3202 = vmax.f32 %v3074, 0.0
        %v3203 = vmax.f32 %v3075, 0.0
        %v3204 = vmax.f32 %v3076, 0.0
        %v3205 = vmax.f32 %v3077, 0.0
        %v3206 = vmax.f32 %v3078, 0.0
        %v3207 = vmax.f32 %v3079, 0.0
        %v3208 = vmax.f32 %v3080, 0.0
        %v3209 = vmax.f32 %v3081, 0.0
        %v3210 = vmax.f32 %v3082, 0.0
        %v3211 = vmax.f32 %v3083, 0.0
        %v3212 = vmax.f32 %v3084, 0.0
        %v3213 = vmax.f32 %v3085, 0.0
        %v3214 = vmax.f32 %v3086, 0.0
        %v3215 = vmax.f32 %v3087, 0.0
        %v3216 = vmax.f32 %v3088, 0.0
        %v3217 = vmax.f32 %v3089, 0.0
        %v3218 = vmax.f32 %v3090, 0.0
        %v3219 = vmax.f32 %v3091, 0.0
        %v3220 = vmax.f32 %v3092, 0.0
        %v3221 = vmax.f32 %v3093, 0.0
        %v3222 = vmax.f32 %v3094, 0.0
        %v3223 = vmax.f32 %v3095, 0.0
        %v3224 = vmax.f32 %v3096, 0.0
        %v3225 = vmax.f32 %v3097, 0.0
        %v3226 = vmax.f32 %v3098, 0.0
        %v3227 = vmax.f32 %v3099, 0.0
        %v3228 = vmax.f32 %v3100, 0.0
        %v3229 = vmax.f32 %v3101, 0.0
        %v3230 = vmax.f32 %v3102, 0.0
        %v3231 = vmax.f32 %v3103, 0.0
        %v3232 = vmax.f32 %v3104, 0.0
        %v3233 = vmax.f32 %v3105, 0.0
        %v3234 = vmax.f32 %v3106, 0.0
        %v3235 = vmax.f32 %v3107, 0.0
        %v3236 = vmax.f32 %v3108, 0.0
        %v3237 = vmax.f32 %v3109, 0.0
        %v3238 = vmax.f32 %v3110, 0.0
        %v3239 = vmax.f32 %v3111, 0.0
        %v3240 = vmax.f32 %v3112, 0.0
        %v3241 = vmax.f32 %v3113, 0.0
        %v3242 = vmax.f32 %v3114, 0.0
        %v3243 = vmax.f32 %v3115, 0.0
        %v3244 = vmax.f32 %v3116, 0.0
        %v3245 = vmax.f32 %v3117, 0.0
        %v3246 = vmax.f32 %v3118, 0.0
        %v3247 = vmax.f32 %v3119, 0.0
        %v3248 = vmax.f32 %v3120, 0.0
        %v3249 = vmax.f32 %v3121, 0.0
        %v3250 = vmax.f32 %v3122, 0.0
        %v3251 = vmax.f32 %v3123, 0.0
        %v3252 = vmax.f32 %v3124, 0.0
        %v3253 = vmax.f32 %v3125, 0.0
        %v3254 = vmax.f32 %v3126, 0.0
        %v3255 = vmax.f32 %v3127, 0.0
        %v3256 = vmax.f32 %v3128, 0.0
        %v3257 = vmax.f32 %v3129, 0.0
        %v3258 = vmax.f32 %v3130, 0.0
        %v3259 = vmax.f32 %v3131, 0.0
        %v3260 = vmax.f32 %v3132, 0.0
        %v3261 = vmax.f32 %v3133, 0.0
        %v3262 = vmax.f32 %v3134, 0.0
        %v3263 = vmax.f32 %v3135, 0.0
        %v3264 = vmax.f32 %v3136, 0.0
        %v3265 = vmax.f32 %v3137, 0.0
        %v3266 = vmax.f32 %v3138, 0.0
        %v3267 = vmax.f32 %v3139, 0.0
        %v3268 = vmax.f32 %v3140, 0.0
        %v3269 = vmax.f32 %v3141, 0.0
        %v3270 = vmax.f32 %v3142, 0.0
        %v3271 = vmax.f32 %v3143, 0.0
        %v3272 = vmax.f32 %v3144, 0.0
        %v3273 = vmax.f32 %v3145, 0.0
        %v3274 = vmax.f32 %v3146, 0.0
        %v3275 = vmax.f32 %v3147, 0.0
        %v3276 = vmax.f32 %v3148, 0.0
        %v3277 = vmax.f32 %v3149, 0.0
        %v3278 = vmax.f32 %v3150, 0.0
        %v3279 = vmax.f32 %v3151, 0.0
        %v3280 = vmax.f32 %v3152, 0.0
        %v3281 = vmax.f32 %v3153, 0.0
        %v3282 = vmax.f32 %v3154, 0.0
        %v3283 = vmax.f32 %v3155, 0.0
        %v3284 = vmax.f32 %v3156, 0.0
        %v3285 = vmax.f32 %v3157, 0.0
        %v3286 = vmax.f32 %v3158, 0.0
        %v3287 = vmax.f32 %v3159, 0.0
        %v3288 = vmax.f32 %v3160, 0.0
        %v3289 = vmax.f32 %v3161, 0.0
        %v3290 = vmax.f32 %v3162, 0.0
        %v3291 = vmax.f32 %v3163, 0.0
        %v3292 = vmax.f32 %v3164, 0.0
        %v3293 = vmax.f32 %v3165, 0.0
        %v3294 = vmax.f32 %v3166, 0.0
        %v3295 = vmax.f32 %v3167, 0.0
        %v3296 = vmax.f32 %v3168, 0.0
        %v3297 = vmax.f32 %v3169, 0.0
        %v3298 = vmax.f32 %v3170, 0.0
        %v3299 = vmax.f32 %v3171, 0.0
        %v3300 = vmax.f32 %v3172, 0.0
        %v3301 = vmax.f32 %v3173, 0.0
        %v3302 = vmax.f32 %v3174, 0.0
        %v3303 = vmax.f32 %v3175, 0.0
        %v3304 = vmax.f32 %v3176, 0.0
        %v3305 = vmax.f32 %v3177, 0.0
        %v3306 = vmax.f32 %v3178, 0.0
        %v3307 = vmax.f32 %v3179, 0.0
        %v3308 = vmax.f32 %v3180, 0.0
        %v3309 = vmax.f32 %v3181, 0.0
        %v3310 = vmax.f32 %v3182, 0.0
        %v3311 = vmax.f32 %v3183, 0.0
        %v3312 = vmax.f32 %v3184, 0.0
        %v3313 = vmax.f32 %v3185, 0.0
        %v3314 = vmax.f32 %v3186, 0.0
        %v3315 = vmax.f32 %v3187, 0.0
        %v3316 = vmax.f32 %v3188, 0.0
        %v3317 = vmax.f32 %v3189, 0.0
        %v3318 = vpack.c.bf16 %v3191, %v3190
        %v3319 = vpack.c.bf16 %v3193, %v3192
        %v3320 = vpack.c.bf16 %v3195, %v3194
        %v3321 = vpack.c.bf16 %v3197, %v3196
        %v3322 = vpack.c.bf16 %v3199, %v3198
        %v3323 = vpack.c.bf16 %v3201, %v3200
        %v3324 = vpack.c.bf16 %v3203, %v3202
        %v3325 = vpack.c.bf16 %v3205, %v3204
        %v3326 = vpack.c.bf16 %v3207, %v3206
        %v3327 = vpack.c.bf16 %v3209, %v3208
        %v3328 = vpack.c.bf16 %v3211, %v3210
        %v3329 = vpack.c.bf16 %v3213, %v3212
        %v3330 = vpack.c.bf16 %v3215, %v3214
        %v3331 = vpack.c.bf16 %v3217, %v3216
        %v3332 = vpack.c.bf16 %v3219, %v3218
        %v3333 = vpack.c.bf16 %v3221, %v3220
        %v3334 = vpack.c.bf16 %v3223, %v3222
        %v3335 = vpack.c.bf16 %v3225, %v3224
        %v3336 = vpack.c.bf16 %v3227, %v3226
        %v3337 = vpack.c.bf16 %v3229, %v3228
        %v3338 = vpack.c.bf16 %v3231, %v3230
        %v3339 = vpack.c.bf16 %v3233, %v3232
        %v3340 = vpack.c.bf16 %v3235, %v3234
        %v3341 = vpack.c.bf16 %v3237, %v3236
        %v3342 = vpack.c.bf16 %v3239, %v3238
        %v3343 = vpack.c.bf16 %v3241, %v3240
        %v3344 = vpack.c.bf16 %v3243, %v3242
        %v3345 = vpack.c.bf16 %v3245, %v3244
        %v3346 = vpack.c.bf16 %v3247, %v3246
        %v3347 = vpack.c.bf16 %v3249, %v3248
        %v3348 = vpack.c.bf16 %v3251, %v3250
        %v3349 = vpack.c.bf16 %v3253, %v3252
        %v3350 = vpack.c.bf16 %v3255, %v3254
        %v3351 = vpack.c.bf16 %v3257, %v3256
        %v3352 = vpack.c.bf16 %v3259, %v3258
        %v3353 = vpack.c.bf16 %v3261, %v3260
        %v3354 = vpack.c.bf16 %v3263, %v3262
        %v3355 = vpack.c.bf16 %v3265, %v3264
        %v3356 = vpack.c.bf16 %v3267, %v3266
        %v3357 = vpack.c.bf16 %v3269, %v3268
        %v3358 = vpack.c.bf16 %v3271, %v3270
        %v3359 = vpack.c.bf16 %v3273, %v3272
        %v3360 = vpack.c.bf16 %v3275, %v3274
        %v3361 = vpack.c.bf16 %v3277, %v3276
        %v3362 = vpack.c.bf16 %v3279, %v3278
        %v3363 = vpack.c.bf16 %v3281, %v3280
        %v3364 = vpack.c.bf16 %v3283, %v3282
        %v3365 = vpack.c.bf16 %v3285, %v3284
        %v3366 = vpack.c.bf16 %v3287, %v3286
        %v3367 = vpack.c.bf16 %v3289, %v3288
        %v3368 = vpack.c.bf16 %v3291, %v3290
        %v3369 = vpack.c.bf16 %v3293, %v3292
        %v3370 = vpack.c.bf16 %v3295, %v3294
        %v3371 = vpack.c.bf16 %v3297, %v3296
        %v3372 = vpack.c.bf16 %v3299, %v3298
        %v3373 = vpack.c.bf16 %v3301, %v3300
        %v3374 = vpack.c.bf16 %v3303, %v3302
        %v3375 = vpack.c.bf16 %v3305, %v3304
        %v3376 = vpack.c.bf16 %v3307, %v3306
        %v3377 = vpack.c.bf16 %v3309, %v3308
        %v3378 = vpack.c.bf16 %v3311, %v3310
        %v3379 = vpack.c.bf16 %v3313, %v3312
        %v3380 = vpack.c.bf16 %v3315, %v3314
        %v3381 = vpack.c.bf16 %v3317, %v3316
        %v3382 = vld [vmem:[%s7] sm:$0xff]
        %v3383 = vld [vmem:[%s7 + $0x8] sm:$0xf]
        %v3384 = vld [vmem:[%s7 + $0xc] sm:$0xff]
        %v3385 = vld [vmem:[%s7 + $0x14] sm:$0xf]
        %v3386 = vld [vmem:[%s7 + $0x18] sm:$0xff]
        %v3387 = vld [vmem:[%s7 + $0x20] sm:$0xf]
        %v3388 = vld [vmem:[%s7 + $0x24] sm:$0xff]
        %v3389 = vld [vmem:[%s7 + $0x2c] sm:$0xf]
        %v3390 = vld [vmem:[%s7 + $0x30] sm:$0xff]
        %v3391 = vld [vmem:[%s7 + $0x38] sm:$0xf]
        %v3392 = vld [vmem:[%s7 + $0x3c] sm:$0xff]
        %v3393 = vld [vmem:[%s7 + $0x44] sm:$0xf]
        %v3394 = vld [vmem:[%s7 + $0x48] sm:$0xff]
        %v3395 = vld [vmem:[%s7 + $0x50] sm:$0xf]
        %v3396 = vld [vmem:[%s7 + $0x54] sm:$0xff]
        %v3397 = vld [vmem:[%s7 + $0x5c] sm:$0xf]
        %v3398 = vld [vmem:[%s7 + $0x60] sm:$0xff]
        %v3399 = vld [vmem:[%s7 + $0x68] sm:$0xf]
        %v3400 = vld [vmem:[%s7 + $0x6c] sm:$0xff]
        %v3401 = vld [vmem:[%s7 + $0x74] sm:$0xf]
        %v3402 = vld [vmem:[%s7 + $0x78] sm:$0xff]
        %v3403 = vld [vmem:[%s7 + $0x80] sm:$0xf]
        %v3404 = vld [vmem:[%s7 + $0x84] sm:$0xff]
        %v3405 = vld [vmem:[%s7 + $0x8c] sm:$0xf]
        %v3406 = vld [vmem:[%s7 + $0x90] sm:$0xff]
        %v3407 = vld [vmem:[%s7 + $0x98] sm:$0xf]
        %v3408 = vld [vmem:[%s7 + $0x9c] sm:$0xff]
        %v3409 = vld [vmem:[%s7 + $0xa4] sm:$0xf]
        %v3410 = vld [vmem:[%s7 + $0xa8] sm:$0xff]
        %v3411 = vld [vmem:[%s7 + $0xb0] sm:$0xf]
        %v3412 = vld [vmem:[%s7 + $0xb4] sm:$0xff]
        %v3413 = vld [vmem:[%s7 + $0xbc] sm:$0xf]
        %v3414 = vld [vmem:[%s7 + $0xc0] sm:$0xff]
        %v3415 = vld [vmem:[%s7 + $0xc8] sm:$0xf]
        %v3416 = vld [vmem:[%s7 + $0xcc] sm:$0xff]
        %v3417 = vld [vmem:[%s7 + $0xd4] sm:$0xf]
        %v3418 = vld [vmem:[%s7 + $0xd8] sm:$0xff]
        %v3419 = vld [vmem:[%s7 + $0xe0] sm:$0xf]
        %v3420 = vld [vmem:[%s7 + $0xe4] sm:$0xff]
        %v3421 = vld [vmem:[%s7 + $0xec] sm:$0xf]
        %v3422 = vld [vmem:[%s7 + $0xf0] sm:$0xff]
        %v3423 = vld [vmem:[%s7 + $0xf8] sm:$0xf]
        %v3424 = vld [vmem:[%s7 + $0xfc] sm:$0xff]
        %v3425 = vld [vmem:[%s7 + $0x104] sm:$0xf]
        %v3426 = vld [vmem:[%s7 + $0x108] sm:$0xff]
        %v3427 = vld [vmem:[%s7 + $0x110] sm:$0xf]
        %v3428 = vld [vmem:[%s7 + $0x114] sm:$0xff]
        %v3429 = vld [vmem:[%s7 + $0x11c] sm:$0xf]
        %v3430 = vld [vmem:[%s7 + $0x120] sm:$0xff]
        %v3431 = vld [vmem:[%s7 + $0x128] sm:$0xf]
        %v3432 = vld [vmem:[%s7 + $0x12c] sm:$0xff]
        %v3433 = vld [vmem:[%s7 + $0x134] sm:$0xf]
        %v3434 = vld [vmem:[%s7 + $0x138] sm:$0xff]
        %v3435 = vld [vmem:[%s7 + $0x140] sm:$0xf]
        %v3436 = vld [vmem:[%s7 + $0x144] sm:$0xff]
        %v3437 = vld [vmem:[%s7 + $0x14c] sm:$0xf]
        %v3438 = vld [vmem:[%s7 + $0x150] sm:$0xff]
        %v3439 = vld [vmem:[%s7 + $0x158] sm:$0xf]
        %v3440 = vld [vmem:[%s7 + $0x15c] sm:$0xff]
        %v3441 = vld [vmem:[%s7 + $0x164] sm:$0xf]
        %v3442 = vld [vmem:[%s7 + $0x168] sm:$0xff]
        %v3443 = vld [vmem:[%s7 + $0x170] sm:$0xf]
        %v3444 = vld [vmem:[%s7 + $0x174] sm:$0xff]
        %v3445 = vld [vmem:[%s7 + $0x17c] sm:$0xf]
        %v3446 = vld [vmem:[%s7 + $0x180] sm:$0xff]
        %v3447 = vld [vmem:[%s7 + $0x188] sm:$0xf]
        %v3448 = vld [vmem:[%s7 + $0x18c] sm:$0xff]
        %v3449 = vld [vmem:[%s7 + $0x194] sm:$0xf]
        %v3450 = vld [vmem:[%s7 + $0x198] sm:$0xff]
        %v3451 = vld [vmem:[%s7 + $0x1a0] sm:$0xf]
        %v3452 = vld [vmem:[%s7 + $0x1a4] sm:$0xff]
        %v3453 = vld [vmem:[%s7 + $0x1ac] sm:$0xf]
        %v3454 = vld [vmem:[%s7 + $0x1b0] sm:$0xff]
        %v3455 = vld [vmem:[%s7 + $0x1b8] sm:$0xf]
        %v3456 = vld [vmem:[%s7 + $0x1bc] sm:$0xff]
        %v3457 = vld [vmem:[%s7 + $0x1c4] sm:$0xf]
        %v3458 = vld [vmem:[%s7 + $0x1c8] sm:$0xff]
        %v3459 = vld [vmem:[%s7 + $0x1d0] sm:$0xf]
        %v3460 = vld [vmem:[%s7 + $0x1d4] sm:$0xff]
        %v3461 = vld [vmem:[%s7 + $0x1dc] sm:$0xf]
        %v3462 = vld [vmem:[%s7 + $0x1e0] sm:$0xff]
        %v3463 = vld [vmem:[%s7 + $0x1e8] sm:$0xf]
        %v3464 = vld [vmem:[%s7 + $0x1ec] sm:$0xff]
        %v3465 = vld [vmem:[%s7 + $0x1f4] sm:$0xf]
        %v3466 = vld [vmem:[%s7 + $0x1f8] sm:$0xff]
        %v3467 = vld [vmem:[%s7 + $0x200] sm:$0xf]
        %v3468 = vld [vmem:[%s7 + $0x204] sm:$0xff]
        %v3469 = vld [vmem:[%s7 + $0x20c] sm:$0xf]
        %v3470 = vld [vmem:[%s7 + $0x210] sm:$0xff]
        %v3471 = vld [vmem:[%s7 + $0x218] sm:$0xf]
        %v3472 = vld [vmem:[%s7 + $0x21c] sm:$0xff]
        %v3473 = vld [vmem:[%s7 + $0x224] sm:$0xf]
        %v3474 = vld [vmem:[%s7 + $0x228] sm:$0xff]
        %v3475 = vld [vmem:[%s7 + $0x230] sm:$0xf]
        %v3476 = vld [vmem:[%s7 + $0x234] sm:$0xff]
        %v3477 = vld [vmem:[%s7 + $0x23c] sm:$0xf]
        %v3478 = vld [vmem:[%s7 + $0x240] sm:$0xff]
        %v3479 = vld [vmem:[%s7 + $0x248] sm:$0xf]
        %v3480 = vld [vmem:[%s7 + $0x24c] sm:$0xff]
        %v3481 = vld [vmem:[%s7 + $0x254] sm:$0xf]
        %v3482 = vld [vmem:[%s7 + $0x258] sm:$0xff]
        %v3483 = vld [vmem:[%s7 + $0x260] sm:$0xf]
        %v3484 = vld [vmem:[%s7 + $0x264] sm:$0xff]
        %v3485 = vld [vmem:[%s7 + $0x26c] sm:$0xf]
        %v3486 = vld [vmem:[%s7 + $0x270] sm:$0xff]
        %v3487 = vld [vmem:[%s7 + $0x278] sm:$0xf]
        %v3488 = vld [vmem:[%s7 + $0x27c] sm:$0xff]
        %v3489 = vld [vmem:[%s7 + $0x284] sm:$0xf]
        %v3490 = vld [vmem:[%s7 + $0x288] sm:$0xff]
        %v3491 = vld [vmem:[%s7 + $0x290] sm:$0xf]
        %v3492 = vld [vmem:[%s7 + $0x294] sm:$0xff]
        %v3493 = vld [vmem:[%s7 + $0x29c] sm:$0xf]
        %v3494 = vld [vmem:[%s7 + $0x2a0] sm:$0xff]
        %v3495 = vld [vmem:[%s7 + $0x2a8] sm:$0xf]
        %v3496 = vld [vmem:[%s7 + $0x2ac] sm:$0xff]
        %v3497 = vld [vmem:[%s7 + $0x2b4] sm:$0xf]
        %v3498 = vld [vmem:[%s7 + $0x2b8] sm:$0xff]
        %v3499 = vld [vmem:[%s7 + $0x2c0] sm:$0xf]
        %v3500 = vld [vmem:[%s7 + $0x2c4] sm:$0xff]
        %v3501 = vld [vmem:[%s7 + $0x2cc] sm:$0xf]
        %v3502 = vld [vmem:[%s7 + $0x2d0] sm:$0xff]
        %v3503 = vld [vmem:[%s7 + $0x2d8] sm:$0xf]
        %v3504 = vld [vmem:[%s7 + $0x2dc] sm:$0xff]
        %v3505 = vld [vmem:[%s7 + $0x2e4] sm:$0xf]
        %v3506 = vld [vmem:[%s7 + $0x2e8] sm:$0xff]
        %v3507 = vld [vmem:[%s7 + $0x2f0] sm:$0xf]
        %v3508 = vld [vmem:[%s7 + $0x2f4] sm:$0xff]
        %v3509 = vld [vmem:[%s7 + $0x2fc] sm:$0xf]
        %v3510 = vld [vmem:[%s515] sm:$0xf]
        %v3511 = vld [vmem:[%s515 + $0x4] sm:$0xf]
        %v3512 = vld [vmem:[%s515 + $0x8] sm:$0xf]
        %v3513 = vld [vmem:[%s515 + $0xc] sm:$0xf]
        %v3514 = vld [vmem:[%s515 + $0x10] sm:$0xf]
        %v3515 = vld [vmem:[%s515 + $0x14] sm:$0xf]
        %v3516 = vld [vmem:[%s515 + $0x18] sm:$0xf]
        %v3517 = vld [vmem:[%s515 + $0x1c] sm:$0xf]
        %v3518 = vld [vmem:[%s515 + $0x20] sm:$0xf]
        %v3519 = vld [vmem:[%s515 + $0x24] sm:$0xf]
        %v3520 = vld [vmem:[%s515 + $0x28] sm:$0xf]
        %v3521 = vld [vmem:[%s515 + $0x2c] sm:$0xf]
        %v3522 = vld [vmem:[%s515 + $0x30] sm:$0xf]
        %v3523 = vld [vmem:[%s515 + $0x34] sm:$0xf]
        %v3524 = vld [vmem:[%s515 + $0x38] sm:$0xf]
        %v3525 = vld [vmem:[%s515 + $0x3c] sm:$0xf]
        %v3526 = vld [vmem:[%s515 + $0x40] sm:$0xf]
        %v3527 = vld [vmem:[%s515 + $0x44] sm:$0xf]
        %v3528 = vld [vmem:[%s515 + $0x48] sm:$0xf]
        %v3529 = vld [vmem:[%s515 + $0x4c] sm:$0xf]
        %v3530 = vld [vmem:[%s515 + $0x50] sm:$0xf]
        %v3531 = vld [vmem:[%s515 + $0x54] sm:$0xf]
        %v3532 = vld [vmem:[%s515 + $0x58] sm:$0xf]
        %v3533 = vld [vmem:[%s515 + $0x5c] sm:$0xf]
        %v3534 = vld [vmem:[%s515 + $0x60] sm:$0xf]
        %v3535 = vld [vmem:[%s515 + $0x64] sm:$0xf]
        %v3536 = vld [vmem:[%s515 + $0x68] sm:$0xf]
        %v3537 = vld [vmem:[%s515 + $0x6c] sm:$0xf]
        %v3538 = vld [vmem:[%s515 + $0x70] sm:$0xf]
        %v3539 = vld [vmem:[%s515 + $0x74] sm:$0xf]
        %v3540 = vld [vmem:[%s515 + $0x78] sm:$0xf]
        %v3541 = vld [vmem:[%s515 + $0x7c] sm:$0xf]
        %v3542 = vld [vmem:[%s8] sm:$0xff]
        %v3543 = vld [vmem:[%s8 + $0x8] sm:$0xf]
        %v3576 = vunpack.c.l.b16 %v3510
        %v3577 = vunpack.c.l.b16 %v3511
        %v3578 = vunpack.c.l.b16 %v3512
        %v3579 = vunpack.c.l.b16 %v3513
        %v3580 = vunpack.c.l.b16 %v3514
        %v3581 = vunpack.c.l.b16 %v3515
        %v3582 = vunpack.c.l.b16 %v3516
        %v3583 = vunpack.c.l.b16 %v3517
        %v3584 = vunpack.c.l.b16 %v3518
        %v3585 = vunpack.c.l.b16 %v3519
        %v3586 = vunpack.c.l.b16 %v3520
        %v3587 = vunpack.c.l.b16 %v3521
        %v3588 = vunpack.c.l.b16 %v3522
        %v3589 = vunpack.c.l.b16 %v3523
        %v3590 = vunpack.c.l.b16 %v3524
        %v3591 = vunpack.c.l.b16 %v3525
        %v3592 = vunpack.c.l.b16 %v3526
        %v3593 = vunpack.c.l.b16 %v3527
        %v3594 = vunpack.c.l.b16 %v3528
        %v3595 = vunpack.c.l.b16 %v3529
        %v3596 = vunpack.c.l.b16 %v3530
        %v3597 = vunpack.c.l.b16 %v3531
        %v3598 = vunpack.c.l.b16 %v3532
        %v3599 = vunpack.c.l.b16 %v3533
        %v3600 = vunpack.c.l.b16 %v3534
        %v3601 = vunpack.c.l.b16 %v3535
        %v3602 = vunpack.c.l.b16 %v3536
        %v3603 = vunpack.c.l.b16 %v3537
        %v3604 = vunpack.c.l.b16 %v3538
        %v3605 = vunpack.c.l.b16 %v3539
        %v3606 = vunpack.c.l.b16 %v3540
        %v3607 = vunpack.c.l.b16 %v3541
        %v3608 = vpack.c.b16 %v3577, %v3576
        %v3609 = vpack.c.b16 %v3579, %v3578
        %v3610 = vpack.c.b16 %v3581, %v3580
        %v3611 = vpack.c.b16 %v3583, %v3582
        %v3612 = vpack.c.b16 %v3585, %v3584
        %v3613 = vpack.c.b16 %v3587, %v3586
        %v3614 = vpack.c.b16 %v3589, %v3588
        %v3615 = vpack.c.b16 %v3591, %v3590
        %v3616 = vpack.c.b16 %v3593, %v3592
        %v3617 = vpack.c.b16 %v3595, %v3594
        %v3618 = vpack.c.b16 %v3597, %v3596
        %v3619 = vpack.c.b16 %v3599, %v3598
        %v3620 = vpack.c.b16 %v3601, %v3600
        %v3621 = vpack.c.b16 %v3603, %v3602
        %v3622 = vpack.c.b16 %v3605, %v3604
        %v3623 = vpack.c.b16 %v3607, %v3606
        %v3626 = vunpack.c.l.b16 %v3542
        %v3627 = vunpack.c.h.b16 %v3542
        %v3628 = vunpack.c.l.b16 %v3543
        %v3629 = vpack.c.b16 %v3626, %v3626
        %v3630 = vpack.c.b16 %v3627, %v3627
        %v3631 = vpack.c.b16 %v3628, %v3628
        %vm3632 = vcmask 64512
        %v3634 = vsel %vm3632, %v3608, 0
        %v3637 = vsel %vm3632, %v3609, 0
        %v3640 = vsel %vm3632, %v3610, 0
        %v3643 = vsel %vm3632, %v3611, 0
        %v3646 = vsel %vm3632, %v3612, 0
        %v3649 = vsel %vm3632, %v3613, 0
        %v3652 = vsel %vm3632, %v3614, 0
        %v3655 = vsel %vm3632, %v3615, 0
        %v3658 = vsel %vm3632, %v3616, 0
        %v3661 = vsel %vm3632, %v3617, 0
        %v3664 = vsel %vm3632, %v3618, 0
        %v3667 = vsel %vm3632, %v3619, 0
        %v3670 = vsel %vm3632, %v3620, 0
        %v3673 = vsel %vm3632, %v3621, 0
        %v3676 = vsel %vm3632, %v3622, 0
        %v3679 = vsel %vm3632, %v3623, 0
        %vm3681 = vcmask 1043456
        %v3683 = vsel %vm3681, %v3629, 0
        %v3686 = vsel %vm3681, %v3630, 0
        %v3689 = vsel %vm3681, %v3631, 0
        %3691 = vmatpush.bf16.msra.mxu0 0
        %3692 = vmatpush.bf16.msra.mxu0 0
        %3693 = vmatpush.bf16.msra.mxu0 0
        %3694 = vmatpush.bf16.msra.mxu0 0
        %3695 = vmatpush.bf16.msra.mxu0 0
        %3696 = vmatpush.bf16.msra.mxu0 0
        %3697 = vmatpush.bf16.msra.mxu0 0
        %3698 = vmatpush.bf16.msra.mxu0 %v3683
        %3699 = vmatmul.bf16.gmra.mxu0 %v3634
        %v3700 = vpop.f32.mrf.mxu0
        %v3701 = vadd.f32 0.0, %v3700
        %v3702 = vpop.f32.mrf.mxu0
        %v3703 = vadd.f32 0.0, %v3702
        %3704 = vmatmul.bf16.gmra.mxu0 %v3637
        %v3705 = vpop.f32.mrf.mxu0
        %v3706 = vadd.f32 0.0, %v3705
        %v3707 = vpop.f32.mrf.mxu0
        %v3708 = vadd.f32 0.0, %v3707
        %3709 = vmatmul.bf16.gmra.mxu0 %v3640
        %v3710 = vpop.f32.mrf.mxu0
        %v3711 = vadd.f32 0.0, %v3710
        %v3712 = vpop.f32.mrf.mxu0
        %v3713 = vadd.f32 0.0, %v3712
        %3714 = vmatmul.bf16.gmra.mxu0 %v3643
        %v3715 = vpop.f32.mrf.mxu0
        %v3716 = vadd.f32 0.0, %v3715
        %v3717 = vpop.f32.mrf.mxu0
        %v3718 = vadd.f32 0.0, %v3717
        %3719 = vmatmul.bf16.gmra.mxu0 %v3646
        %v3720 = vpop.f32.mrf.mxu0
        %v3721 = vadd.f32 0.0, %v3720
        %v3722 = vpop.f32.mrf.mxu0
        %v3723 = vadd.f32 0.0, %v3722
        %3724 = vmatmul.bf16.gmra.mxu0 %v3649
        %v3725 = vpop.f32.mrf.mxu0
        %v3726 = vadd.f32 0.0, %v3725
        %v3727 = vpop.f32.mrf.mxu0
        %v3728 = vadd.f32 0.0, %v3727
        %3729 = vmatmul.bf16.gmra.mxu0 %v3652
        %v3730 = vpop.f32.mrf.mxu0
        %v3731 = vadd.f32 0.0, %v3730
        %v3732 = vpop.f32.mrf.mxu0
        %v3733 = vadd.f32 0.0, %v3732
        %3734 = vmatmul.bf16.gmra.mxu0 %v3655
        %v3735 = vpop.f32.mrf.mxu0
        %v3736 = vadd.f32 0.0, %v3735
        %v3737 = vpop.f32.mrf.mxu0
        %v3738 = vadd.f32 0.0, %v3737
        %3739 = vmatmul.bf16.gmra.mxu0 %v3658
        %v3740 = vpop.f32.mrf.mxu0
        %v3741 = vadd.f32 0.0, %v3740
        %v3742 = vpop.f32.mrf.mxu0
        %v3743 = vadd.f32 0.0, %v3742
        %3744 = vmatmul.bf16.gmra.mxu0 %v3661
        %v3745 = vpop.f32.mrf.mxu0
        %v3746 = vadd.f32 0.0, %v3745
        %v3747 = vpop.f32.mrf.mxu0
        %v3748 = vadd.f32 0.0, %v3747
        %3749 = vmatmul.bf16.gmra.mxu0 %v3664
        %v3750 = vpop.f32.mrf.mxu0
        %v3751 = vadd.f32 0.0, %v3750
        %v3752 = vpop.f32.mrf.mxu0
        %v3753 = vadd.f32 0.0, %v3752
        %3754 = vmatmul.bf16.gmra.mxu0 %v3667
        %v3755 = vpop.f32.mrf.mxu0
        %v3756 = vadd.f32 0.0, %v3755
        %v3757 = vpop.f32.mrf.mxu0
        %v3758 = vadd.f32 0.0, %v3757
        %3759 = vmatmul.bf16.gmra.mxu0 %v3670
        %v3760 = vpop.f32.mrf.mxu0
        %v3761 = vadd.f32 0.0, %v3760
        %v3762 = vpop.f32.mrf.mxu0
        %v3763 = vadd.f32 0.0, %v3762
        %3764 = vmatmul.bf16.gmra.mxu0 %v3673
        %v3765 = vpop.f32.mrf.mxu0
        %v3766 = vadd.f32 0.0, %v3765
        %v3767 = vpop.f32.mrf.mxu0
        %v3768 = vadd.f32 0.0, %v3767
        %3769 = vmatmul.bf16.gmra.mxu0 %v3676
        %v3770 = vpop.f32.mrf.mxu0
        %v3771 = vadd.f32 0.0, %v3770
        %v3772 = vpop.f32.mrf.mxu0
        %v3773 = vadd.f32 0.0, %v3772
        %3774 = vmatmul.bf16.gmra.mxu0 %v3679
        %v3775 = vpop.f32.mrf.mxu0
        %v3776 = vadd.f32 0.0, %v3775
        %v3777 = vpop.f32.mrf.mxu0
        %v3778 = vadd.f32 0.0, %v3777
        %3779 = vdwg.mxu0
        %3780 = vmatpush.bf16.msra.mxu0 0
        %3781 = vmatpush.bf16.msra.mxu0 0
        %3782 = vmatpush.bf16.msra.mxu0 0
        %3783 = vmatpush.bf16.msra.mxu0 0
        %3784 = vmatpush.bf16.msra.mxu0 0
        %3785 = vmatpush.bf16.msra.mxu0 0
        %3786 = vmatpush.bf16.msra.mxu0 0
        %3787 = vmatpush.bf16.msra.mxu0 %v3686
        %3788 = vmatmul.bf16.gmra.mxu0 %v3634
        %v3789 = vpop.f32.mrf.mxu0
        %v3790 = vadd.f32 0.0, %v3789
        %v3791 = vpop.f32.mrf.mxu0
        %v3792 = vadd.f32 0.0, %v3791
        %3793 = vmatmul.bf16.gmra.mxu0 %v3637
        %v3794 = vpop.f32.mrf.mxu0
        %v3795 = vadd.f32 0.0, %v3794
        %v3796 = vpop.f32.mrf.mxu0
        %v3797 = vadd.f32 0.0, %v3796
        %3798 = vmatmul.bf16.gmra.mxu0 %v3640
        %v3799 = vpop.f32.mrf.mxu0
        %v3800 = vadd.f32 0.0, %v3799
        %v3801 = vpop.f32.mrf.mxu0
        %v3802 = vadd.f32 0.0, %v3801
        %3803 = vmatmul.bf16.gmra.mxu0 %v3643
        %v3804 = vpop.f32.mrf.mxu0
        %v3805 = vadd.f32 0.0, %v3804
        %v3806 = vpop.f32.mrf.mxu0
        %v3807 = vadd.f32 0.0, %v3806
        %3808 = vmatmul.bf16.gmra.mxu0 %v3646
        %v3809 = vpop.f32.mrf.mxu0
        %v3810 = vadd.f32 0.0, %v3809
        %v3811 = vpop.f32.mrf.mxu0
        %v3812 = vadd.f32 0.0, %v3811
        %3813 = vmatmul.bf16.gmra.mxu0 %v3649
        %v3814 = vpop.f32.mrf.mxu0
        %v3815 = vadd.f32 0.0, %v3814
        %v3816 = vpop.f32.mrf.mxu0
        %v3817 = vadd.f32 0.0, %v3816
        %3818 = vmatmul.bf16.gmra.mxu0 %v3652
        %v3819 = vpop.f32.mrf.mxu0
        %v3820 = vadd.f32 0.0, %v3819
        %v3821 = vpop.f32.mrf.mxu0
        %v3822 = vadd.f32 0.0, %v3821
        %3823 = vmatmul.bf16.gmra.mxu0 %v3655
        %v3824 = vpop.f32.mrf.mxu0
        %v3825 = vadd.f32 0.0, %v3824
        %v3826 = vpop.f32.mrf.mxu0
        %v3827 = vadd.f32 0.0, %v3826
        %3828 = vmatmul.bf16.gmra.mxu0 %v3658
        %v3829 = vpop.f32.mrf.mxu0
        %v3830 = vadd.f32 0.0, %v3829
        %v3831 = vpop.f32.mrf.mxu0
        %v3832 = vadd.f32 0.0, %v3831
        %3833 = vmatmul.bf16.gmra.mxu0 %v3661
        %v3834 = vpop.f32.mrf.mxu0
        %v3835 = vadd.f32 0.0, %v3834
        %v3836 = vpop.f32.mrf.mxu0
        %v3837 = vadd.f32 0.0, %v3836
        %3838 = vmatmul.bf16.gmra.mxu0 %v3664
        %v3839 = vpop.f32.mrf.mxu0
        %v3840 = vadd.f32 0.0, %v3839
        %v3841 = vpop.f32.mrf.mxu0
        %v3842 = vadd.f32 0.0, %v3841
        %3843 = vmatmul.bf16.gmra.mxu0 %v3667
        %v3844 = vpop.f32.mrf.mxu0
        %v3845 = vadd.f32 0.0, %v3844
        %v3846 = vpop.f32.mrf.mxu0
        %v3847 = vadd.f32 0.0, %v3846
        %3848 = vmatmul.bf16.gmra.mxu0 %v3670
        %v3849 = vpop.f32.mrf.mxu0
        %v3850 = vadd.f32 0.0, %v3849
        %v3851 = vpop.f32.mrf.mxu0
        %v3852 = vadd.f32 0.0, %v3851
        %3853 = vmatmul.bf16.gmra.mxu0 %v3673
        %v3854 = vpop.f32.mrf.mxu0
        %v3855 = vadd.f32 0.0, %v3854
        %v3856 = vpop.f32.mrf.mxu0
        %v3857 = vadd.f32 0.0, %v3856
        %3858 = vmatmul.bf16.gmra.mxu0 %v3676
        %v3859 = vpop.f32.mrf.mxu0
        %v3860 = vadd.f32 0.0, %v3859
        %v3861 = vpop.f32.mrf.mxu0
        %v3862 = vadd.f32 0.0, %v3861
        %3863 = vmatmul.bf16.gmra.mxu0 %v3679
        %v3864 = vpop.f32.mrf.mxu0
        %v3865 = vadd.f32 0.0, %v3864
        %v3866 = vpop.f32.mrf.mxu0
        %v3867 = vadd.f32 0.0, %v3866
        %3868 = vdwg.mxu0
        %3869 = vmatpush.bf16.msra.mxu0 0
        %3870 = vmatpush.bf16.msra.mxu0 0
        %3871 = vmatpush.bf16.msra.mxu0 0
        %3872 = vmatpush.bf16.msra.mxu0 0
        %3873 = vmatpush.bf16.msra.mxu0 0
        %3874 = vmatpush.bf16.msra.mxu0 0
        %3875 = vmatpush.bf16.msra.mxu0 0
        %3876 = vmatpush.bf16.msra.mxu0 %v3689
        %3877 = vmatmul.bf16.gmra.mxu0 %v3634
        %v3878 = vpop.f32.mrf.mxu0
        %v3879 = vadd.f32 0.0, %v3878
        %v3880 = vpop.f32.mrf.mxu0
        %v3881 = vadd.f32 0.0, %v3880
        %3882 = vmatmul.bf16.gmra.mxu0 %v3637
        %v3883 = vpop.f32.mrf.mxu0
        %v3884 = vadd.f32 0.0, %v3883
        %v3885 = vpop.f32.mrf.mxu0
        %v3886 = vadd.f32 0.0, %v3885
        %3887 = vmatmul.bf16.gmra.mxu0 %v3640
        %v3888 = vpop.f32.mrf.mxu0
        %v3889 = vadd.f32 0.0, %v3888
        %v3890 = vpop.f32.mrf.mxu0
        %v3891 = vadd.f32 0.0, %v3890
        %3892 = vmatmul.bf16.gmra.mxu0 %v3643
        %v3893 = vpop.f32.mrf.mxu0
        %v3894 = vadd.f32 0.0, %v3893
        %v3895 = vpop.f32.mrf.mxu0
        %v3896 = vadd.f32 0.0, %v3895
        %3897 = vmatmul.bf16.gmra.mxu0 %v3646
        %v3898 = vpop.f32.mrf.mxu0
        %v3899 = vadd.f32 0.0, %v3898
        %v3900 = vpop.f32.mrf.mxu0
        %v3901 = vadd.f32 0.0, %v3900
        %3902 = vmatmul.bf16.gmra.mxu0 %v3649
        %v3903 = vpop.f32.mrf.mxu0
        %v3904 = vadd.f32 0.0, %v3903
        %v3905 = vpop.f32.mrf.mxu0
        %v3906 = vadd.f32 0.0, %v3905
        %3907 = vmatmul.bf16.gmra.mxu0 %v3652
        %v3908 = vpop.f32.mrf.mxu0
        %v3909 = vadd.f32 0.0, %v3908
        %v3910 = vpop.f32.mrf.mxu0
        %v3911 = vadd.f32 0.0, %v3910
        %3912 = vmatmul.bf16.gmra.mxu0 %v3655
        %v3913 = vpop.f32.mrf.mxu0
        %v3914 = vadd.f32 0.0, %v3913
        %v3915 = vpop.f32.mrf.mxu0
        %v3916 = vadd.f32 0.0, %v3915
        %3917 = vmatmul.bf16.gmra.mxu0 %v3658
        %v3918 = vpop.f32.mrf.mxu0
        %v3919 = vadd.f32 0.0, %v3918
        %v3920 = vpop.f32.mrf.mxu0
        %v3921 = vadd.f32 0.0, %v3920
        %3922 = vmatmul.bf16.gmra.mxu0 %v3661
        %v3923 = vpop.f32.mrf.mxu0
        %v3924 = vadd.f32 0.0, %v3923
        %v3925 = vpop.f32.mrf.mxu0
        %v3926 = vadd.f32 0.0, %v3925
        %3927 = vmatmul.bf16.gmra.mxu0 %v3664
        %v3928 = vpop.f32.mrf.mxu0
        %v3929 = vadd.f32 0.0, %v3928
        %v3930 = vpop.f32.mrf.mxu0
        %v3931 = vadd.f32 0.0, %v3930
        %3932 = vmatmul.bf16.gmra.mxu0 %v3667
        %v3933 = vpop.f32.mrf.mxu0
        %v3934 = vadd.f32 0.0, %v3933
        %v3935 = vpop.f32.mrf.mxu0
        %v3936 = vadd.f32 0.0, %v3935
        %3937 = vmatmul.bf16.gmra.mxu0 %v3670
        %v3938 = vpop.f32.mrf.mxu0
        %v3939 = vadd.f32 0.0, %v3938
        %v3940 = vpop.f32.mrf.mxu0
        %v3941 = vadd.f32 0.0, %v3940
        %3942 = vmatmul.bf16.gmra.mxu0 %v3673
        %v3943 = vpop.f32.mrf.mxu0
        %v3944 = vadd.f32 0.0, %v3943
        %v3945 = vpop.f32.mrf.mxu0
        %v3946 = vadd.f32 0.0, %v3945
        %3947 = vmatmul.bf16.gmra.mxu0 %v3676
        %v3948 = vpop.f32.mrf.mxu0
        %v3949 = vadd.f32 0.0, %v3948
        %v3950 = vpop.f32.mrf.mxu0
        %v3951 = vadd.f32 0.0, %v3950
        %3952 = vmatmul.bf16.gmra.mxu0 %v3679
        %v3953 = vpop.f32.mrf.mxu0
        %v3954 = vadd.f32 0.0, %v3953
        %v3955 = vpop.f32.mrf.mxu0
        %v3956 = vadd.f32 0.0, %v3955
        %3957 = vdwg.mxu0
        %v4022 = vunpack.c.l.b16 %v3318
        %v4023 = vunpack.c.h.b16 %v3318
        %v4024 = vunpack.c.l.b16 %v3319
        %v4025 = vunpack.c.h.b16 %v3319
        %v4026 = vunpack.c.l.b16 %v3320
        %v4027 = vunpack.c.h.b16 %v3320
        %v4028 = vunpack.c.l.b16 %v3321
        %v4029 = vunpack.c.h.b16 %v3321
        %v4030 = vunpack.c.l.b16 %v3322
        %v4031 = vunpack.c.h.b16 %v3322
        %v4032 = vunpack.c.l.b16 %v3323
        %v4033 = vunpack.c.h.b16 %v3323
        %v4034 = vunpack.c.l.b16 %v3324
        %v4035 = vunpack.c.h.b16 %v3324
        %v4036 = vunpack.c.l.b16 %v3325
        %v4037 = vunpack.c.h.b16 %v3325
        %v4038 = vunpack.c.l.b16 %v3326
        %v4039 = vunpack.c.h.b16 %v3326
        %v4040 = vunpack.c.l.b16 %v3327
        %v4041 = vunpack.c.h.b16 %v3327
        %v4042 = vunpack.c.l.b16 %v3328
        %v4043 = vunpack.c.h.b16 %v3328
        %v4044 = vunpack.c.l.b16 %v3329
        %v4045 = vunpack.c.h.b16 %v3329
        %v4046 = vunpack.c.l.b16 %v3330
        %v4047 = vunpack.c.h.b16 %v3330
        %v4048 = vunpack.c.l.b16 %v3331
        %v4049 = vunpack.c.h.b16 %v3331
        %v4050 = vunpack.c.l.b16 %v3332
        %v4051 = vunpack.c.h.b16 %v3332
        %v4052 = vunpack.c.l.b16 %v3333
        %v4053 = vunpack.c.h.b16 %v3333
        %v4054 = vunpack.c.l.b16 %v3334
        %v4055 = vunpack.c.h.b16 %v3334
        %v4056 = vunpack.c.l.b16 %v3335
        %v4057 = vunpack.c.h.b16 %v3335
        %v4058 = vunpack.c.l.b16 %v3336
        %v4059 = vunpack.c.h.b16 %v3336
        %v4060 = vunpack.c.l.b16 %v3337
        %v4061 = vunpack.c.h.b16 %v3337
        %v4062 = vunpack.c.l.b16 %v3338
        %v4063 = vunpack.c.h.b16 %v3338
        %v4064 = vunpack.c.l.b16 %v3339
        %v4065 = vunpack.c.h.b16 %v3339
        %v4066 = vunpack.c.l.b16 %v3340
        %v4067 = vunpack.c.h.b16 %v3340
        %v4068 = vunpack.c.l.b16 %v3341
        %v4069 = vunpack.c.h.b16 %v3341
        %v4070 = vunpack.c.l.b16 %v3342
        %v4071 = vunpack.c.h.b16 %v3342
        %v4072 = vunpack.c.l.b16 %v3343
        %v4073 = vunpack.c.h.b16 %v3343
        %v4074 = vunpack.c.l.b16 %v3344
        %v4075 = vunpack.c.h.b16 %v3344
        %v4076 = vunpack.c.l.b16 %v3345
        %v4077 = vunpack.c.h.b16 %v3345
        %v4078 = vunpack.c.l.b16 %v3346
        %v4079 = vunpack.c.h.b16 %v3346
        %v4080 = vunpack.c.l.b16 %v3347
        %v4081 = vunpack.c.h.b16 %v3347
        %v4082 = vunpack.c.l.b16 %v3348
        %v4083 = vunpack.c.h.b16 %v3348
        %v4084 = vunpack.c.l.b16 %v3349
        %v4085 = vunpack.c.h.b16 %v3349
        %v4086 = vunpack.c.l.b16 %v3350
        %v4087 = vunpack.c.h.b16 %v3350
        %v4088 = vunpack.c.l.b16 %v3351
        %v4089 = vunpack.c.h.b16 %v3351
        %v4090 = vunpack.c.l.b16 %v3352
        %v4091 = vunpack.c.h.b16 %v3352
        %v4092 = vunpack.c.l.b16 %v3353
        %v4093 = vunpack.c.h.b16 %v3353
        %v4094 = vunpack.c.l.b16 %v3354
        %v4095 = vunpack.c.h.b16 %v3354
        %v4096 = vunpack.c.l.b16 %v3355
        %v4097 = vunpack.c.h.b16 %v3355
        %v4098 = vunpack.c.l.b16 %v3356
        %v4099 = vunpack.c.h.b16 %v3356
        %v4100 = vunpack.c.l.b16 %v3357
        %v4101 = vunpack.c.h.b16 %v3357
        %v4102 = vunpack.c.l.b16 %v3358
        %v4103 = vunpack.c.h.b16 %v3358
        %v4104 = vunpack.c.l.b16 %v3359
        %v4105 = vunpack.c.h.b16 %v3359
        %v4106 = vunpack.c.l.b16 %v3360
        %v4107 = vunpack.c.h.b16 %v3360
        %v4108 = vunpack.c.l.b16 %v3361
        %v4109 = vunpack.c.h.b16 %v3361
        %v4110 = vunpack.c.l.b16 %v3362
        %v4111 = vunpack.c.h.b16 %v3362
        %v4112 = vunpack.c.l.b16 %v3363
        %v4113 = vunpack.c.h.b16 %v3363
        %v4114 = vunpack.c.l.b16 %v3364
        %v4115 = vunpack.c.h.b16 %v3364
        %v4116 = vunpack.c.l.b16 %v3365
        %v4117 = vunpack.c.h.b16 %v3365
        %v4118 = vunpack.c.l.b16 %v3366
        %v4119 = vunpack.c.h.b16 %v3366
        %v4120 = vunpack.c.l.b16 %v3367
        %v4121 = vunpack.c.h.b16 %v3367
        %v4122 = vunpack.c.l.b16 %v3368
        %v4123 = vunpack.c.h.b16 %v3368
        %v4124 = vunpack.c.l.b16 %v3369
        %v4125 = vunpack.c.h.b16 %v3369
        %v4126 = vunpack.c.l.b16 %v3370
        %v4127 = vunpack.c.h.b16 %v3370
        %v4128 = vunpack.c.l.b16 %v3371
        %v4129 = vunpack.c.h.b16 %v3371
        %v4130 = vunpack.c.l.b16 %v3372
        %v4131 = vunpack.c.h.b16 %v3372
        %v4132 = vunpack.c.l.b16 %v3373
        %v4133 = vunpack.c.h.b16 %v3373
        %v4134 = vunpack.c.l.b16 %v3374
        %v4135 = vunpack.c.h.b16 %v3374
        %v4136 = vunpack.c.l.b16 %v3375
        %v4137 = vunpack.c.h.b16 %v3375
        %v4138 = vunpack.c.l.b16 %v3376
        %v4139 = vunpack.c.h.b16 %v3376
        %v4140 = vunpack.c.l.b16 %v3377
        %v4141 = vunpack.c.h.b16 %v3377
        %v4142 = vunpack.c.l.b16 %v3378
        %v4143 = vunpack.c.h.b16 %v3378
        %v4144 = vunpack.c.l.b16 %v3379
        %v4145 = vunpack.c.h.b16 %v3379
        %v4146 = vunpack.c.l.b16 %v3380
        %v4147 = vunpack.c.h.b16 %v3380
        %v4148 = vunpack.c.l.b16 %v3381
        %v4149 = vunpack.c.h.b16 %v3381
        %v4150 = vpack.c.b16 %v4026, %v4022
        %v4151 = vpack.c.b16 %v4027, %v4023
        %v4152 = vpack.c.b16 %v4028, %v4024
        %v4153 = vpack.c.b16 %v4029, %v4025
        %v4154 = vpack.c.b16 %v4034, %v4030
        %v4155 = vpack.c.b16 %v4035, %v4031
        %v4156 = vpack.c.b16 %v4036, %v4032
        %v4157 = vpack.c.b16 %v4037, %v4033
        %v4158 = vpack.c.b16 %v4042, %v4038
        %v4159 = vpack.c.b16 %v4043, %v4039
        %v4160 = vpack.c.b16 %v4044, %v4040
        %v4161 = vpack.c.b16 %v4045, %v4041
        %v4162 = vpack.c.b16 %v4050, %v4046
        %v4163 = vpack.c.b16 %v4051, %v4047
        %v4164 = vpack.c.b16 %v4052, %v4048
        %v4165 = vpack.c.b16 %v4053, %v4049
        %v4166 = vpack.c.b16 %v4058, %v4054
        %v4167 = vpack.c.b16 %v4059, %v4055
        %v4168 = vpack.c.b16 %v4060, %v4056
        %v4169 = vpack.c.b16 %v4061, %v4057
        %v4170 = vpack.c.b16 %v4066, %v4062
        %v4171 = vpack.c.b16 %v4067, %v4063
        %v4172 = vpack.c.b16 %v4068, %v4064
        %v4173 = vpack.c.b16 %v4069, %v4065
        %v4174 = vpack.c.b16 %v4074, %v4070
        %v4175 = vpack.c.b16 %v4075, %v4071
        %v4176 = vpack.c.b16 %v4076, %v4072
        %v4177 = vpack.c.b16 %v4077, %v4073
        %v4178 = vpack.c.b16 %v4082, %v4078
        %v4179 = vpack.c.b16 %v4083, %v4079
        %v4180 = vpack.c.b16 %v4084, %v4080
        %v4181 = vpack.c.b16 %v4085, %v4081
        %v4182 = vpack.c.b16 %v4090, %v4086
        %v4183 = vpack.c.b16 %v4091, %v4087
        %v4184 = vpack.c.b16 %v4092, %v4088
        %v4185 = vpack.c.b16 %v4093, %v4089
        %v4186 = vpack.c.b16 %v4098, %v4094
        %v4187 = vpack.c.b16 %v4099, %v4095
        %v4188 = vpack.c.b16 %v4100, %v4096
        %v4189 = vpack.c.b16 %v4101, %v4097
        %v4190 = vpack.c.b16 %v4106, %v4102
        %v4191 = vpack.c.b16 %v4107, %v4103
        %v4192 = vpack.c.b16 %v4108, %v4104
        %v4193 = vpack.c.b16 %v4109, %v4105
        %v4194 = vpack.c.b16 %v4114, %v4110
        %v4195 = vpack.c.b16 %v4115, %v4111
        %v4196 = vpack.c.b16 %v4116, %v4112
        %v4197 = vpack.c.b16 %v4117, %v4113
        %v4198 = vpack.c.b16 %v4122, %v4118
        %v4199 = vpack.c.b16 %v4123, %v4119
        %v4200 = vpack.c.b16 %v4124, %v4120
        %v4201 = vpack.c.b16 %v4125, %v4121
        %v4202 = vpack.c.b16 %v4130, %v4126
        %v4203 = vpack.c.b16 %v4131, %v4127
        %v4204 = vpack.c.b16 %v4132, %v4128
        %v4205 = vpack.c.b16 %v4133, %v4129
        %v4206 = vpack.c.b16 %v4138, %v4134
        %v4207 = vpack.c.b16 %v4139, %v4135
        %v4208 = vpack.c.b16 %v4140, %v4136
        %v4209 = vpack.c.b16 %v4141, %v4137
        %v4210 = vpack.c.b16 %v4146, %v4142
        %v4211 = vpack.c.b16 %v4147, %v4143
        %v4212 = vpack.c.b16 %v4148, %v4144
        %v4213 = vpack.c.b16 %v4149, %v4145
        %v4406 = vunpack.c.l.b16 %v3382
        %v4407 = vunpack.c.h.b16 %v3382
        %v4408 = vunpack.c.l.b16 %v3383
        %v4409 = vunpack.c.l.b16 %v3384
        %v4410 = vunpack.c.h.b16 %v3384
        %v4411 = vunpack.c.l.b16 %v3385
        %v4412 = vunpack.c.l.b16 %v3386
        %v4413 = vunpack.c.h.b16 %v3386
        %v4414 = vunpack.c.l.b16 %v3387
        %v4415 = vunpack.c.l.b16 %v3388
        %v4416 = vunpack.c.h.b16 %v3388
        %v4417 = vunpack.c.l.b16 %v3389
        %v4418 = vunpack.c.l.b16 %v3390
        %v4419 = vunpack.c.h.b16 %v3390
        %v4420 = vunpack.c.l.b16 %v3391
        %v4421 = vunpack.c.l.b16 %v3392
        %v4422 = vunpack.c.h.b16 %v3392
        %v4423 = vunpack.c.l.b16 %v3393
        %v4424 = vunpack.c.l.b16 %v3394
        %v4425 = vunpack.c.h.b16 %v3394
        %v4426 = vunpack.c.l.b16 %v3395
        %v4427 = vunpack.c.l.b16 %v3396
        %v4428 = vunpack.c.h.b16 %v3396
        %v4429 = vunpack.c.l.b16 %v3397
        %v4430 = vunpack.c.l.b16 %v3398
        %v4431 = vunpack.c.h.b16 %v3398
        %v4432 = vunpack.c.l.b16 %v3399
        %v4433 = vunpack.c.l.b16 %v3400
        %v4434 = vunpack.c.h.b16 %v3400
        %v4435 = vunpack.c.l.b16 %v3401
        %v4436 = vunpack.c.l.b16 %v3402
        %v4437 = vunpack.c.h.b16 %v3402
        %v4438 = vunpack.c.l.b16 %v3403
        %v4439 = vunpack.c.l.b16 %v3404
        %v4440 = vunpack.c.h.b16 %v3404
        %v4441 = vunpack.c.l.b16 %v3405
        %v4442 = vunpack.c.l.b16 %v3406
        %v4443 = vunpack.c.h.b16 %v3406
        %v4444 = vunpack.c.l.b16 %v3407
        %v4445 = vunpack.c.l.b16 %v3408
        %v4446 = vunpack.c.h.b16 %v3408
        %v4447 = vunpack.c.l.b16 %v3409
        %v4448 = vunpack.c.l.b16 %v3410
        %v4449 = vunpack.c.h.b16 %v3410
        %v4450 = vunpack.c.l.b16 %v3411
        %v4451 = vunpack.c.l.b16 %v3412
        %v4452 = vunpack.c.h.b16 %v3412
        %v4453 = vunpack.c.l.b16 %v3413
        %v4454 = vunpack.c.l.b16 %v3414
        %v4455 = vunpack.c.h.b16 %v3414
        %v4456 = vunpack.c.l.b16 %v3415
        %v4457 = vunpack.c.l.b16 %v3416
        %v4458 = vunpack.c.h.b16 %v3416
        %v4459 = vunpack.c.l.b16 %v3417
        %v4460 = vunpack.c.l.b16 %v3418
        %v4461 = vunpack.c.h.b16 %v3418
        %v4462 = vunpack.c.l.b16 %v3419
        %v4463 = vunpack.c.l.b16 %v3420
        %v4464 = vunpack.c.h.b16 %v3420
        %v4465 = vunpack.c.l.b16 %v3421
        %v4466 = vunpack.c.l.b16 %v3422
        %v4467 = vunpack.c.h.b16 %v3422
        %v4468 = vunpack.c.l.b16 %v3423
        %v4469 = vunpack.c.l.b16 %v3424
        %v4470 = vunpack.c.h.b16 %v3424
        %v4471 = vunpack.c.l.b16 %v3425
        %v4472 = vunpack.c.l.b16 %v3426
        %v4473 = vunpack.c.h.b16 %v3426
        %v4474 = vunpack.c.l.b16 %v3427
        %v4475 = vunpack.c.l.b16 %v3428
        %v4476 = vunpack.c.h.b16 %v3428
        %v4477 = vunpack.c.l.b16 %v3429
        %v4478 = vunpack.c.l.b16 %v3430
        %v4479 = vunpack.c.h.b16 %v3430
        %v4480 = vunpack.c.l.b16 %v3431
        %v4481 = vunpack.c.l.b16 %v3432
        %v4482 = vunpack.c.h.b16 %v3432
        %v4483 = vunpack.c.l.b16 %v3433
        %v4484 = vunpack.c.l.b16 %v3434
        %v4485 = vunpack.c.h.b16 %v3434
        %v4486 = vunpack.c.l.b16 %v3435
        %v4487 = vunpack.c.l.b16 %v3436
        %v4488 = vunpack.c.h.b16 %v3436
        %v4489 = vunpack.c.l.b16 %v3437
        %v4490 = vunpack.c.l.b16 %v3438
        %v4491 = vunpack.c.h.b16 %v3438
        %v4492 = vunpack.c.l.b16 %v3439
        %v4493 = vunpack.c.l.b16 %v3440
        %v4494 = vunpack.c.h.b16 %v3440
        %v4495 = vunpack.c.l.b16 %v3441
        %v4496 = vunpack.c.l.b16 %v3442
        %v4497 = vunpack.c.h.b16 %v3442
        %v4498 = vunpack.c.l.b16 %v3443
        %v4499 = vunpack.c.l.b16 %v3444
        %v4500 = vunpack.c.h.b16 %v3444
        %v4501 = vunpack.c.l.b16 %v3445
        %v4502 = vunpack.c.l.b16 %v3446
        %v4503 = vunpack.c.h.b16 %v3446
        %v4504 = vunpack.c.l.b16 %v3447
        %v4505 = vunpack.c.l.b16 %v3448
        %v4506 = vunpack.c.h.b16 %v3448
        %v4507 = vunpack.c.l.b16 %v3449
        %v4508 = vunpack.c.l.b16 %v3450
        %v4509 = vunpack.c.h.b16 %v3450
        %v4510 = vunpack.c.l.b16 %v3451
        %v4511 = vunpack.c.l.b16 %v3452
        %v4512 = vunpack.c.h.b16 %v3452
        %v4513 = vunpack.c.l.b16 %v3453
        %v4514 = vunpack.c.l.b16 %v3454
        %v4515 = vunpack.c.h.b16 %v3454
        %v4516 = vunpack.c.l.b16 %v3455
        %v4517 = vunpack.c.l.b16 %v3456
        %v4518 = vunpack.c.h.b16 %v3456
        %v4519 = vunpack.c.l.b16 %v3457
        %v4520 = vunpack.c.l.b16 %v3458
        %v4521 = vunpack.c.h.b16 %v3458
        %v4522 = vunpack.c.l.b16 %v3459
        %v4523 = vunpack.c.l.b16 %v3460
        %v4524 = vunpack.c.h.b16 %v3460
        %v4525 = vunpack.c.l.b16 %v3461
        %v4526 = vunpack.c.l.b16 %v3462
        %v4527 = vunpack.c.h.b16 %v3462
        %v4528 = vunpack.c.l.b16 %v3463
        %v4529 = vunpack.c.l.b16 %v3464
        %v4530 = vunpack.c.h.b16 %v3464
        %v4531 = vunpack.c.l.b16 %v3465
        %v4532 = vunpack.c.l.b16 %v3466
        %v4533 = vunpack.c.h.b16 %v3466
        %v4534 = vunpack.c.l.b16 %v3467
        %v4535 = vunpack.c.l.b16 %v3468
        %v4536 = vunpack.c.h.b16 %v3468
        %v4537 = vunpack.c.l.b16 %v3469
        %v4538 = vunpack.c.l.b16 %v3470
        %v4539 = vunpack.c.h.b16 %v3470
        %v4540 = vunpack.c.l.b16 %v3471
        %v4541 = vunpack.c.l.b16 %v3472
        %v4542 = vunpack.c.h.b16 %v3472
        %v4543 = vunpack.c.l.b16 %v3473
        %v4544 = vunpack.c.l.b16 %v3474
        %v4545 = vunpack.c.h.b16 %v3474
        %v4546 = vunpack.c.l.b16 %v3475
        %v4547 = vunpack.c.l.b16 %v3476
        %v4548 = vunpack.c.h.b16 %v3476
        %v4549 = vunpack.c.l.b16 %v3477
        %v4550 = vunpack.c.l.b16 %v3478
        %v4551 = vunpack.c.h.b16 %v3478
        %v4552 = vunpack.c.l.b16 %v3479
        %v4553 = vunpack.c.l.b16 %v3480
        %v4554 = vunpack.c.h.b16 %v3480
        %v4555 = vunpack.c.l.b16 %v3481
        %v4556 = vunpack.c.l.b16 %v3482
        %v4557 = vunpack.c.h.b16 %v3482
        %v4558 = vunpack.c.l.b16 %v3483
        %v4559 = vunpack.c.l.b16 %v3484
        %v4560 = vunpack.c.h.b16 %v3484
        %v4561 = vunpack.c.l.b16 %v3485
        %v4562 = vunpack.c.l.b16 %v3486
        %v4563 = vunpack.c.h.b16 %v3486
        %v4564 = vunpack.c.l.b16 %v3487
        %v4565 = vunpack.c.l.b16 %v3488
        %v4566 = vunpack.c.h.b16 %v3488
        %v4567 = vunpack.c.l.b16 %v3489
        %v4568 = vunpack.c.l.b16 %v3490
        %v4569 = vunpack.c.h.b16 %v3490
        %v4570 = vunpack.c.l.b16 %v3491
        %v4571 = vunpack.c.l.b16 %v3492
        %v4572 = vunpack.c.h.b16 %v3492
        %v4573 = vunpack.c.l.b16 %v3493
        %v4574 = vunpack.c.l.b16 %v3494
        %v4575 = vunpack.c.h.b16 %v3494
        %v4576 = vunpack.c.l.b16 %v3495
        %v4577 = vunpack.c.l.b16 %v3496
        %v4578 = vunpack.c.h.b16 %v3496
        %v4579 = vunpack.c.l.b16 %v3497
        %v4580 = vunpack.c.l.b16 %v3498
        %v4581 = vunpack.c.h.b16 %v3498
        %v4582 = vunpack.c.l.b16 %v3499
        %v4583 = vunpack.c.l.b16 %v3500
        %v4584 = vunpack.c.h.b16 %v3500
        %v4585 = vunpack.c.l.b16 %v3501
        %v4586 = vunpack.c.l.b16 %v3502
        %v4587 = vunpack.c.h.b16 %v3502
        %v4588 = vunpack.c.l.b16 %v3503
        %v4589 = vunpack.c.l.b16 %v3504
        %v4590 = vunpack.c.h.b16 %v3504
        %v4591 = vunpack.c.l.b16 %v3505
        %v4592 = vunpack.c.l.b16 %v3506
        %v4593 = vunpack.c.h.b16 %v3506
        %v4594 = vunpack.c.l.b16 %v3507
        %v4595 = vunpack.c.l.b16 %v3508
        %v4596 = vunpack.c.h.b16 %v3508
        %v4597 = vunpack.c.l.b16 %v3509
        %v4598 = vpack.c.b16 %v4409, %v4406
        %v4599 = vpack.c.b16 %v4410, %v4407
        %v4600 = vpack.c.b16 %v4411, %v4408
        %v4601 = vpack.c.b16 %v4415, %v4412
        %v4602 = vpack.c.b16 %v4416, %v4413
        %v4603 = vpack.c.b16 %v4417, %v4414
        %v4604 = vpack.c.b16 %v4421, %v4418
        %v4605 = vpack.c.b16 %v4422, %v4419
        %v4606 = vpack.c.b16 %v4423, %v4420
        %v4607 = vpack.c.b16 %v4427, %v4424
        %v4608 = vpack.c.b16 %v4428, %v4425
        %v4609 = vpack.c.b16 %v4429, %v4426
        %v4610 = vpack.c.b16 %v4433, %v4430
        %v4611 = vpack.c.b16 %v4434, %v4431
        %v4612 = vpack.c.b16 %v4435, %v4432
        %v4613 = vpack.c.b16 %v4439, %v4436
        %v4614 = vpack.c.b16 %v4440, %v4437
        %v4615 = vpack.c.b16 %v4441, %v4438
        %v4616 = vpack.c.b16 %v4445, %v4442
        %v4617 = vpack.c.b16 %v4446, %v4443
        %v4618 = vpack.c.b16 %v4447, %v4444
        %v4619 = vpack.c.b16 %v4451, %v4448
        %v4620 = vpack.c.b16 %v4452, %v4449
        %v4621 = vpack.c.b16 %v4453, %v4450
        %v4622 = vpack.c.b16 %v4457, %v4454
        %v4623 = vpack.c.b16 %v4458, %v4455
        %v4624 = vpack.c.b16 %v4459, %v4456
        %v4625 = vpack.c.b16 %v4463, %v4460
        %v4626 = vpack.c.b16 %v4464, %v4461
        %v4627 = vpack.c.b16 %v4465, %v4462
        %v4628 = vpack.c.b16 %v4469, %v4466
        %v4629 = vpack.c.b16 %v4470, %v4467
        %v4630 = vpack.c.b16 %v4471, %v4468
        %v4631 = vpack.c.b16 %v4475, %v4472
        %v4632 = vpack.c.b16 %v4476, %v4473
        %v4633 = vpack.c.b16 %v4477, %v4474
        %v4634 = vpack.c.b16 %v4481, %v4478
        %v4635 = vpack.c.b16 %v4482, %v4479
        %v4636 = vpack.c.b16 %v4483, %v4480
        %v4637 = vpack.c.b16 %v4487, %v4484
        %v4638 = vpack.c.b16 %v4488, %v4485
        %v4639 = vpack.c.b16 %v4489, %v4486
        %v4640 = vpack.c.b16 %v4493, %v4490
        %v4641 = vpack.c.b16 %v4494, %v4491
        %v4642 = vpack.c.b16 %v4495, %v4492
        %v4643 = vpack.c.b16 %v4499, %v4496
        %v4644 = vpack.c.b16 %v4500, %v4497
        %v4645 = vpack.c.b16 %v4501, %v4498
        %v4646 = vpack.c.b16 %v4505, %v4502
        %v4647 = vpack.c.b16 %v4506, %v4503
        %v4648 = vpack.c.b16 %v4507, %v4504
        %v4649 = vpack.c.b16 %v4511, %v4508
        %v4650 = vpack.c.b16 %v4512, %v4509
        %v4651 = vpack.c.b16 %v4513, %v4510
        %v4652 = vpack.c.b16 %v4517, %v4514
        %v4653 = vpack.c.b16 %v4518, %v4515
        %v4654 = vpack.c.b16 %v4519, %v4516
        %v4655 = vpack.c.b16 %v4523, %v4520
        %v4656 = vpack.c.b16 %v4524, %v4521
        %v4657 = vpack.c.b16 %v4525, %v4522
        %v4658 = vpack.c.b16 %v4529, %v4526
        %v4659 = vpack.c.b16 %v4530, %v4527
        %v4660 = vpack.c.b16 %v4531, %v4528
        %v4661 = vpack.c.b16 %v4535, %v4532
        %v4662 = vpack.c.b16 %v4536, %v4533
        %v4663 = vpack.c.b16 %v4537, %v4534
        %v4664 = vpack.c.b16 %v4541, %v4538
        %v4665 = vpack.c.b16 %v4542, %v4539
        %v4666 = vpack.c.b16 %v4543, %v4540
        %v4667 = vpack.c.b16 %v4547, %v4544
        %v4668 = vpack.c.b16 %v4548, %v4545
        %v4669 = vpack.c.b16 %v4549, %v4546
        %v4670 = vpack.c.b16 %v4553, %v4550
        %v4671 = vpack.c.b16 %v4554, %v4551
        %v4672 = vpack.c.b16 %v4555, %v4552
        %v4673 = vpack.c.b16 %v4559, %v4556
        %v4674 = vpack.c.b16 %v4560, %v4557
        %v4675 = vpack.c.b16 %v4561, %v4558
        %v4676 = vpack.c.b16 %v4565, %v4562
        %v4677 = vpack.c.b16 %v4566, %v4563
        %v4678 = vpack.c.b16 %v4567, %v4564
        %v4679 = vpack.c.b16 %v4571, %v4568
        %v4680 = vpack.c.b16 %v4572, %v4569
        %v4681 = vpack.c.b16 %v4573, %v4570
        %v4682 = vpack.c.b16 %v4577, %v4574
        %v4683 = vpack.c.b16 %v4578, %v4575
        %v4684 = vpack.c.b16 %v4579, %v4576
        %v4685 = vpack.c.b16 %v4583, %v4580
        %v4686 = vpack.c.b16 %v4584, %v4581
        %v4687 = vpack.c.b16 %v4585, %v4582
        %v4688 = vpack.c.b16 %v4589, %v4586
        %v4689 = vpack.c.b16 %v4590, %v4587
        %v4690 = vpack.c.b16 %v4591, %v4588
        %v4691 = vpack.c.b16 %v4595, %v4592
        %v4692 = vpack.c.b16 %v4596, %v4593
        %v4693 = vpack.c.b16 %v4597, %v4594
        %4790 = vmatpush.bf16.msra.mxu0 %v4619
        %4791 = vmatpush.bf16.msra.mxu0 %v4616
        %4792 = vmatpush.bf16.msra.mxu0 %v4613
        %4793 = vmatpush.bf16.msra.mxu0 %v4610
        %4794 = vmatpush.bf16.msra.mxu0 %v4607
        %4795 = vmatpush.bf16.msra.mxu0 %v4604
        %4796 = vmatpush.bf16.msra.mxu0 %v4601
        %4797 = vmatpush.bf16.msra.mxu0 %v4598
        %4798 = vmatmul.bf16.gmra.mxu0 %v4150
        %v4799 = vpop.f32.mrf.mxu0
        %v4800 = vadd.f32 %v3701, %v4799
        %v4801 = vpop.f32.mrf.mxu0
        %v4802 = vadd.f32 %v3703, %v4801
        %4803 = vmatmul.bf16.gmra.mxu0 %v4154
        %v4804 = vpop.f32.mrf.mxu0
        %v4805 = vadd.f32 %v3706, %v4804
        %v4806 = vpop.f32.mrf.mxu0
        %v4807 = vadd.f32 %v3708, %v4806
        %4808 = vmatmul.bf16.gmra.mxu0 %v4158
        %v4809 = vpop.f32.mrf.mxu0
        %v4810 = vadd.f32 %v3711, %v4809
        %v4811 = vpop.f32.mrf.mxu0
        %v4812 = vadd.f32 %v3713, %v4811
        %4813 = vmatmul.bf16.gmra.mxu0 %v4162
        %v4814 = vpop.f32.mrf.mxu0
        %v4815 = vadd.f32 %v3716, %v4814
        %v4816 = vpop.f32.mrf.mxu0
        %v4817 = vadd.f32 %v3718, %v4816
        %4818 = vmatmul.bf16.gmra.mxu0 %v4166
        %v4819 = vpop.f32.mrf.mxu0
        %v4820 = vadd.f32 %v3721, %v4819
        %v4821 = vpop.f32.mrf.mxu0
        %v4822 = vadd.f32 %v3723, %v4821
        %4823 = vmatmul.bf16.gmra.mxu0 %v4170
        %v4824 = vpop.f32.mrf.mxu0
        %v4825 = vadd.f32 %v3726, %v4824
        %v4826 = vpop.f32.mrf.mxu0
        %v4827 = vadd.f32 %v3728, %v4826
        %4828 = vmatmul.bf16.gmra.mxu0 %v4174
        %v4829 = vpop.f32.mrf.mxu0
        %v4830 = vadd.f32 %v3731, %v4829
        %v4831 = vpop.f32.mrf.mxu0
        %v4832 = vadd.f32 %v3733, %v4831
        %4833 = vmatmul.bf16.gmra.mxu0 %v4178
        %v4834 = vpop.f32.mrf.mxu0
        %v4835 = vadd.f32 %v3736, %v4834
        %v4836 = vpop.f32.mrf.mxu0
        %v4837 = vadd.f32 %v3738, %v4836
        %4838 = vmatmul.bf16.gmra.mxu0 %v4182
        %v4839 = vpop.f32.mrf.mxu0
        %v4840 = vadd.f32 %v3741, %v4839
        %v4841 = vpop.f32.mrf.mxu0
        %v4842 = vadd.f32 %v3743, %v4841
        %4843 = vmatmul.bf16.gmra.mxu0 %v4186
        %v4844 = vpop.f32.mrf.mxu0
        %v4845 = vadd.f32 %v3746, %v4844
        %v4846 = vpop.f32.mrf.mxu0
        %v4847 = vadd.f32 %v3748, %v4846
        %4848 = vmatmul.bf16.gmra.mxu0 %v4190
        %v4849 = vpop.f32.mrf.mxu0
        %v4850 = vadd.f32 %v3751, %v4849
        %v4851 = vpop.f32.mrf.mxu0
        %v4852 = vadd.f32 %v3753, %v4851
        %4853 = vmatmul.bf16.gmra.mxu0 %v4194
        %v4854 = vpop.f32.mrf.mxu0
        %v4855 = vadd.f32 %v3756, %v4854
        %v4856 = vpop.f32.mrf.mxu0
        %v4857 = vadd.f32 %v3758, %v4856
        %4858 = vmatmul.bf16.gmra.mxu0 %v4198
        %v4859 = vpop.f32.mrf.mxu0
        %v4860 = vadd.f32 %v3761, %v4859
        %v4861 = vpop.f32.mrf.mxu0
        %v4862 = vadd.f32 %v3763, %v4861
        %4863 = vmatmul.bf16.gmra.mxu0 %v4202
        %v4864 = vpop.f32.mrf.mxu0
        %v4865 = vadd.f32 %v3766, %v4864
        %v4866 = vpop.f32.mrf.mxu0
        %v4867 = vadd.f32 %v3768, %v4866
        %4868 = vmatmul.bf16.gmra.mxu0 %v4206
        %v4869 = vpop.f32.mrf.mxu0
        %v4870 = vadd.f32 %v3771, %v4869
        %v4871 = vpop.f32.mrf.mxu0
        %v4872 = vadd.f32 %v3773, %v4871
        %4873 = vmatmul.bf16.gmra.mxu0 %v4210
        %v4874 = vpop.f32.mrf.mxu0
        %v4875 = vadd.f32 %v3776, %v4874
        %v4876 = vpop.f32.mrf.mxu0
        %v4877 = vadd.f32 %v3778, %v4876
        %4878 = vdwg.mxu0
        %4879 = vmatpush.bf16.msra.mxu0 %v4643
        %4880 = vmatpush.bf16.msra.mxu0 %v4640
        %4881 = vmatpush.bf16.msra.mxu0 %v4637
        %4882 = vmatpush.bf16.msra.mxu0 %v4634
        %4883 = vmatpush.bf16.msra.mxu0 %v4631
        %4884 = vmatpush.bf16.msra.mxu0 %v4628
        %4885 = vmatpush.bf16.msra.mxu0 %v4625
        %4886 = vmatpush.bf16.msra.mxu0 %v4622
        %4887 = vmatmul.bf16.gmra.mxu0 %v4151
        %v4888 = vpop.f32.mrf.mxu0
        %v4889 = vadd.f32 %v4800, %v4888
        %v4890 = vpop.f32.mrf.mxu0
        %v4891 = vadd.f32 %v4802, %v4890
        %4892 = vmatmul.bf16.gmra.mxu0 %v4155
        %v4893 = vpop.f32.mrf.mxu0
        %v4894 = vadd.f32 %v4805, %v4893
        %v4895 = vpop.f32.mrf.mxu0
        %v4896 = vadd.f32 %v4807, %v4895
        %4897 = vmatmul.bf16.gmra.mxu0 %v4159
        %v4898 = vpop.f32.mrf.mxu0
        %v4899 = vadd.f32 %v4810, %v4898
        %v4900 = vpop.f32.mrf.mxu0
        %v4901 = vadd.f32 %v4812, %v4900
        %4902 = vmatmul.bf16.gmra.mxu0 %v4163
        %v4903 = vpop.f32.mrf.mxu0
        %v4904 = vadd.f32 %v4815, %v4903
        %v4905 = vpop.f32.mrf.mxu0
        %v4906 = vadd.f32 %v4817, %v4905
        %4907 = vmatmul.bf16.gmra.mxu0 %v4167
        %v4908 = vpop.f32.mrf.mxu0
        %v4909 = vadd.f32 %v4820, %v4908
        %v4910 = vpop.f32.mrf.mxu0
        %v4911 = vadd.f32 %v4822, %v4910
        %4912 = vmatmul.bf16.gmra.mxu0 %v4171
        %v4913 = vpop.f32.mrf.mxu0
        %v4914 = vadd.f32 %v4825, %v4913
        %v4915 = vpop.f32.mrf.mxu0
        %v4916 = vadd.f32 %v4827, %v4915
        %4917 = vmatmul.bf16.gmra.mxu0 %v4175
        %v4918 = vpop.f32.mrf.mxu0
        %v4919 = vadd.f32 %v4830, %v4918
        %v4920 = vpop.f32.mrf.mxu0
        %v4921 = vadd.f32 %v4832, %v4920
        %4922 = vmatmul.bf16.gmra.mxu0 %v4179
        %v4923 = vpop.f32.mrf.mxu0
        %v4924 = vadd.f32 %v4835, %v4923
        %v4925 = vpop.f32.mrf.mxu0
        %v4926 = vadd.f32 %v4837, %v4925
        %4927 = vmatmul.bf16.gmra.mxu0 %v4183
        %v4928 = vpop.f32.mrf.mxu0
        %v4929 = vadd.f32 %v4840, %v4928
        %v4930 = vpop.f32.mrf.mxu0
        %v4931 = vadd.f32 %v4842, %v4930
        %4932 = vmatmul.bf16.gmra.mxu0 %v4187
        %v4933 = vpop.f32.mrf.mxu0
        %v4934 = vadd.f32 %v4845, %v4933
        %v4935 = vpop.f32.mrf.mxu0
        %v4936 = vadd.f32 %v4847, %v4935
        %4937 = vmatmul.bf16.gmra.mxu0 %v4191
        %v4938 = vpop.f32.mrf.mxu0
        %v4939 = vadd.f32 %v4850, %v4938
        %v4940 = vpop.f32.mrf.mxu0
        %v4941 = vadd.f32 %v4852, %v4940
        %4942 = vmatmul.bf16.gmra.mxu0 %v4195
        %v4943 = vpop.f32.mrf.mxu0
        %v4944 = vadd.f32 %v4855, %v4943
        %v4945 = vpop.f32.mrf.mxu0
        %v4946 = vadd.f32 %v4857, %v4945
        %4947 = vmatmul.bf16.gmra.mxu0 %v4199
        %v4948 = vpop.f32.mrf.mxu0
        %v4949 = vadd.f32 %v4860, %v4948
        %v4950 = vpop.f32.mrf.mxu0
        %v4951 = vadd.f32 %v4862, %v4950
        %4952 = vmatmul.bf16.gmra.mxu0 %v4203
        %v4953 = vpop.f32.mrf.mxu0
        %v4954 = vadd.f32 %v4865, %v4953
        %v4955 = vpop.f32.mrf.mxu0
        %v4956 = vadd.f32 %v4867, %v4955
        %4957 = vmatmul.bf16.gmra.mxu0 %v4207
        %v4958 = vpop.f32.mrf.mxu0
        %v4959 = vadd.f32 %v4870, %v4958
        %v4960 = vpop.f32.mrf.mxu0
        %v4961 = vadd.f32 %v4872, %v4960
        %4962 = vmatmul.bf16.gmra.mxu0 %v4211
        %v4963 = vpop.f32.mrf.mxu0
        %v4964 = vadd.f32 %v4875, %v4963
        %v4965 = vpop.f32.mrf.mxu0
        %v4966 = vadd.f32 %v4877, %v4965
        %4967 = vdwg.mxu0
        %4968 = vmatpush.bf16.msra.mxu0 %v4667
        %4969 = vmatpush.bf16.msra.mxu0 %v4664
        %4970 = vmatpush.bf16.msra.mxu0 %v4661
        %4971 = vmatpush.bf16.msra.mxu0 %v4658
        %4972 = vmatpush.bf16.msra.mxu0 %v4655
        %4973 = vmatpush.bf16.msra.mxu0 %v4652
        %4974 = vmatpush.bf16.msra.mxu0 %v4649
        %4975 = vmatpush.bf16.msra.mxu0 %v4646
        %4976 = vmatmul.bf16.gmra.mxu0 %v4152
        %v4977 = vpop.f32.mrf.mxu0
        %v4978 = vadd.f32 %v4889, %v4977
        %v4979 = vpop.f32.mrf.mxu0
        %v4980 = vadd.f32 %v4891, %v4979
        %4981 = vmatmul.bf16.gmra.mxu0 %v4156
        %v4982 = vpop.f32.mrf.mxu0
        %v4983 = vadd.f32 %v4894, %v4982
        %v4984 = vpop.f32.mrf.mxu0
        %v4985 = vadd.f32 %v4896, %v4984
        %4986 = vmatmul.bf16.gmra.mxu0 %v4160
        %v4987 = vpop.f32.mrf.mxu0
        %v4988 = vadd.f32 %v4899, %v4987
        %v4989 = vpop.f32.mrf.mxu0
        %v4990 = vadd.f32 %v4901, %v4989
        %4991 = vmatmul.bf16.gmra.mxu0 %v4164
        %v4992 = vpop.f32.mrf.mxu0
        %v4993 = vadd.f32 %v4904, %v4992
        %v4994 = vpop.f32.mrf.mxu0
        %v4995 = vadd.f32 %v4906, %v4994
        %4996 = vmatmul.bf16.gmra.mxu0 %v4168
        %v4997 = vpop.f32.mrf.mxu0
        %v4998 = vadd.f32 %v4909, %v4997
        %v4999 = vpop.f32.mrf.mxu0
        %v5000 = vadd.f32 %v4911, %v4999
        %5001 = vmatmul.bf16.gmra.mxu0 %v4172
        %v5002 = vpop.f32.mrf.mxu0
        %v5003 = vadd.f32 %v4914, %v5002
        %v5004 = vpop.f32.mrf.mxu0
        %v5005 = vadd.f32 %v4916, %v5004
        %5006 = vmatmul.bf16.gmra.mxu0 %v4176
        %v5007 = vpop.f32.mrf.mxu0
        %v5008 = vadd.f32 %v4919, %v5007
        %v5009 = vpop.f32.mrf.mxu0
        %v5010 = vadd.f32 %v4921, %v5009
        %5011 = vmatmul.bf16.gmra.mxu0 %v4180
        %v5012 = vpop.f32.mrf.mxu0
        %v5013 = vadd.f32 %v4924, %v5012
        %v5014 = vpop.f32.mrf.mxu0
        %v5015 = vadd.f32 %v4926, %v5014
        %5016 = vmatmul.bf16.gmra.mxu0 %v4184
        %v5017 = vpop.f32.mrf.mxu0
        %v5018 = vadd.f32 %v4929, %v5017
        %v5019 = vpop.f32.mrf.mxu0
        %v5020 = vadd.f32 %v4931, %v5019
        %5021 = vmatmul.bf16.gmra.mxu0 %v4188
        %v5022 = vpop.f32.mrf.mxu0
        %v5023 = vadd.f32 %v4934, %v5022
        %v5024 = vpop.f32.mrf.mxu0
        %v5025 = vadd.f32 %v4936, %v5024
        %5026 = vmatmul.bf16.gmra.mxu0 %v4192
        %v5027 = vpop.f32.mrf.mxu0
        %v5028 = vadd.f32 %v4939, %v5027
        %v5029 = vpop.f32.mrf.mxu0
        %v5030 = vadd.f32 %v4941, %v5029
        %5031 = vmatmul.bf16.gmra.mxu0 %v4196
        %v5032 = vpop.f32.mrf.mxu0
        %v5033 = vadd.f32 %v4944, %v5032
        %v5034 = vpop.f32.mrf.mxu0
        %v5035 = vadd.f32 %v4946, %v5034
        %5036 = vmatmul.bf16.gmra.mxu0 %v4200
        %v5037 = vpop.f32.mrf.mxu0
        %v5038 = vadd.f32 %v4949, %v5037
        %v5039 = vpop.f32.mrf.mxu0
        %v5040 = vadd.f32 %v4951, %v5039
        %5041 = vmatmul.bf16.gmra.mxu0 %v4204
        %v5042 = vpop.f32.mrf.mxu0
        %v5043 = vadd.f32 %v4954, %v5042
        %v5044 = vpop.f32.mrf.mxu0
        %v5045 = vadd.f32 %v4956, %v5044
        %5046 = vmatmul.bf16.gmra.mxu0 %v4208
        %v5047 = vpop.f32.mrf.mxu0
        %v5048 = vadd.f32 %v4959, %v5047
        %v5049 = vpop.f32.mrf.mxu0
        %v5050 = vadd.f32 %v4961, %v5049
        %5051 = vmatmul.bf16.gmra.mxu0 %v4212
        %v5052 = vpop.f32.mrf.mxu0
        %v5053 = vadd.f32 %v4964, %v5052
        %v5054 = vpop.f32.mrf.mxu0
        %v5055 = vadd.f32 %v4966, %v5054
        %5056 = vdwg.mxu0
        %5057 = vmatpush.bf16.msra.mxu0 %v4691
        %5058 = vmatpush.bf16.msra.mxu0 %v4688
        %5059 = vmatpush.bf16.msra.mxu0 %v4685
        %5060 = vmatpush.bf16.msra.mxu0 %v4682
        %5061 = vmatpush.bf16.msra.mxu0 %v4679
        %5062 = vmatpush.bf16.msra.mxu0 %v4676
        %5063 = vmatpush.bf16.msra.mxu0 %v4673
        %5064 = vmatpush.bf16.msra.mxu0 %v4670
        %5065 = vmatmul.bf16.gmra.mxu0 %v4153
        %v5066 = vpop.f32.mrf.mxu0
        %v5067 = vadd.f32 %v4978, %v5066
        %v5068 = vpop.f32.mrf.mxu0
        %v5069 = vadd.f32 %v4980, %v5068
        %5070 = vmatmul.bf16.gmra.mxu0 %v4157
        %v5071 = vpop.f32.mrf.mxu0
        %v5072 = vadd.f32 %v4983, %v5071
        %v5073 = vpop.f32.mrf.mxu0
        %v5074 = vadd.f32 %v4985, %v5073
        %5075 = vmatmul.bf16.gmra.mxu0 %v4161
        %v5076 = vpop.f32.mrf.mxu0
        %v5077 = vadd.f32 %v4988, %v5076
        %v5078 = vpop.f32.mrf.mxu0
        %v5079 = vadd.f32 %v4990, %v5078
        %5080 = vmatmul.bf16.gmra.mxu0 %v4165
        %v5081 = vpop.f32.mrf.mxu0
        %v5082 = vadd.f32 %v4993, %v5081
        %v5083 = vpop.f32.mrf.mxu0
        %v5084 = vadd.f32 %v4995, %v5083
        %5085 = vmatmul.bf16.gmra.mxu0 %v4169
        %v5086 = vpop.f32.mrf.mxu0
        %v5087 = vadd.f32 %v4998, %v5086
        %v5088 = vpop.f32.mrf.mxu0
        %v5089 = vadd.f32 %v5000, %v5088
        %5090 = vmatmul.bf16.gmra.mxu0 %v4173
        %v5091 = vpop.f32.mrf.mxu0
        %v5092 = vadd.f32 %v5003, %v5091
        %v5093 = vpop.f32.mrf.mxu0
        %v5094 = vadd.f32 %v5005, %v5093
        %5095 = vmatmul.bf16.gmra.mxu0 %v4177
        %v5096 = vpop.f32.mrf.mxu0
        %v5097 = vadd.f32 %v5008, %v5096
        %v5098 = vpop.f32.mrf.mxu0
        %v5099 = vadd.f32 %v5010, %v5098
        %5100 = vmatmul.bf16.gmra.mxu0 %v4181
        %v5101 = vpop.f32.mrf.mxu0
        %v5102 = vadd.f32 %v5013, %v5101
        %v5103 = vpop.f32.mrf.mxu0
        %v5104 = vadd.f32 %v5015, %v5103
        %5105 = vmatmul.bf16.gmra.mxu0 %v4185
        %v5106 = vpop.f32.mrf.mxu0
        %v5107 = vadd.f32 %v5018, %v5106
        %v5108 = vpop.f32.mrf.mxu0
        %v5109 = vadd.f32 %v5020, %v5108
        %5110 = vmatmul.bf16.gmra.mxu0 %v4189
        %v5111 = vpop.f32.mrf.mxu0
        %v5112 = vadd.f32 %v5023, %v5111
        %v5113 = vpop.f32.mrf.mxu0
        %v5114 = vadd.f32 %v5025, %v5113
        %5115 = vmatmul.bf16.gmra.mxu0 %v4193
        %v5116 = vpop.f32.mrf.mxu0
        %v5117 = vadd.f32 %v5028, %v5116
        %v5118 = vpop.f32.mrf.mxu0
        %v5119 = vadd.f32 %v5030, %v5118
        %5120 = vmatmul.bf16.gmra.mxu0 %v4197
        %v5121 = vpop.f32.mrf.mxu0
        %v5122 = vadd.f32 %v5033, %v5121
        %v5123 = vpop.f32.mrf.mxu0
        %v5124 = vadd.f32 %v5035, %v5123
        %5125 = vmatmul.bf16.gmra.mxu0 %v4201
        %v5126 = vpop.f32.mrf.mxu0
        %v5127 = vadd.f32 %v5038, %v5126
        %v5128 = vpop.f32.mrf.mxu0
        %v5129 = vadd.f32 %v5040, %v5128
        %5130 = vmatmul.bf16.gmra.mxu0 %v4205
        %v5131 = vpop.f32.mrf.mxu0
        %v5132 = vadd.f32 %v5043, %v5131
        %v5133 = vpop.f32.mrf.mxu0
        %v5134 = vadd.f32 %v5045, %v5133
        %5135 = vmatmul.bf16.gmra.mxu0 %v4209
        %v5136 = vpop.f32.mrf.mxu0
        %v5137 = vadd.f32 %v5048, %v5136
        %v5138 = vpop.f32.mrf.mxu0
        %v5139 = vadd.f32 %v5050, %v5138
        %5140 = vmatmul.bf16.gmra.mxu0 %v4213
        %v5141 = vpop.f32.mrf.mxu0
        %v5142 = vadd.f32 %v5053, %v5141
        %v5143 = vpop.f32.mrf.mxu0
        %v5144 = vadd.f32 %v5055, %v5143
        %5145 = vdwg.mxu0
        %5146 = vmatpush.bf16.msra.mxu0 %v4620
        %5147 = vmatpush.bf16.msra.mxu0 %v4617
        %5148 = vmatpush.bf16.msra.mxu0 %v4614
        %5149 = vmatpush.bf16.msra.mxu0 %v4611
        %5150 = vmatpush.bf16.msra.mxu0 %v4608
        %5151 = vmatpush.bf16.msra.mxu0 %v4605
        %5152 = vmatpush.bf16.msra.mxu0 %v4602
        %5153 = vmatpush.bf16.msra.mxu0 %v4599
        %5154 = vmatmul.bf16.gmra.mxu0 %v4150
        %v5155 = vpop.f32.mrf.mxu0
        %v5156 = vadd.f32 %v3790, %v5155
        %v5157 = vpop.f32.mrf.mxu0
        %v5158 = vadd.f32 %v3792, %v5157
        %5159 = vmatmul.bf16.gmra.mxu0 %v4154
        %v5160 = vpop.f32.mrf.mxu0
        %v5161 = vadd.f32 %v3795, %v5160
        %v5162 = vpop.f32.mrf.mxu0
        %v5163 = vadd.f32 %v3797, %v5162
        %5164 = vmatmul.bf16.gmra.mxu0 %v4158
        %v5165 = vpop.f32.mrf.mxu0
        %v5166 = vadd.f32 %v3800, %v5165
        %v5167 = vpop.f32.mrf.mxu0
        %v5168 = vadd.f32 %v3802, %v5167
        %5169 = vmatmul.bf16.gmra.mxu0 %v4162
        %v5170 = vpop.f32.mrf.mxu0
        %v5171 = vadd.f32 %v3805, %v5170
        %v5172 = vpop.f32.mrf.mxu0
        %v5173 = vadd.f32 %v3807, %v5172
        %5174 = vmatmul.bf16.gmra.mxu0 %v4166
        %v5175 = vpop.f32.mrf.mxu0
        %v5176 = vadd.f32 %v3810, %v5175
        %v5177 = vpop.f32.mrf.mxu0
        %v5178 = vadd.f32 %v3812, %v5177
        %5179 = vmatmul.bf16.gmra.mxu0 %v4170
        %v5180 = vpop.f32.mrf.mxu0
        %v5181 = vadd.f32 %v3815, %v5180
        %v5182 = vpop.f32.mrf.mxu0
        %v5183 = vadd.f32 %v3817, %v5182
        %5184 = vmatmul.bf16.gmra.mxu0 %v4174
        %v5185 = vpop.f32.mrf.mxu0
        %v5186 = vadd.f32 %v3820, %v5185
        %v5187 = vpop.f32.mrf.mxu0
        %v5188 = vadd.f32 %v3822, %v5187
        %5189 = vmatmul.bf16.gmra.mxu0 %v4178
        %v5190 = vpop.f32.mrf.mxu0
        %v5191 = vadd.f32 %v3825, %v5190
        %v5192 = vpop.f32.mrf.mxu0
        %v5193 = vadd.f32 %v3827, %v5192
        %5194 = vmatmul.bf16.gmra.mxu0 %v4182
        %v5195 = vpop.f32.mrf.mxu0
        %v5196 = vadd.f32 %v3830, %v5195
        %v5197 = vpop.f32.mrf.mxu0
        %v5198 = vadd.f32 %v3832, %v5197
        %5199 = vmatmul.bf16.gmra.mxu0 %v4186
        %v5200 = vpop.f32.mrf.mxu0
        %v5201 = vadd.f32 %v3835, %v5200
        %v5202 = vpop.f32.mrf.mxu0
        %v5203 = vadd.f32 %v3837, %v5202
        %5204 = vmatmul.bf16.gmra.mxu0 %v4190
        %v5205 = vpop.f32.mrf.mxu0
        %v5206 = vadd.f32 %v3840, %v5205
        %v5207 = vpop.f32.mrf.mxu0
        %v5208 = vadd.f32 %v3842, %v5207
        %5209 = vmatmul.bf16.gmra.mxu0 %v4194
        %v5210 = vpop.f32.mrf.mxu0
        %v5211 = vadd.f32 %v3845, %v5210
        %v5212 = vpop.f32.mrf.mxu0
        %v5213 = vadd.f32 %v3847, %v5212
        %5214 = vmatmul.bf16.gmra.mxu0 %v4198
        %v5215 = vpop.f32.mrf.mxu0
        %v5216 = vadd.f32 %v3850, %v5215
        %v5217 = vpop.f32.mrf.mxu0
        %v5218 = vadd.f32 %v3852, %v5217
        %5219 = vmatmul.bf16.gmra.mxu0 %v4202
        %v5220 = vpop.f32.mrf.mxu0
        %v5221 = vadd.f32 %v3855, %v5220
        %v5222 = vpop.f32.mrf.mxu0
        %v5223 = vadd.f32 %v3857, %v5222
        %5224 = vmatmul.bf16.gmra.mxu0 %v4206
        %v5225 = vpop.f32.mrf.mxu0
        %v5226 = vadd.f32 %v3860, %v5225
        %v5227 = vpop.f32.mrf.mxu0
        %v5228 = vadd.f32 %v3862, %v5227
        %5229 = vmatmul.bf16.gmra.mxu0 %v4210
        %v5230 = vpop.f32.mrf.mxu0
        %v5231 = vadd.f32 %v3865, %v5230
        %v5232 = vpop.f32.mrf.mxu0
        %v5233 = vadd.f32 %v3867, %v5232
        %5234 = vdwg.mxu0
        %5235 = vmatpush.bf16.msra.mxu0 %v4644
        %5236 = vmatpush.bf16.msra.mxu0 %v4641
        %5237 = vmatpush.bf16.msra.mxu0 %v4638
        %5238 = vmatpush.bf16.msra.mxu0 %v4635
        %5239 = vmatpush.bf16.msra.mxu0 %v4632
        %5240 = vmatpush.bf16.msra.mxu0 %v4629
        %5241 = vmatpush.bf16.msra.mxu0 %v4626
        %5242 = vmatpush.bf16.msra.mxu0 %v4623
        %5243 = vmatmul.bf16.gmra.mxu0 %v4151
        %v5244 = vpop.f32.mrf.mxu0
        %v5245 = vadd.f32 %v5156, %v5244
        %v5246 = vpop.f32.mrf.mxu0
        %v5247 = vadd.f32 %v5158, %v5246
        %5248 = vmatmul.bf16.gmra.mxu0 %v4155
        %v5249 = vpop.f32.mrf.mxu0
        %v5250 = vadd.f32 %v5161, %v5249
        %v5251 = vpop.f32.mrf.mxu0
        %v5252 = vadd.f32 %v5163, %v5251
        %5253 = vmatmul.bf16.gmra.mxu0 %v4159
        %v5254 = vpop.f32.mrf.mxu0
        %v5255 = vadd.f32 %v5166, %v5254
        %v5256 = vpop.f32.mrf.mxu0
        %v5257 = vadd.f32 %v5168, %v5256
        %5258 = vmatmul.bf16.gmra.mxu0 %v4163
        %v5259 = vpop.f32.mrf.mxu0
        %v5260 = vadd.f32 %v5171, %v5259
        %v5261 = vpop.f32.mrf.mxu0
        %v5262 = vadd.f32 %v5173, %v5261
        %5263 = vmatmul.bf16.gmra.mxu0 %v4167
        %v5264 = vpop.f32.mrf.mxu0
        %v5265 = vadd.f32 %v5176, %v5264
        %v5266 = vpop.f32.mrf.mxu0
        %v5267 = vadd.f32 %v5178, %v5266
        %5268 = vmatmul.bf16.gmra.mxu0 %v4171
        %v5269 = vpop.f32.mrf.mxu0
        %v5270 = vadd.f32 %v5181, %v5269
        %v5271 = vpop.f32.mrf.mxu0
        %v5272 = vadd.f32 %v5183, %v5271
        %5273 = vmatmul.bf16.gmra.mxu0 %v4175
        %v5274 = vpop.f32.mrf.mxu0
        %v5275 = vadd.f32 %v5186, %v5274
        %v5276 = vpop.f32.mrf.mxu0
        %v5277 = vadd.f32 %v5188, %v5276
        %5278 = vmatmul.bf16.gmra.mxu0 %v4179
        %v5279 = vpop.f32.mrf.mxu0
        %v5280 = vadd.f32 %v5191, %v5279
        %v5281 = vpop.f32.mrf.mxu0
        %v5282 = vadd.f32 %v5193, %v5281
        %5283 = vmatmul.bf16.gmra.mxu0 %v4183
        %v5284 = vpop.f32.mrf.mxu0
        %v5285 = vadd.f32 %v5196, %v5284
        %v5286 = vpop.f32.mrf.mxu0
        %v5287 = vadd.f32 %v5198, %v5286
        %5288 = vmatmul.bf16.gmra.mxu0 %v4187
        %v5289 = vpop.f32.mrf.mxu0
        %v5290 = vadd.f32 %v5201, %v5289
        %v5291 = vpop.f32.mrf.mxu0
        %v5292 = vadd.f32 %v5203, %v5291
        %5293 = vmatmul.bf16.gmra.mxu0 %v4191
        %v5294 = vpop.f32.mrf.mxu0
        %v5295 = vadd.f32 %v5206, %v5294
        %v5296 = vpop.f32.mrf.mxu0
        %v5297 = vadd.f32 %v5208, %v5296
        %5298 = vmatmul.bf16.gmra.mxu0 %v4195
        %v5299 = vpop.f32.mrf.mxu0
        %v5300 = vadd.f32 %v5211, %v5299
        %v5301 = vpop.f32.mrf.mxu0
        %v5302 = vadd.f32 %v5213, %v5301
        %5303 = vmatmul.bf16.gmra.mxu0 %v4199
        %v5304 = vpop.f32.mrf.mxu0
        %v5305 = vadd.f32 %v5216, %v5304
        %v5306 = vpop.f32.mrf.mxu0
        %v5307 = vadd.f32 %v5218, %v5306
        %5308 = vmatmul.bf16.gmra.mxu0 %v4203
        %v5309 = vpop.f32.mrf.mxu0
        %v5310 = vadd.f32 %v5221, %v5309
        %v5311 = vpop.f32.mrf.mxu0
        %v5312 = vadd.f32 %v5223, %v5311
        %5313 = vmatmul.bf16.gmra.mxu0 %v4207
        %v5314 = vpop.f32.mrf.mxu0
        %v5315 = vadd.f32 %v5226, %v5314
        %v5316 = vpop.f32.mrf.mxu0
        %v5317 = vadd.f32 %v5228, %v5316
        %5318 = vmatmul.bf16.gmra.mxu0 %v4211
        %v5319 = vpop.f32.mrf.mxu0
        %v5320 = vadd.f32 %v5231, %v5319
        %v5321 = vpop.f32.mrf.mxu0
        %v5322 = vadd.f32 %v5233, %v5321
        %5323 = vdwg.mxu0
        %5324 = vmatpush.bf16.msra.mxu0 %v4668
        %5325 = vmatpush.bf16.msra.mxu0 %v4665
        %5326 = vmatpush.bf16.msra.mxu0 %v4662
        %5327 = vmatpush.bf16.msra.mxu0 %v4659
        %5328 = vmatpush.bf16.msra.mxu0 %v4656
        %5329 = vmatpush.bf16.msra.mxu0 %v4653
        %5330 = vmatpush.bf16.msra.mxu0 %v4650
        %5331 = vmatpush.bf16.msra.mxu0 %v4647
        %5332 = vmatmul.bf16.gmra.mxu0 %v4152
        %v5333 = vpop.f32.mrf.mxu0
        %v5334 = vadd.f32 %v5245, %v5333
        %v5335 = vpop.f32.mrf.mxu0
        %v5336 = vadd.f32 %v5247, %v5335
        %5337 = vmatmul.bf16.gmra.mxu0 %v4156
        %v5338 = vpop.f32.mrf.mxu0
        %v5339 = vadd.f32 %v5250, %v5338
        %v5340 = vpop.f32.mrf.mxu0
        %v5341 = vadd.f32 %v5252, %v5340
        %5342 = vmatmul.bf16.gmra.mxu0 %v4160
        %v5343 = vpop.f32.mrf.mxu0
        %v5344 = vadd.f32 %v5255, %v5343
        %v5345 = vpop.f32.mrf.mxu0
        %v5346 = vadd.f32 %v5257, %v5345
        %5347 = vmatmul.bf16.gmra.mxu0 %v4164
        %v5348 = vpop.f32.mrf.mxu0
        %v5349 = vadd.f32 %v5260, %v5348
        %v5350 = vpop.f32.mrf.mxu0
        %v5351 = vadd.f32 %v5262, %v5350
        %5352 = vmatmul.bf16.gmra.mxu0 %v4168
        %v5353 = vpop.f32.mrf.mxu0
        %v5354 = vadd.f32 %v5265, %v5353
        %v5355 = vpop.f32.mrf.mxu0
        %v5356 = vadd.f32 %v5267, %v5355
        %5357 = vmatmul.bf16.gmra.mxu0 %v4172
        %v5358 = vpop.f32.mrf.mxu0
        %v5359 = vadd.f32 %v5270, %v5358
        %v5360 = vpop.f32.mrf.mxu0
        %v5361 = vadd.f32 %v5272, %v5360
        %5362 = vmatmul.bf16.gmra.mxu0 %v4176
        %v5363 = vpop.f32.mrf.mxu0
        %v5364 = vadd.f32 %v5275, %v5363
        %v5365 = vpop.f32.mrf.mxu0
        %v5366 = vadd.f32 %v5277, %v5365
        %5367 = vmatmul.bf16.gmra.mxu0 %v4180
        %v5368 = vpop.f32.mrf.mxu0
        %v5369 = vadd.f32 %v5280, %v5368
        %v5370 = vpop.f32.mrf.mxu0
        %v5371 = vadd.f32 %v5282, %v5370
        %5372 = vmatmul.bf16.gmra.mxu0 %v4184
        %v5373 = vpop.f32.mrf.mxu0
        %v5374 = vadd.f32 %v5285, %v5373
        %v5375 = vpop.f32.mrf.mxu0
        %v5376 = vadd.f32 %v5287, %v5375
        %5377 = vmatmul.bf16.gmra.mxu0 %v4188
        %v5378 = vpop.f32.mrf.mxu0
        %v5379 = vadd.f32 %v5290, %v5378
        %v5380 = vpop.f32.mrf.mxu0
        %v5381 = vadd.f32 %v5292, %v5380
        %5382 = vmatmul.bf16.gmra.mxu0 %v4192
        %v5383 = vpop.f32.mrf.mxu0
        %v5384 = vadd.f32 %v5295, %v5383
        %v5385 = vpop.f32.mrf.mxu0
        %v5386 = vadd.f32 %v5297, %v5385
        %5387 = vmatmul.bf16.gmra.mxu0 %v4196
        %v5388 = vpop.f32.mrf.mxu0
        %v5389 = vadd.f32 %v5300, %v5388
        %v5390 = vpop.f32.mrf.mxu0
        %v5391 = vadd.f32 %v5302, %v5390
        %5392 = vmatmul.bf16.gmra.mxu0 %v4200
        %v5393 = vpop.f32.mrf.mxu0
        %v5394 = vadd.f32 %v5305, %v5393
        %v5395 = vpop.f32.mrf.mxu0
        %v5396 = vadd.f32 %v5307, %v5395
        %5397 = vmatmul.bf16.gmra.mxu0 %v4204
        %v5398 = vpop.f32.mrf.mxu0
        %v5399 = vadd.f32 %v5310, %v5398
        %v5400 = vpop.f32.mrf.mxu0
        %v5401 = vadd.f32 %v5312, %v5400
        %5402 = vmatmul.bf16.gmra.mxu0 %v4208
        %v5403 = vpop.f32.mrf.mxu0
        %v5404 = vadd.f32 %v5315, %v5403
        %v5405 = vpop.f32.mrf.mxu0
        %v5406 = vadd.f32 %v5317, %v5405
        %5407 = vmatmul.bf16.gmra.mxu0 %v4212
        %v5408 = vpop.f32.mrf.mxu0
        %v5409 = vadd.f32 %v5320, %v5408
        %v5410 = vpop.f32.mrf.mxu0
        %v5411 = vadd.f32 %v5322, %v5410
        %5412 = vdwg.mxu0
        %5413 = vmatpush.bf16.msra.mxu0 %v4692
        %5414 = vmatpush.bf16.msra.mxu0 %v4689
        %5415 = vmatpush.bf16.msra.mxu0 %v4686
        %5416 = vmatpush.bf16.msra.mxu0 %v4683
        %5417 = vmatpush.bf16.msra.mxu0 %v4680
        %5418 = vmatpush.bf16.msra.mxu0 %v4677
        %5419 = vmatpush.bf16.msra.mxu0 %v4674
        %5420 = vmatpush.bf16.msra.mxu0 %v4671
        %5421 = vmatmul.bf16.gmra.mxu0 %v4153
        %v5422 = vpop.f32.mrf.mxu0
        %v5423 = vadd.f32 %v5334, %v5422
        %v5424 = vpop.f32.mrf.mxu0
        %v5425 = vadd.f32 %v5336, %v5424
        %5426 = vmatmul.bf16.gmra.mxu0 %v4157
        %v5427 = vpop.f32.mrf.mxu0
        %v5428 = vadd.f32 %v5339, %v5427
        %v5429 = vpop.f32.mrf.mxu0
        %v5430 = vadd.f32 %v5341, %v5429
        %5431 = vmatmul.bf16.gmra.mxu0 %v4161
        %v5432 = vpop.f32.mrf.mxu0
        %v5433 = vadd.f32 %v5344, %v5432
        %v5434 = vpop.f32.mrf.mxu0
        %v5435 = vadd.f32 %v5346, %v5434
        %5436 = vmatmul.bf16.gmra.mxu0 %v4165
        %v5437 = vpop.f32.mrf.mxu0
        %v5438 = vadd.f32 %v5349, %v5437
        %v5439 = vpop.f32.mrf.mxu0
        %v5440 = vadd.f32 %v5351, %v5439
        %5441 = vmatmul.bf16.gmra.mxu0 %v4169
        %v5442 = vpop.f32.mrf.mxu0
        %v5443 = vadd.f32 %v5354, %v5442
        %v5444 = vpop.f32.mrf.mxu0
        %v5445 = vadd.f32 %v5356, %v5444
        %5446 = vmatmul.bf16.gmra.mxu0 %v4173
        %v5447 = vpop.f32.mrf.mxu0
        %v5448 = vadd.f32 %v5359, %v5447
        %v5449 = vpop.f32.mrf.mxu0
        %v5450 = vadd.f32 %v5361, %v5449
        %5451 = vmatmul.bf16.gmra.mxu0 %v4177
        %v5452 = vpop.f32.mrf.mxu0
        %v5453 = vadd.f32 %v5364, %v5452
        %v5454 = vpop.f32.mrf.mxu0
        %v5455 = vadd.f32 %v5366, %v5454
        %5456 = vmatmul.bf16.gmra.mxu0 %v4181
        %v5457 = vpop.f32.mrf.mxu0
        %v5458 = vadd.f32 %v5369, %v5457
        %v5459 = vpop.f32.mrf.mxu0
        %v5460 = vadd.f32 %v5371, %v5459
        %5461 = vmatmul.bf16.gmra.mxu0 %v4185
        %v5462 = vpop.f32.mrf.mxu0
        %v5463 = vadd.f32 %v5374, %v5462
        %v5464 = vpop.f32.mrf.mxu0
        %v5465 = vadd.f32 %v5376, %v5464
        %5466 = vmatmul.bf16.gmra.mxu0 %v4189
        %v5467 = vpop.f32.mrf.mxu0
        %v5468 = vadd.f32 %v5379, %v5467
        %v5469 = vpop.f32.mrf.mxu0
        %v5470 = vadd.f32 %v5381, %v5469
        %5471 = vmatmul.bf16.gmra.mxu0 %v4193
        %v5472 = vpop.f32.mrf.mxu0
        %v5473 = vadd.f32 %v5384, %v5472
        %v5474 = vpop.f32.mrf.mxu0
        %v5475 = vadd.f32 %v5386, %v5474
        %5476 = vmatmul.bf16.gmra.mxu0 %v4197
        %v5477 = vpop.f32.mrf.mxu0
        %v5478 = vadd.f32 %v5389, %v5477
        %v5479 = vpop.f32.mrf.mxu0
        %v5480 = vadd.f32 %v5391, %v5479
        %5481 = vmatmul.bf16.gmra.mxu0 %v4201
        %v5482 = vpop.f32.mrf.mxu0
        %v5483 = vadd.f32 %v5394, %v5482
        %v5484 = vpop.f32.mrf.mxu0
        %v5485 = vadd.f32 %v5396, %v5484
        %5486 = vmatmul.bf16.gmra.mxu0 %v4205
        %v5487 = vpop.f32.mrf.mxu0
        %v5488 = vadd.f32 %v5399, %v5487
        %v5489 = vpop.f32.mrf.mxu0
        %v5490 = vadd.f32 %v5401, %v5489
        %5491 = vmatmul.bf16.gmra.mxu0 %v4209
        %v5492 = vpop.f32.mrf.mxu0
        %v5493 = vadd.f32 %v5404, %v5492
        %v5494 = vpop.f32.mrf.mxu0
        %v5495 = vadd.f32 %v5406, %v5494
        %5496 = vmatmul.bf16.gmra.mxu0 %v4213
        %v5497 = vpop.f32.mrf.mxu0
        %v5498 = vadd.f32 %v5409, %v5497
        %v5499 = vpop.f32.mrf.mxu0
        %v5500 = vadd.f32 %v5411, %v5499
        %5501 = vdwg.mxu0
        %5502 = vmatpush.bf16.msra.mxu0 %v4621
        %5503 = vmatpush.bf16.msra.mxu0 %v4618
        %5504 = vmatpush.bf16.msra.mxu0 %v4615
        %5505 = vmatpush.bf16.msra.mxu0 %v4612
        %5506 = vmatpush.bf16.msra.mxu0 %v4609
        %5507 = vmatpush.bf16.msra.mxu0 %v4606
        %5508 = vmatpush.bf16.msra.mxu0 %v4603
        %5509 = vmatpush.bf16.msra.mxu0 %v4600
        %5510 = vmatmul.bf16.gmra.mxu0 %v4150
        %v5511 = vpop.f32.mrf.mxu0
        %v5512 = vadd.f32 %v3879, %v5511
        %v5513 = vpop.f32.mrf.mxu0
        %v5514 = vadd.f32 %v3881, %v5513
        %5515 = vmatmul.bf16.gmra.mxu0 %v4154
        %v5516 = vpop.f32.mrf.mxu0
        %v5517 = vadd.f32 %v3884, %v5516
        %v5518 = vpop.f32.mrf.mxu0
        %v5519 = vadd.f32 %v3886, %v5518
        %5520 = vmatmul.bf16.gmra.mxu0 %v4158
        %v5521 = vpop.f32.mrf.mxu0
        %v5522 = vadd.f32 %v3889, %v5521
        %v5523 = vpop.f32.mrf.mxu0
        %v5524 = vadd.f32 %v3891, %v5523
        %5525 = vmatmul.bf16.gmra.mxu0 %v4162
        %v5526 = vpop.f32.mrf.mxu0
        %v5527 = vadd.f32 %v3894, %v5526
        %v5528 = vpop.f32.mrf.mxu0
        %v5529 = vadd.f32 %v3896, %v5528
        %5530 = vmatmul.bf16.gmra.mxu0 %v4166
        %v5531 = vpop.f32.mrf.mxu0
        %v5532 = vadd.f32 %v3899, %v5531
        %v5533 = vpop.f32.mrf.mxu0
        %v5534 = vadd.f32 %v3901, %v5533
        %5535 = vmatmul.bf16.gmra.mxu0 %v4170
        %v5536 = vpop.f32.mrf.mxu0
        %v5537 = vadd.f32 %v3904, %v5536
        %v5538 = vpop.f32.mrf.mxu0
        %v5539 = vadd.f32 %v3906, %v5538
        %5540 = vmatmul.bf16.gmra.mxu0 %v4174
        %v5541 = vpop.f32.mrf.mxu0
        %v5542 = vadd.f32 %v3909, %v5541
        %v5543 = vpop.f32.mrf.mxu0
        %v5544 = vadd.f32 %v3911, %v5543
        %5545 = vmatmul.bf16.gmra.mxu0 %v4178
        %v5546 = vpop.f32.mrf.mxu0
        %v5547 = vadd.f32 %v3914, %v5546
        %v5548 = vpop.f32.mrf.mxu0
        %v5549 = vadd.f32 %v3916, %v5548
        %5550 = vmatmul.bf16.gmra.mxu0 %v4182
        %v5551 = vpop.f32.mrf.mxu0
        %v5552 = vadd.f32 %v3919, %v5551
        %v5553 = vpop.f32.mrf.mxu0
        %v5554 = vadd.f32 %v3921, %v5553
        %5555 = vmatmul.bf16.gmra.mxu0 %v4186
        %v5556 = vpop.f32.mrf.mxu0
        %v5557 = vadd.f32 %v3924, %v5556
        %v5558 = vpop.f32.mrf.mxu0
        %v5559 = vadd.f32 %v3926, %v5558
        %5560 = vmatmul.bf16.gmra.mxu0 %v4190
        %v5561 = vpop.f32.mrf.mxu0
        %v5562 = vadd.f32 %v3929, %v5561
        %v5563 = vpop.f32.mrf.mxu0
        %v5564 = vadd.f32 %v3931, %v5563
        %5565 = vmatmul.bf16.gmra.mxu0 %v4194
        %v5566 = vpop.f32.mrf.mxu0
        %v5567 = vadd.f32 %v3934, %v5566
        %v5568 = vpop.f32.mrf.mxu0
        %v5569 = vadd.f32 %v3936, %v5568
        %5570 = vmatmul.bf16.gmra.mxu0 %v4198
        %v5571 = vpop.f32.mrf.mxu0
        %v5572 = vadd.f32 %v3939, %v5571
        %v5573 = vpop.f32.mrf.mxu0
        %v5574 = vadd.f32 %v3941, %v5573
        %5575 = vmatmul.bf16.gmra.mxu0 %v4202
        %v5576 = vpop.f32.mrf.mxu0
        %v5577 = vadd.f32 %v3944, %v5576
        %v5578 = vpop.f32.mrf.mxu0
        %v5579 = vadd.f32 %v3946, %v5578
        %5580 = vmatmul.bf16.gmra.mxu0 %v4206
        %v5581 = vpop.f32.mrf.mxu0
        %v5582 = vadd.f32 %v3949, %v5581
        %v5583 = vpop.f32.mrf.mxu0
        %v5584 = vadd.f32 %v3951, %v5583
        %5585 = vmatmul.bf16.gmra.mxu0 %v4210
        %v5586 = vpop.f32.mrf.mxu0
        %v5587 = vadd.f32 %v3954, %v5586
        %v5588 = vpop.f32.mrf.mxu0
        %v5589 = vadd.f32 %v3956, %v5588
        %5590 = vdwg.mxu0
        %5591 = vmatpush.bf16.msra.mxu0 %v4645
        %5592 = vmatpush.bf16.msra.mxu0 %v4642
        %5593 = vmatpush.bf16.msra.mxu0 %v4639
        %5594 = vmatpush.bf16.msra.mxu0 %v4636
        %5595 = vmatpush.bf16.msra.mxu0 %v4633
        %5596 = vmatpush.bf16.msra.mxu0 %v4630
        %5597 = vmatpush.bf16.msra.mxu0 %v4627
        %5598 = vmatpush.bf16.msra.mxu0 %v4624
        %5599 = vmatmul.bf16.gmra.mxu0 %v4151
        %v5600 = vpop.f32.mrf.mxu0
        %v5601 = vadd.f32 %v5512, %v5600
        %v5602 = vpop.f32.mrf.mxu0
        %v5603 = vadd.f32 %v5514, %v5602
        %5604 = vmatmul.bf16.gmra.mxu0 %v4155
        %v5605 = vpop.f32.mrf.mxu0
        %v5606 = vadd.f32 %v5517, %v5605
        %v5607 = vpop.f32.mrf.mxu0
        %v5608 = vadd.f32 %v5519, %v5607
        %5609 = vmatmul.bf16.gmra.mxu0 %v4159
        %v5610 = vpop.f32.mrf.mxu0
        %v5611 = vadd.f32 %v5522, %v5610
        %v5612 = vpop.f32.mrf.mxu0
        %v5613 = vadd.f32 %v5524, %v5612
        %5614 = vmatmul.bf16.gmra.mxu0 %v4163
        %v5615 = vpop.f32.mrf.mxu0
        %v5616 = vadd.f32 %v5527, %v5615
        %v5617 = vpop.f32.mrf.mxu0
        %v5618 = vadd.f32 %v5529, %v5617
        %5619 = vmatmul.bf16.gmra.mxu0 %v4167
        %v5620 = vpop.f32.mrf.mxu0
        %v5621 = vadd.f32 %v5532, %v5620
        %v5622 = vpop.f32.mrf.mxu0
        %v5623 = vadd.f32 %v5534, %v5622
        %5624 = vmatmul.bf16.gmra.mxu0 %v4171
        %v5625 = vpop.f32.mrf.mxu0
        %v5626 = vadd.f32 %v5537, %v5625
        %v5627 = vpop.f32.mrf.mxu0
        %v5628 = vadd.f32 %v5539, %v5627
        %5629 = vmatmul.bf16.gmra.mxu0 %v4175
        %v5630 = vpop.f32.mrf.mxu0
        %v5631 = vadd.f32 %v5542, %v5630
        %v5632 = vpop.f32.mrf.mxu0
        %v5633 = vadd.f32 %v5544, %v5632
        %5634 = vmatmul.bf16.gmra.mxu0 %v4179
        %v5635 = vpop.f32.mrf.mxu0
        %v5636 = vadd.f32 %v5547, %v5635
        %v5637 = vpop.f32.mrf.mxu0
        %v5638 = vadd.f32 %v5549, %v5637
        %5639 = vmatmul.bf16.gmra.mxu0 %v4183
        %v5640 = vpop.f32.mrf.mxu0
        %v5641 = vadd.f32 %v5552, %v5640
        %v5642 = vpop.f32.mrf.mxu0
        %v5643 = vadd.f32 %v5554, %v5642
        %5644 = vmatmul.bf16.gmra.mxu0 %v4187
        %v5645 = vpop.f32.mrf.mxu0
        %v5646 = vadd.f32 %v5557, %v5645
        %v5647 = vpop.f32.mrf.mxu0
        %v5648 = vadd.f32 %v5559, %v5647
        %5649 = vmatmul.bf16.gmra.mxu0 %v4191
        %v5650 = vpop.f32.mrf.mxu0
        %v5651 = vadd.f32 %v5562, %v5650
        %v5652 = vpop.f32.mrf.mxu0
        %v5653 = vadd.f32 %v5564, %v5652
        %5654 = vmatmul.bf16.gmra.mxu0 %v4195
        %v5655 = vpop.f32.mrf.mxu0
        %v5656 = vadd.f32 %v5567, %v5655
        %v5657 = vpop.f32.mrf.mxu0
        %v5658 = vadd.f32 %v5569, %v5657
        %5659 = vmatmul.bf16.gmra.mxu0 %v4199
        %v5660 = vpop.f32.mrf.mxu0
        %v5661 = vadd.f32 %v5572, %v5660
        %v5662 = vpop.f32.mrf.mxu0
        %v5663 = vadd.f32 %v5574, %v5662
        %5664 = vmatmul.bf16.gmra.mxu0 %v4203
        %v5665 = vpop.f32.mrf.mxu0
        %v5666 = vadd.f32 %v5577, %v5665
        %v5667 = vpop.f32.mrf.mxu0
        %v5668 = vadd.f32 %v5579, %v5667
        %5669 = vmatmul.bf16.gmra.mxu0 %v4207
        %v5670 = vpop.f32.mrf.mxu0
        %v5671 = vadd.f32 %v5582, %v5670
        %v5672 = vpop.f32.mrf.mxu0
        %v5673 = vadd.f32 %v5584, %v5672
        %5674 = vmatmul.bf16.gmra.mxu0 %v4211
        %v5675 = vpop.f32.mrf.mxu0
        %v5676 = vadd.f32 %v5587, %v5675
        %v5677 = vpop.f32.mrf.mxu0
        %v5678 = vadd.f32 %v5589, %v5677
        %5679 = vdwg.mxu0
        %5680 = vmatpush.bf16.msra.mxu0 %v4669
        %5681 = vmatpush.bf16.msra.mxu0 %v4666
        %5682 = vmatpush.bf16.msra.mxu0 %v4663
        %5683 = vmatpush.bf16.msra.mxu0 %v4660
        %5684 = vmatpush.bf16.msra.mxu0 %v4657
        %5685 = vmatpush.bf16.msra.mxu0 %v4654
        %5686 = vmatpush.bf16.msra.mxu0 %v4651
        %5687 = vmatpush.bf16.msra.mxu0 %v4648
        %5688 = vmatmul.bf16.gmra.mxu0 %v4152
        %v5689 = vpop.f32.mrf.mxu0
        %v5690 = vadd.f32 %v5601, %v5689
        %v5691 = vpop.f32.mrf.mxu0
        %v5692 = vadd.f32 %v5603, %v5691
        %5693 = vmatmul.bf16.gmra.mxu0 %v4156
        %v5694 = vpop.f32.mrf.mxu0
        %v5695 = vadd.f32 %v5606, %v5694
        %v5696 = vpop.f32.mrf.mxu0
        %v5697 = vadd.f32 %v5608, %v5696
        %5698 = vmatmul.bf16.gmra.mxu0 %v4160
        %v5699 = vpop.f32.mrf.mxu0
        %v5700 = vadd.f32 %v5611, %v5699
        %v5701 = vpop.f32.mrf.mxu0
        %v5702 = vadd.f32 %v5613, %v5701
        %5703 = vmatmul.bf16.gmra.mxu0 %v4164
        %v5704 = vpop.f32.mrf.mxu0
        %v5705 = vadd.f32 %v5616, %v5704
        %v5706 = vpop.f32.mrf.mxu0
        %v5707 = vadd.f32 %v5618, %v5706
        %5708 = vmatmul.bf16.gmra.mxu0 %v4168
        %v5709 = vpop.f32.mrf.mxu0
        %v5710 = vadd.f32 %v5621, %v5709
        %v5711 = vpop.f32.mrf.mxu0
        %v5712 = vadd.f32 %v5623, %v5711
        %5713 = vmatmul.bf16.gmra.mxu0 %v4172
        %v5714 = vpop.f32.mrf.mxu0
        %v5715 = vadd.f32 %v5626, %v5714
        %v5716 = vpop.f32.mrf.mxu0
        %v5717 = vadd.f32 %v5628, %v5716
        %5718 = vmatmul.bf16.gmra.mxu0 %v4176
        %v5719 = vpop.f32.mrf.mxu0
        %v5720 = vadd.f32 %v5631, %v5719
        %v5721 = vpop.f32.mrf.mxu0
        %v5722 = vadd.f32 %v5633, %v5721
        %5723 = vmatmul.bf16.gmra.mxu0 %v4180
        %v5724 = vpop.f32.mrf.mxu0
        %v5725 = vadd.f32 %v5636, %v5724
        %v5726 = vpop.f32.mrf.mxu0
        %v5727 = vadd.f32 %v5638, %v5726
        %5728 = vmatmul.bf16.gmra.mxu0 %v4184
        %v5729 = vpop.f32.mrf.mxu0
        %v5730 = vadd.f32 %v5641, %v5729
        %v5731 = vpop.f32.mrf.mxu0
        %v5732 = vadd.f32 %v5643, %v5731
        %5733 = vmatmul.bf16.gmra.mxu0 %v4188
        %v5734 = vpop.f32.mrf.mxu0
        %v5735 = vadd.f32 %v5646, %v5734
        %v5736 = vpop.f32.mrf.mxu0
        %v5737 = vadd.f32 %v5648, %v5736
        %5738 = vmatmul.bf16.gmra.mxu0 %v4192
        %v5739 = vpop.f32.mrf.mxu0
        %v5740 = vadd.f32 %v5651, %v5739
        %v5741 = vpop.f32.mrf.mxu0
        %v5742 = vadd.f32 %v5653, %v5741
        %5743 = vmatmul.bf16.gmra.mxu0 %v4196
        %v5744 = vpop.f32.mrf.mxu0
        %v5745 = vadd.f32 %v5656, %v5744
        %v5746 = vpop.f32.mrf.mxu0
        %v5747 = vadd.f32 %v5658, %v5746
        %5748 = vmatmul.bf16.gmra.mxu0 %v4200
        %v5749 = vpop.f32.mrf.mxu0
        %v5750 = vadd.f32 %v5661, %v5749
        %v5751 = vpop.f32.mrf.mxu0
        %v5752 = vadd.f32 %v5663, %v5751
        %5753 = vmatmul.bf16.gmra.mxu0 %v4204
        %v5754 = vpop.f32.mrf.mxu0
        %v5755 = vadd.f32 %v5666, %v5754
        %v5756 = vpop.f32.mrf.mxu0
        %v5757 = vadd.f32 %v5668, %v5756
        %5758 = vmatmul.bf16.gmra.mxu0 %v4208
        %v5759 = vpop.f32.mrf.mxu0
        %v5760 = vadd.f32 %v5671, %v5759
        %v5761 = vpop.f32.mrf.mxu0
        %v5762 = vadd.f32 %v5673, %v5761
        %5763 = vmatmul.bf16.gmra.mxu0 %v4212
        %v5764 = vpop.f32.mrf.mxu0
        %v5765 = vadd.f32 %v5676, %v5764
        %v5766 = vpop.f32.mrf.mxu0
        %v5767 = vadd.f32 %v5678, %v5766
        %5768 = vdwg.mxu0
        %5769 = vmatpush.bf16.msra.mxu0 %v4693
        %5770 = vmatpush.bf16.msra.mxu0 %v4690
        %5771 = vmatpush.bf16.msra.mxu0 %v4687
        %5772 = vmatpush.bf16.msra.mxu0 %v4684
        %5773 = vmatpush.bf16.msra.mxu0 %v4681
        %5774 = vmatpush.bf16.msra.mxu0 %v4678
        %5775 = vmatpush.bf16.msra.mxu0 %v4675
        %5776 = vmatpush.bf16.msra.mxu0 %v4672
        %5777 = vmatmul.bf16.gmra.mxu0 %v4153
        %v5778 = vpop.f32.mrf.mxu0
        %v5779 = vadd.f32 %v5690, %v5778
        %v5780 = vpop.f32.mrf.mxu0
        %v5781 = vadd.f32 %v5692, %v5780
        %5782 = vmatmul.bf16.gmra.mxu0 %v4157
        %v5783 = vpop.f32.mrf.mxu0
        %v5784 = vadd.f32 %v5695, %v5783
        %v5785 = vpop.f32.mrf.mxu0
        %v5786 = vadd.f32 %v5697, %v5785
        %5787 = vmatmul.bf16.gmra.mxu0 %v4161
        %v5788 = vpop.f32.mrf.mxu0
        %v5789 = vadd.f32 %v5700, %v5788
        %v5790 = vpop.f32.mrf.mxu0
        %v5791 = vadd.f32 %v5702, %v5790
        %5792 = vmatmul.bf16.gmra.mxu0 %v4165
        %v5793 = vpop.f32.mrf.mxu0
        %v5794 = vadd.f32 %v5705, %v5793
        %v5795 = vpop.f32.mrf.mxu0
        %v5796 = vadd.f32 %v5707, %v5795
        %5797 = vmatmul.bf16.gmra.mxu0 %v4169
        %v5798 = vpop.f32.mrf.mxu0
        %v5799 = vadd.f32 %v5710, %v5798
        %v5800 = vpop.f32.mrf.mxu0
        %v5801 = vadd.f32 %v5712, %v5800
        %5802 = vmatmul.bf16.gmra.mxu0 %v4173
        %v5803 = vpop.f32.mrf.mxu0
        %v5804 = vadd.f32 %v5715, %v5803
        %v5805 = vpop.f32.mrf.mxu0
        %v5806 = vadd.f32 %v5717, %v5805
        %5807 = vmatmul.bf16.gmra.mxu0 %v4177
        %v5808 = vpop.f32.mrf.mxu0
        %v5809 = vadd.f32 %v5720, %v5808
        %v5810 = vpop.f32.mrf.mxu0
        %v5811 = vadd.f32 %v5722, %v5810
        %5812 = vmatmul.bf16.gmra.mxu0 %v4181
        %v5813 = vpop.f32.mrf.mxu0
        %v5814 = vadd.f32 %v5725, %v5813
        %v5815 = vpop.f32.mrf.mxu0
        %v5816 = vadd.f32 %v5727, %v5815
        %5817 = vmatmul.bf16.gmra.mxu0 %v4185
        %v5818 = vpop.f32.mrf.mxu0
        %v5819 = vadd.f32 %v5730, %v5818
        %v5820 = vpop.f32.mrf.mxu0
        %v5821 = vadd.f32 %v5732, %v5820
        %5822 = vmatmul.bf16.gmra.mxu0 %v4189
        %v5823 = vpop.f32.mrf.mxu0
        %v5824 = vadd.f32 %v5735, %v5823
        %v5825 = vpop.f32.mrf.mxu0
        %v5826 = vadd.f32 %v5737, %v5825
        %5827 = vmatmul.bf16.gmra.mxu0 %v4193
        %v5828 = vpop.f32.mrf.mxu0
        %v5829 = vadd.f32 %v5740, %v5828
        %v5830 = vpop.f32.mrf.mxu0
        %v5831 = vadd.f32 %v5742, %v5830
        %5832 = vmatmul.bf16.gmra.mxu0 %v4197
        %v5833 = vpop.f32.mrf.mxu0
        %v5834 = vadd.f32 %v5745, %v5833
        %v5835 = vpop.f32.mrf.mxu0
        %v5836 = vadd.f32 %v5747, %v5835
        %5837 = vmatmul.bf16.gmra.mxu0 %v4201
        %v5838 = vpop.f32.mrf.mxu0
        %v5839 = vadd.f32 %v5750, %v5838
        %v5840 = vpop.f32.mrf.mxu0
        %v5841 = vadd.f32 %v5752, %v5840
        %5842 = vmatmul.bf16.gmra.mxu0 %v4205
        %v5843 = vpop.f32.mrf.mxu0
        %v5844 = vadd.f32 %v5755, %v5843
        %v5845 = vpop.f32.mrf.mxu0
        %v5846 = vadd.f32 %v5757, %v5845
        %5847 = vmatmul.bf16.gmra.mxu0 %v4209
        %v5848 = vpop.f32.mrf.mxu0
        %v5849 = vadd.f32 %v5760, %v5848
        %v5850 = vpop.f32.mrf.mxu0
        %v5851 = vadd.f32 %v5762, %v5850
        %5852 = vmatmul.bf16.gmra.mxu0 %v4213
        %v5853 = vpop.f32.mrf.mxu0
        %v5854 = vadd.f32 %v5765, %v5853
        %v5855 = vpop.f32.mrf.mxu0
        %v5856 = vadd.f32 %v5767, %v5855
        %5857 = vdwg.mxu0
        %v5858 = vld [vmem:[%s9] sm:$0x7]
        %v5860 = vperm.slane %v5858, 0
        %v5861 = vperm.slane %v5858, 1
        %v5862 = vperm.slane %v5858, 2
        %v5866 = vadd.f32 %v5067, %v5860
        %v5867 = vadd.f32 %v5423, %v5861
        %v5868 = vadd.f32 %v5779, %v5862
        %v5869 = vadd.f32 %v5069, %v5860
        %v5870 = vadd.f32 %v5425, %v5861
        %v5871 = vadd.f32 %v5781, %v5862
        %v5872 = vadd.f32 %v5072, %v5860
        %v5873 = vadd.f32 %v5428, %v5861
        %v5874 = vadd.f32 %v5784, %v5862
        %v5875 = vadd.f32 %v5074, %v5860
        %v5876 = vadd.f32 %v5430, %v5861
        %v5877 = vadd.f32 %v5786, %v5862
        %v5878 = vadd.f32 %v5077, %v5860
        %v5879 = vadd.f32 %v5433, %v5861
        %v5880 = vadd.f32 %v5789, %v5862
        %v5881 = vadd.f32 %v5079, %v5860
        %v5882 = vadd.f32 %v5435, %v5861
        %v5883 = vadd.f32 %v5791, %v5862
        %v5884 = vadd.f32 %v5082, %v5860
        %v5885 = vadd.f32 %v5438, %v5861
        %v5886 = vadd.f32 %v5794, %v5862
        %v5887 = vadd.f32 %v5084, %v5860
        %v5888 = vadd.f32 %v5440, %v5861
        %v5889 = vadd.f32 %v5796, %v5862
        %v5890 = vadd.f32 %v5087, %v5860
        %v5891 = vadd.f32 %v5443, %v5861
        %v5892 = vadd.f32 %v5799, %v5862
        %v5893 = vadd.f32 %v5089, %v5860
        %v5894 = vadd.f32 %v5445, %v5861
        %v5895 = vadd.f32 %v5801, %v5862
        %v5896 = vadd.f32 %v5092, %v5860
        %v5897 = vadd.f32 %v5448, %v5861
        %v5898 = vadd.f32 %v5804, %v5862
        %v5899 = vadd.f32 %v5094, %v5860
        %v5900 = vadd.f32 %v5450, %v5861
        %v5901 = vadd.f32 %v5806, %v5862
        %v5902 = vadd.f32 %v5097, %v5860
        %v5903 = vadd.f32 %v5453, %v5861
        %v5904 = vadd.f32 %v5809, %v5862
        %v5905 = vadd.f32 %v5099, %v5860
        %v5906 = vadd.f32 %v5455, %v5861
        %v5907 = vadd.f32 %v5811, %v5862
        %v5908 = vadd.f32 %v5102, %v5860
        %v5909 = vadd.f32 %v5458, %v5861
        %v5910 = vadd.f32 %v5814, %v5862
        %v5911 = vadd.f32 %v5104, %v5860
        %v5912 = vadd.f32 %v5460, %v5861
        %v5913 = vadd.f32 %v5816, %v5862
        %v5914 = vadd.f32 %v5107, %v5860
        %v5915 = vadd.f32 %v5463, %v5861
        %v5916 = vadd.f32 %v5819, %v5862
        %v5917 = vadd.f32 %v5109, %v5860
        %v5918 = vadd.f32 %v5465, %v5861
        %v5919 = vadd.f32 %v5821, %v5862
        %v5920 = vadd.f32 %v5112, %v5860
        %v5921 = vadd.f32 %v5468, %v5861
        %v5922 = vadd.f32 %v5824, %v5862
        %v5923 = vadd.f32 %v5114, %v5860
        %v5924 = vadd.f32 %v5470, %v5861
        %v5925 = vadd.f32 %v5826, %v5862
        %v5926 = vadd.f32 %v5117, %v5860
        %v5927 = vadd.f32 %v5473, %v5861
        %v5928 = vadd.f32 %v5829, %v5862
        %v5929 = vadd.f32 %v5119, %v5860
        %v5930 = vadd.f32 %v5475, %v5861
        %v5931 = vadd.f32 %v5831, %v5862
        %v5932 = vadd.f32 %v5122, %v5860
        %v5933 = vadd.f32 %v5478, %v5861
        %v5934 = vadd.f32 %v5834, %v5862
        %v5935 = vadd.f32 %v5124, %v5860
        %v5936 = vadd.f32 %v5480, %v5861
        %v5937 = vadd.f32 %v5836, %v5862
        %v5938 = vadd.f32 %v5127, %v5860
        %v5939 = vadd.f32 %v5483, %v5861
        %v5940 = vadd.f32 %v5839, %v5862
        %v5941 = vadd.f32 %v5129, %v5860
        %v5942 = vadd.f32 %v5485, %v5861
        %v5943 = vadd.f32 %v5841, %v5862
        %v5944 = vadd.f32 %v5132, %v5860
        %v5945 = vadd.f32 %v5488, %v5861
        %v5946 = vadd.f32 %v5844, %v5862
        %v5947 = vadd.f32 %v5134, %v5860
        %v5948 = vadd.f32 %v5490, %v5861
        %v5949 = vadd.f32 %v5846, %v5862
        %v5950 = vadd.f32 %v5137, %v5860
        %v5951 = vadd.f32 %v5493, %v5861
        %v5952 = vadd.f32 %v5849, %v5862
        %v5953 = vadd.f32 %v5139, %v5860
        %v5954 = vadd.f32 %v5495, %v5861
        %v5955 = vadd.f32 %v5851, %v5862
        %v5956 = vadd.f32 %v5142, %v5860
        %v5957 = vadd.f32 %v5498, %v5861
        %v5958 = vadd.f32 %v5854, %v5862
        %v5959 = vadd.f32 %v5144, %v5860
        %v5960 = vadd.f32 %v5500, %v5861
        %v5961 = vadd.f32 %v5856, %v5862
        %v5962 = vmax.f32 %v5866, 0.0
        %v5963 = vmax.f32 %v5867, 0.0
        %v5964 = vmax.f32 %v5868, 0.0
        %v5965 = vmax.f32 %v5869, 0.0
        %v5966 = vmax.f32 %v5870, 0.0
        %v5967 = vmax.f32 %v5871, 0.0
        %v5968 = vmax.f32 %v5872, 0.0
        %v5969 = vmax.f32 %v5873, 0.0
        %v5970 = vmax.f32 %v5874, 0.0
        %v5971 = vmax.f32 %v5875, 0.0
        %v5972 = vmax.f32 %v5876, 0.0
        %v5973 = vmax.f32 %v5877, 0.0
        %v5974 = vmax.f32 %v5878, 0.0
        %v5975 = vmax.f32 %v5879, 0.0
        %v5976 = vmax.f32 %v5880, 0.0
        %v5977 = vmax.f32 %v5881, 0.0
        %v5978 = vmax.f32 %v5882, 0.0
        %v5979 = vmax.f32 %v5883, 0.0
        %v5980 = vmax.f32 %v5884, 0.0
        %v5981 = vmax.f32 %v5885, 0.0
        %v5982 = vmax.f32 %v5886, 0.0
        %v5983 = vmax.f32 %v5887, 0.0
        %v5984 = vmax.f32 %v5888, 0.0
        %v5985 = vmax.f32 %v5889, 0.0
        %v5986 = vmax.f32 %v5890, 0.0
        %v5987 = vmax.f32 %v5891, 0.0
        %v5988 = vmax.f32 %v5892, 0.0
        %v5989 = vmax.f32 %v5893, 0.0
        %v5990 = vmax.f32 %v5894, 0.0
        %v5991 = vmax.f32 %v5895, 0.0
        %v5992 = vmax.f32 %v5896, 0.0
        %v5993 = vmax.f32 %v5897, 0.0
        %v5994 = vmax.f32 %v5898, 0.0
        %v5995 = vmax.f32 %v5899, 0.0
        %v5996 = vmax.f32 %v5900, 0.0
        %v5997 = vmax.f32 %v5901, 0.0
        %v5998 = vmax.f32 %v5902, 0.0
        %v5999 = vmax.f32 %v5903, 0.0
        %v6000 = vmax.f32 %v5904, 0.0
        %v6001 = vmax.f32 %v5905, 0.0
        %v6002 = vmax.f32 %v5906, 0.0
        %v6003 = vmax.f32 %v5907, 0.0
        %v6004 = vmax.f32 %v5908, 0.0
        %v6005 = vmax.f32 %v5909, 0.0
        %v6006 = vmax.f32 %v5910, 0.0
        %v6007 = vmax.f32 %v5911, 0.0
        %v6008 = vmax.f32 %v5912, 0.0
        %v6009 = vmax.f32 %v5913, 0.0
        %v6010 = vmax.f32 %v5914, 0.0
        %v6011 = vmax.f32 %v5915, 0.0
        %v6012 = vmax.f32 %v5916, 0.0
        %v6013 = vmax.f32 %v5917, 0.0
        %v6014 = vmax.f32 %v5918, 0.0
        %v6015 = vmax.f32 %v5919, 0.0
        %v6016 = vmax.f32 %v5920, 0.0
        %v6017 = vmax.f32 %v5921, 0.0
        %v6018 = vmax.f32 %v5922, 0.0
        %v6019 = vmax.f32 %v5923, 0.0
        %v6020 = vmax.f32 %v5924, 0.0
        %v6021 = vmax.f32 %v5925, 0.0
        %v6022 = vmax.f32 %v5926, 0.0
        %v6023 = vmax.f32 %v5927, 0.0
        %v6024 = vmax.f32 %v5928, 0.0
        %v6025 = vmax.f32 %v5929, 0.0
        %v6026 = vmax.f32 %v5930, 0.0
        %v6027 = vmax.f32 %v5931, 0.0
        %v6028 = vmax.f32 %v5932, 0.0
        %v6029 = vmax.f32 %v5933, 0.0
        %v6030 = vmax.f32 %v5934, 0.0
        %v6031 = vmax.f32 %v5935, 0.0
        %v6032 = vmax.f32 %v5936, 0.0
        %v6033 = vmax.f32 %v5937, 0.0
        %v6034 = vmax.f32 %v5938, 0.0
        %v6035 = vmax.f32 %v5939, 0.0
        %v6036 = vmax.f32 %v5940, 0.0
        %v6037 = vmax.f32 %v5941, 0.0
        %v6038 = vmax.f32 %v5942, 0.0
        %v6039 = vmax.f32 %v5943, 0.0
        %v6040 = vmax.f32 %v5944, 0.0
        %v6041 = vmax.f32 %v5945, 0.0
        %v6042 = vmax.f32 %v5946, 0.0
        %v6043 = vmax.f32 %v5947, 0.0
        %v6044 = vmax.f32 %v5948, 0.0
        %v6045 = vmax.f32 %v5949, 0.0
        %v6046 = vmax.f32 %v5950, 0.0
        %v6047 = vmax.f32 %v5951, 0.0
        %v6048 = vmax.f32 %v5952, 0.0
        %v6049 = vmax.f32 %v5953, 0.0
        %v6050 = vmax.f32 %v5954, 0.0
        %v6051 = vmax.f32 %v5955, 0.0
        %v6052 = vmax.f32 %v5956, 0.0
        %v6053 = vmax.f32 %v5957, 0.0
        %v6054 = vmax.f32 %v5958, 0.0
        %v6055 = vmax.f32 %v5959, 0.0
        %v6056 = vmax.f32 %v5960, 0.0
        %v6057 = vmax.f32 %v5961, 0.0
        %v6058 = vpack.c.bf16 %v5965, %v5962
        %v6059 = vpack.c.bf16 %v5966, %v5963
        %v6060 = vpack.c.bf16 %v5967, %v5964
        %v6061 = vpack.c.bf16 %v5971, %v5968
        %v6062 = vpack.c.bf16 %v5972, %v5969
        %v6063 = vpack.c.bf16 %v5973, %v5970
        %v6064 = vpack.c.bf16 %v5977, %v5974
        %v6065 = vpack.c.bf16 %v5978, %v5975
        %v6066 = vpack.c.bf16 %v5979, %v5976
        %v6067 = vpack.c.bf16 %v5983, %v5980
        %v6068 = vpack.c.bf16 %v5984, %v5981
        %v6069 = vpack.c.bf16 %v5985, %v5982
        %v6070 = vpack.c.bf16 %v5989, %v5986
        %v6071 = vpack.c.bf16 %v5990, %v5987
        %v6072 = vpack.c.bf16 %v5991, %v5988
        %v6073 = vpack.c.bf16 %v5995, %v5992
        %v6074 = vpack.c.bf16 %v5996, %v5993
        %v6075 = vpack.c.bf16 %v5997, %v5994
        %v6076 = vpack.c.bf16 %v6001, %v5998
        %v6077 = vpack.c.bf16 %v6002, %v5999
        %v6078 = vpack.c.bf16 %v6003, %v6000
        %v6079 = vpack.c.bf16 %v6007, %v6004
        %v6080 = vpack.c.bf16 %v6008, %v6005
        %v6081 = vpack.c.bf16 %v6009, %v6006
        %v6082 = vpack.c.bf16 %v6013, %v6010
        %v6083 = vpack.c.bf16 %v6014, %v6011
        %v6084 = vpack.c.bf16 %v6015, %v6012
        %v6085 = vpack.c.bf16 %v6019, %v6016
        %v6086 = vpack.c.bf16 %v6020, %v6017
        %v6087 = vpack.c.bf16 %v6021, %v6018
        %v6088 = vpack.c.bf16 %v6025, %v6022
        %v6089 = vpack.c.bf16 %v6026, %v6023
        %v6090 = vpack.c.bf16 %v6027, %v6024
        %v6091 = vpack.c.bf16 %v6031, %v6028
        %v6092 = vpack.c.bf16 %v6032, %v6029
        %v6093 = vpack.c.bf16 %v6033, %v6030
        %v6094 = vpack.c.bf16 %v6037, %v6034
        %v6095 = vpack.c.bf16 %v6038, %v6035
        %v6096 = vpack.c.bf16 %v6039, %v6036
        %v6097 = vpack.c.bf16 %v6043, %v6040
        %v6098 = vpack.c.bf16 %v6044, %v6041
        %v6099 = vpack.c.bf16 %v6045, %v6042
        %v6100 = vpack.c.bf16 %v6049, %v6046
        %v6101 = vpack.c.bf16 %v6050, %v6047
        %v6102 = vpack.c.bf16 %v6051, %v6048
        %v6103 = vpack.c.bf16 %v6055, %v6052
        %v6104 = vpack.c.bf16 %v6056, %v6053
        %v6105 = vpack.c.bf16 %v6057, %v6054
        %v6106 = vld [vmem:[#allocation9] sm:$0xf]
        %v6107 = vld [vmem:[#allocation9 + $0x4] sm:$0xf]
        %v6108 = vld [vmem:[#allocation9 + $0x8] sm:$0xf]
        %v6109 = vld [vmem:[#allocation9 + $0xc] sm:$0xf]
        %v6110 = vld [vmem:[#allocation9 + $0x10] sm:$0xf]
        %v6111 = vld [vmem:[#allocation9 + $0x14] sm:$0xf]
        %v6112 = vld [vmem:[#allocation9 + $0x18] sm:$0xf]
        %v6113 = vld [vmem:[#allocation9 + $0x1c] sm:$0xf]
        %v6114 = vld [vmem:[#allocation9 + $0x20] sm:$0xf]
        %v6115 = vld [vmem:[#allocation9 + $0x24] sm:$0xf]
        %v6116 = vld [vmem:[#allocation9 + $0x28] sm:$0xf]
        %v6117 = vld [vmem:[#allocation9 + $0x2c] sm:$0xf]
        %v6118 = vld [vmem:[#allocation9 + $0x30] sm:$0xf]
        %v6119 = vld [vmem:[#allocation9 + $0x34] sm:$0xf]
        %v6120 = vld [vmem:[#allocation9 + $0x38] sm:$0xf]
        %v6121 = vld [vmem:[#allocation9 + $0x3c] sm:$0xf]
        %v6122 = vld [vmem:[#allocation9 + $0x40] sm:$0xf]
        %v6123 = vld [vmem:[#allocation9 + $0x44] sm:$0xf]
        %v6124 = vld [vmem:[#allocation9 + $0x48] sm:$0xf]
        %v6125 = vld [vmem:[#allocation9 + $0x4c] sm:$0xf]
        %v6126 = vld [vmem:[#allocation9 + $0x50] sm:$0xf]
        %v6127 = vld [vmem:[#allocation9 + $0x54] sm:$0xf]
        %v6128 = vld [vmem:[#allocation9 + $0x58] sm:$0xf]
        %v6129 = vld [vmem:[#allocation9 + $0x5c] sm:$0xf]
        %v6130 = vld [vmem:[#allocation9 + $0x60] sm:$0xf]
        %v6131 = vld [vmem:[#allocation9 + $0x64] sm:$0xf]
        %v6132 = vld [vmem:[#allocation9 + $0x68] sm:$0xf]
        %v6133 = vld [vmem:[#allocation9 + $0x6c] sm:$0xf]
        %v6134 = vld [vmem:[#allocation9 + $0x70] sm:$0xf]
        %v6135 = vld [vmem:[#allocation9 + $0x74] sm:$0xf]
        %v6136 = vld [vmem:[#allocation9 + $0x78] sm:$0xf]
        %v6137 = vld [vmem:[#allocation9 + $0x7c] sm:$0xf]
        %v6138 = vld [vmem:[#allocation9 + $0x80] sm:$0xf]
        %v6139 = vld [vmem:[#allocation9 + $0x84] sm:$0xf]
        %v6140 = vld [vmem:[#allocation9 + $0x88] sm:$0xf]
        %v6141 = vld [vmem:[#allocation9 + $0x8c] sm:$0xf]
        %v6142 = vld [vmem:[#allocation9 + $0x90] sm:$0xf]
        %v6143 = vld [vmem:[#allocation9 + $0x94] sm:$0xf]
        %v6144 = vld [vmem:[#allocation9 + $0x98] sm:$0xf]
        %v6145 = vld [vmem:[#allocation9 + $0x9c] sm:$0xf]
        %v6146 = vld [vmem:[#allocation9 + $0xa0] sm:$0xf]
        %v6147 = vld [vmem:[#allocation9 + $0xa4] sm:$0xf]
        %v6148 = vld [vmem:[#allocation9 + $0xa8] sm:$0xf]
        %v6149 = vld [vmem:[#allocation9 + $0xac] sm:$0xf]
        %v6150 = vld [vmem:[#allocation9 + $0xb0] sm:$0xf]
        %v6151 = vld [vmem:[#allocation9 + $0xb4] sm:$0xf]
        %v6152 = vld [vmem:[#allocation9 + $0xb8] sm:$0xf]
        %v6153 = vld [vmem:[#allocation9 + $0xbc] sm:$0xf]
        %v6202 = vunpack.c.l.b16 %v6106
        %v6203 = vunpack.c.l.b16 %v6107
        %v6204 = vunpack.c.l.b16 %v6108
        %v6205 = vunpack.c.l.b16 %v6109
        %v6206 = vunpack.c.l.b16 %v6110
        %v6207 = vunpack.c.l.b16 %v6111
        %v6208 = vunpack.c.l.b16 %v6112
        %v6209 = vunpack.c.l.b16 %v6113
        %v6210 = vunpack.c.l.b16 %v6114
        %v6211 = vunpack.c.l.b16 %v6115
        %v6212 = vunpack.c.l.b16 %v6116
        %v6213 = vunpack.c.l.b16 %v6117
        %v6214 = vunpack.c.l.b16 %v6118
        %v6215 = vunpack.c.l.b16 %v6119
        %v6216 = vunpack.c.l.b16 %v6120
        %v6217 = vunpack.c.l.b16 %v6121
        %v6218 = vunpack.c.l.b16 %v6122
        %v6219 = vunpack.c.l.b16 %v6123
        %v6220 = vunpack.c.l.b16 %v6124
        %v6221 = vunpack.c.l.b16 %v6125
        %v6222 = vunpack.c.l.b16 %v6126
        %v6223 = vunpack.c.l.b16 %v6127
        %v6224 = vunpack.c.l.b16 %v6128
        %v6225 = vunpack.c.l.b16 %v6129
        %v6226 = vunpack.c.l.b16 %v6130
        %v6227 = vunpack.c.l.b16 %v6131
        %v6228 = vunpack.c.l.b16 %v6132
        %v6229 = vunpack.c.l.b16 %v6133
        %v6230 = vunpack.c.l.b16 %v6134
        %v6231 = vunpack.c.l.b16 %v6135
        %v6232 = vunpack.c.l.b16 %v6136
        %v6233 = vunpack.c.l.b16 %v6137
        %v6234 = vunpack.c.l.b16 %v6138
        %v6235 = vunpack.c.l.b16 %v6139
        %v6236 = vunpack.c.l.b16 %v6140
        %v6237 = vunpack.c.l.b16 %v6141
        %v6238 = vunpack.c.l.b16 %v6142
        %v6239 = vunpack.c.l.b16 %v6143
        %v6240 = vunpack.c.l.b16 %v6144
        %v6241 = vunpack.c.l.b16 %v6145
        %v6242 = vunpack.c.l.b16 %v6146
        %v6243 = vunpack.c.l.b16 %v6147
        %v6244 = vunpack.c.l.b16 %v6148
        %v6245 = vunpack.c.l.b16 %v6149
        %v6246 = vunpack.c.l.b16 %v6150
        %v6247 = vunpack.c.l.b16 %v6151
        %v6248 = vunpack.c.l.b16 %v6152
        %v6249 = vunpack.c.l.b16 %v6153
        %v6250 = vpack.c.b16 %v6203, %v6202
        %v6251 = vpack.c.b16 %v6205, %v6204
        %v6252 = vpack.c.b16 %v6207, %v6206
        %v6253 = vpack.c.b16 %v6209, %v6208
        %v6254 = vpack.c.b16 %v6211, %v6210
        %v6255 = vpack.c.b16 %v6213, %v6212
        %v6256 = vpack.c.b16 %v6215, %v6214
        %v6257 = vpack.c.b16 %v6217, %v6216
        %v6258 = vpack.c.b16 %v6219, %v6218
        %v6259 = vpack.c.b16 %v6221, %v6220
        %v6260 = vpack.c.b16 %v6223, %v6222
        %v6261 = vpack.c.b16 %v6225, %v6224
        %v6262 = vpack.c.b16 %v6227, %v6226
        %v6263 = vpack.c.b16 %v6229, %v6228
        %v6264 = vpack.c.b16 %v6231, %v6230
        %v6265 = vpack.c.b16 %v6233, %v6232
        %v6266 = vpack.c.b16 %v6235, %v6234
        %v6267 = vpack.c.b16 %v6237, %v6236
        %v6268 = vpack.c.b16 %v6239, %v6238
        %v6269 = vpack.c.b16 %v6241, %v6240
        %v6270 = vpack.c.b16 %v6243, %v6242
        %v6271 = vpack.c.b16 %v6245, %v6244
        %v6272 = vpack.c.b16 %v6247, %v6246
        %v6273 = vpack.c.b16 %v6249, %v6248
        %6298 = vmatpush.bf16.msra.mxu0 %v6257
        %6299 = vmatpush.bf16.msra.mxu0 %v6256
        %6300 = vmatpush.bf16.msra.mxu0 %v6255
        %6301 = vmatpush.bf16.msra.mxu0 %v6254
        %6302 = vmatpush.bf16.msra.mxu0 %v6253
        %6303 = vmatpush.bf16.msra.mxu0 %v6252
        %6304 = vmatpush.bf16.msra.mxu0 %v6251
        %6305 = vmatpush.bf16.msra.mxu0 %v6250
        %6306 = vmatmul.bf16.gmra.mxu0 %v6058
        %v6307 = vpop.f32.mrf.mxu0
        %v6308 = vadd.f32 0.0, %v6307
        %v6309 = vpop.f32.mrf.mxu0
        %v6310 = vadd.f32 0.0, %v6309
        %6311 = vmatmul.bf16.gmra.mxu0 %v6061
        %v6312 = vpop.f32.mrf.mxu0
        %v6313 = vadd.f32 0.0, %v6312
        %v6314 = vpop.f32.mrf.mxu0
        %v6315 = vadd.f32 0.0, %v6314
        %6316 = vmatmul.bf16.gmra.mxu0 %v6064
        %v6317 = vpop.f32.mrf.mxu0
        %v6318 = vadd.f32 0.0, %v6317
        %v6319 = vpop.f32.mrf.mxu0
        %v6320 = vadd.f32 0.0, %v6319
        %6321 = vmatmul.bf16.gmra.mxu0 %v6067
        %v6322 = vpop.f32.mrf.mxu0
        %v6323 = vadd.f32 0.0, %v6322
        %v6324 = vpop.f32.mrf.mxu0
        %v6325 = vadd.f32 0.0, %v6324
        %6326 = vmatmul.bf16.gmra.mxu0 %v6070
        %v6327 = vpop.f32.mrf.mxu0
        %v6328 = vadd.f32 0.0, %v6327
        %v6329 = vpop.f32.mrf.mxu0
        %v6330 = vadd.f32 0.0, %v6329
        %6331 = vmatmul.bf16.gmra.mxu0 %v6073
        %v6332 = vpop.f32.mrf.mxu0
        %v6333 = vadd.f32 0.0, %v6332
        %v6334 = vpop.f32.mrf.mxu0
        %v6335 = vadd.f32 0.0, %v6334
        %6336 = vmatmul.bf16.gmra.mxu0 %v6076
        %v6337 = vpop.f32.mrf.mxu0
        %v6338 = vadd.f32 0.0, %v6337
        %v6339 = vpop.f32.mrf.mxu0
        %v6340 = vadd.f32 0.0, %v6339
        %6341 = vmatmul.bf16.gmra.mxu0 %v6079
        %v6342 = vpop.f32.mrf.mxu0
        %v6343 = vadd.f32 0.0, %v6342
        %v6344 = vpop.f32.mrf.mxu0
        %v6345 = vadd.f32 0.0, %v6344
        %6346 = vmatmul.bf16.gmra.mxu0 %v6082
        %v6347 = vpop.f32.mrf.mxu0
        %v6348 = vadd.f32 0.0, %v6347
        %v6349 = vpop.f32.mrf.mxu0
        %v6350 = vadd.f32 0.0, %v6349
        %6351 = vmatmul.bf16.gmra.mxu0 %v6085
        %v6352 = vpop.f32.mrf.mxu0
        %v6353 = vadd.f32 0.0, %v6352
        %v6354 = vpop.f32.mrf.mxu0
        %v6355 = vadd.f32 0.0, %v6354
        %6356 = vmatmul.bf16.gmra.mxu0 %v6088
        %v6357 = vpop.f32.mrf.mxu0
        %v6358 = vadd.f32 0.0, %v6357
        %v6359 = vpop.f32.mrf.mxu0
        %v6360 = vadd.f32 0.0, %v6359
        %6361 = vmatmul.bf16.gmra.mxu0 %v6091
        %v6362 = vpop.f32.mrf.mxu0
        %v6363 = vadd.f32 0.0, %v6362
        %v6364 = vpop.f32.mrf.mxu0
        %v6365 = vadd.f32 0.0, %v6364
        %6366 = vmatmul.bf16.gmra.mxu0 %v6094
        %v6367 = vpop.f32.mrf.mxu0
        %v6368 = vadd.f32 0.0, %v6367
        %v6369 = vpop.f32.mrf.mxu0
        %v6370 = vadd.f32 0.0, %v6369
        %6371 = vmatmul.bf16.gmra.mxu0 %v6097
        %v6372 = vpop.f32.mrf.mxu0
        %v6373 = vadd.f32 0.0, %v6372
        %v6374 = vpop.f32.mrf.mxu0
        %v6375 = vadd.f32 0.0, %v6374
        %6376 = vmatmul.bf16.gmra.mxu0 %v6100
        %v6377 = vpop.f32.mrf.mxu0
        %v6378 = vadd.f32 0.0, %v6377
        %v6379 = vpop.f32.mrf.mxu0
        %v6380 = vadd.f32 0.0, %v6379
        %6381 = vmatmul.bf16.gmra.mxu0 %v6103
        %v6382 = vpop.f32.mrf.mxu0
        %v6383 = vadd.f32 0.0, %v6382
        %v6384 = vpop.f32.mrf.mxu0
        %v6385 = vadd.f32 0.0, %v6384
        %6386 = vdwg.mxu0
        %6387 = vmatpush.bf16.msra.mxu0 %v6265
        %6388 = vmatpush.bf16.msra.mxu0 %v6264
        %6389 = vmatpush.bf16.msra.mxu0 %v6263
        %6390 = vmatpush.bf16.msra.mxu0 %v6262
        %6391 = vmatpush.bf16.msra.mxu0 %v6261
        %6392 = vmatpush.bf16.msra.mxu0 %v6260
        %6393 = vmatpush.bf16.msra.mxu0 %v6259
        %6394 = vmatpush.bf16.msra.mxu0 %v6258
        %6395 = vmatmul.bf16.gmra.mxu0 %v6059
        %v6396 = vpop.f32.mrf.mxu0
        %v6397 = vadd.f32 %v6308, %v6396
        %v6398 = vpop.f32.mrf.mxu0
        %v6399 = vadd.f32 %v6310, %v6398
        %6400 = vmatmul.bf16.gmra.mxu0 %v6062
        %v6401 = vpop.f32.mrf.mxu0
        %v6402 = vadd.f32 %v6313, %v6401
        %v6403 = vpop.f32.mrf.mxu0
        %v6404 = vadd.f32 %v6315, %v6403
        %6405 = vmatmul.bf16.gmra.mxu0 %v6065
        %v6406 = vpop.f32.mrf.mxu0
        %v6407 = vadd.f32 %v6318, %v6406
        %v6408 = vpop.f32.mrf.mxu0
        %v6409 = vadd.f32 %v6320, %v6408
        %6410 = vmatmul.bf16.gmra.mxu0 %v6068
        %v6411 = vpop.f32.mrf.mxu0
        %v6412 = vadd.f32 %v6323, %v6411
        %v6413 = vpop.f32.mrf.mxu0
        %v6414 = vadd.f32 %v6325, %v6413
        %6415 = vmatmul.bf16.gmra.mxu0 %v6071
        %v6416 = vpop.f32.mrf.mxu0
        %v6417 = vadd.f32 %v6328, %v6416
        %v6418 = vpop.f32.mrf.mxu0
        %v6419 = vadd.f32 %v6330, %v6418
        %6420 = vmatmul.bf16.gmra.mxu0 %v6074
        %v6421 = vpop.f32.mrf.mxu0
        %v6422 = vadd.f32 %v6333, %v6421
        %v6423 = vpop.f32.mrf.mxu0
        %v6424 = vadd.f32 %v6335, %v6423
        %6425 = vmatmul.bf16.gmra.mxu0 %v6077
        %v6426 = vpop.f32.mrf.mxu0
        %v6427 = vadd.f32 %v6338, %v6426
        %v6428 = vpop.f32.mrf.mxu0
        %v6429 = vadd.f32 %v6340, %v6428
        %6430 = vmatmul.bf16.gmra.mxu0 %v6080
        %v6431 = vpop.f32.mrf.mxu0
        %v6432 = vadd.f32 %v6343, %v6431
        %v6433 = vpop.f32.mrf.mxu0
        %v6434 = vadd.f32 %v6345, %v6433
        %6435 = vmatmul.bf16.gmra.mxu0 %v6083
        %v6436 = vpop.f32.mrf.mxu0
        %v6437 = vadd.f32 %v6348, %v6436
        %v6438 = vpop.f32.mrf.mxu0
        %v6439 = vadd.f32 %v6350, %v6438
        %6440 = vmatmul.bf16.gmra.mxu0 %v6086
        %v6441 = vpop.f32.mrf.mxu0
        %v6442 = vadd.f32 %v6353, %v6441
        %v6443 = vpop.f32.mrf.mxu0
        %v6444 = vadd.f32 %v6355, %v6443
        %6445 = vmatmul.bf16.gmra.mxu0 %v6089
        %v6446 = vpop.f32.mrf.mxu0
        %v6447 = vadd.f32 %v6358, %v6446
        %v6448 = vpop.f32.mrf.mxu0
        %v6449 = vadd.f32 %v6360, %v6448
        %6450 = vmatmul.bf16.gmra.mxu0 %v6092
        %v6451 = vpop.f32.mrf.mxu0
        %v6452 = vadd.f32 %v6363, %v6451
        %v6453 = vpop.f32.mrf.mxu0
        %v6454 = vadd.f32 %v6365, %v6453
        %6455 = vmatmul.bf16.gmra.mxu0 %v6095
        %v6456 = vpop.f32.mrf.mxu0
        %v6457 = vadd.f32 %v6368, %v6456
        %v6458 = vpop.f32.mrf.mxu0
        %v6459 = vadd.f32 %v6370, %v6458
        %6460 = vmatmul.bf16.gmra.mxu0 %v6098
        %v6461 = vpop.f32.mrf.mxu0
        %v6462 = vadd.f32 %v6373, %v6461
        %v6463 = vpop.f32.mrf.mxu0
        %v6464 = vadd.f32 %v6375, %v6463
        %6465 = vmatmul.bf16.gmra.mxu0 %v6101
        %v6466 = vpop.f32.mrf.mxu0
        %v6467 = vadd.f32 %v6378, %v6466
        %v6468 = vpop.f32.mrf.mxu0
        %v6469 = vadd.f32 %v6380, %v6468
        %6470 = vmatmul.bf16.gmra.mxu0 %v6104
        %v6471 = vpop.f32.mrf.mxu0
        %v6472 = vadd.f32 %v6383, %v6471
        %v6473 = vpop.f32.mrf.mxu0
        %v6474 = vadd.f32 %v6385, %v6473
        %6475 = vdwg.mxu0
        %6476 = vmatpush.bf16.msra.mxu0 %v6273
        %6477 = vmatpush.bf16.msra.mxu0 %v6272
        %6478 = vmatpush.bf16.msra.mxu0 %v6271
        %6479 = vmatpush.bf16.msra.mxu0 %v6270
        %6480 = vmatpush.bf16.msra.mxu0 %v6269
        %6481 = vmatpush.bf16.msra.mxu0 %v6268
        %6482 = vmatpush.bf16.msra.mxu0 %v6267
        %6483 = vmatpush.bf16.msra.mxu0 %v6266
        %6484 = vmatmul.bf16.gmra.mxu0 %v6060
        %v6485 = vpop.f32.mrf.mxu0
        %v6486 = vadd.f32 %v6397, %v6485
        %v6487 = vpop.f32.mrf.mxu0
        %v6488 = vadd.f32 %v6399, %v6487
        %6489 = vmatmul.bf16.gmra.mxu0 %v6063
        %v6490 = vpop.f32.mrf.mxu0
        %v6491 = vadd.f32 %v6402, %v6490
        %v6492 = vpop.f32.mrf.mxu0
        %v6493 = vadd.f32 %v6404, %v6492
        %6494 = vmatmul.bf16.gmra.mxu0 %v6066
        %v6495 = vpop.f32.mrf.mxu0
        %v6496 = vadd.f32 %v6407, %v6495
        %v6497 = vpop.f32.mrf.mxu0
        %v6498 = vadd.f32 %v6409, %v6497
        %6499 = vmatmul.bf16.gmra.mxu0 %v6069
        %v6500 = vpop.f32.mrf.mxu0
        %v6501 = vadd.f32 %v6412, %v6500
        %v6502 = vpop.f32.mrf.mxu0
        %v6503 = vadd.f32 %v6414, %v6502
        %6504 = vmatmul.bf16.gmra.mxu0 %v6072
        %v6505 = vpop.f32.mrf.mxu0
        %v6506 = vadd.f32 %v6417, %v6505
        %v6507 = vpop.f32.mrf.mxu0
        %v6508 = vadd.f32 %v6419, %v6507
        %6509 = vmatmul.bf16.gmra.mxu0 %v6075
        %v6510 = vpop.f32.mrf.mxu0
        %v6511 = vadd.f32 %v6422, %v6510
        %v6512 = vpop.f32.mrf.mxu0
        %v6513 = vadd.f32 %v6424, %v6512
        %6514 = vmatmul.bf16.gmra.mxu0 %v6078
        %v6515 = vpop.f32.mrf.mxu0
        %v6516 = vadd.f32 %v6427, %v6515
        %v6517 = vpop.f32.mrf.mxu0
        %v6518 = vadd.f32 %v6429, %v6517
        %6519 = vmatmul.bf16.gmra.mxu0 %v6081
        %v6520 = vpop.f32.mrf.mxu0
        %v6521 = vadd.f32 %v6432, %v6520
        %v6522 = vpop.f32.mrf.mxu0
        %v6523 = vadd.f32 %v6434, %v6522
        %6524 = vmatmul.bf16.gmra.mxu0 %v6084
        %v6525 = vpop.f32.mrf.mxu0
        %v6526 = vadd.f32 %v6437, %v6525
        %v6527 = vpop.f32.mrf.mxu0
        %v6528 = vadd.f32 %v6439, %v6527
        %6529 = vmatmul.bf16.gmra.mxu0 %v6087
        %v6530 = vpop.f32.mrf.mxu0
        %v6531 = vadd.f32 %v6442, %v6530
        %v6532 = vpop.f32.mrf.mxu0
        %v6533 = vadd.f32 %v6444, %v6532
        %6534 = vmatmul.bf16.gmra.mxu0 %v6090
        %v6535 = vpop.f32.mrf.mxu0
        %v6536 = vadd.f32 %v6447, %v6535
        %v6537 = vpop.f32.mrf.mxu0
        %v6538 = vadd.f32 %v6449, %v6537
        %6539 = vmatmul.bf16.gmra.mxu0 %v6093
        %v6540 = vpop.f32.mrf.mxu0
        %v6541 = vadd.f32 %v6452, %v6540
        %v6542 = vpop.f32.mrf.mxu0
        %v6543 = vadd.f32 %v6454, %v6542
        %6544 = vmatmul.bf16.gmra.mxu0 %v6096
        %v6545 = vpop.f32.mrf.mxu0
        %v6546 = vadd.f32 %v6457, %v6545
        %v6547 = vpop.f32.mrf.mxu0
        %v6548 = vadd.f32 %v6459, %v6547
        %6549 = vmatmul.bf16.gmra.mxu0 %v6099
        %v6550 = vpop.f32.mrf.mxu0
        %v6551 = vadd.f32 %v6462, %v6550
        %v6552 = vpop.f32.mrf.mxu0
        %v6553 = vadd.f32 %v6464, %v6552
        %6554 = vmatmul.bf16.gmra.mxu0 %v6102
        %v6555 = vpop.f32.mrf.mxu0
        %v6556 = vadd.f32 %v6467, %v6555
        %v6557 = vpop.f32.mrf.mxu0
        %v6558 = vadd.f32 %v6469, %v6557
        %6559 = vmatmul.bf16.gmra.mxu0 %v6105
        %v6560 = vpop.f32.mrf.mxu0
        %v6561 = vadd.f32 %v6472, %v6560
        %v6562 = vpop.f32.mrf.mxu0
        %v6563 = vadd.f32 %v6474, %v6562
        %6564 = vdwg.mxu0
        %v6565 = vld [vmem:[%s11] sm:$0x1]
        %v6567 = vperm.slane %v6565, 0
        %v6569 = vadd.f32 %v6486, %v6567
        %v6570 = vadd.f32 %v6488, %v6567
        %v6571 = vadd.f32 %v6491, %v6567
        %v6572 = vadd.f32 %v6493, %v6567
        %v6573 = vadd.f32 %v6496, %v6567
        %v6574 = vadd.f32 %v6498, %v6567
        %v6575 = vadd.f32 %v6501, %v6567
        %v6576 = vadd.f32 %v6503, %v6567
        %v6577 = vadd.f32 %v6506, %v6567
        %v6578 = vadd.f32 %v6508, %v6567
        %v6579 = vadd.f32 %v6511, %v6567
        %v6580 = vadd.f32 %v6513, %v6567
        %v6581 = vadd.f32 %v6516, %v6567
        %v6582 = vadd.f32 %v6518, %v6567
        %v6583 = vadd.f32 %v6521, %v6567
        %v6584 = vadd.f32 %v6523, %v6567
        %v6585 = vadd.f32 %v6526, %v6567
        %v6586 = vadd.f32 %v6528, %v6567
        %v6587 = vadd.f32 %v6531, %v6567
        %v6588 = vadd.f32 %v6533, %v6567
        %v6589 = vadd.f32 %v6536, %v6567
        %v6590 = vadd.f32 %v6538, %v6567
        %v6591 = vadd.f32 %v6541, %v6567
        %v6592 = vadd.f32 %v6543, %v6567
        %v6593 = vadd.f32 %v6546, %v6567
        %v6594 = vadd.f32 %v6548, %v6567
        %v6595 = vadd.f32 %v6551, %v6567
        %v6596 = vadd.f32 %v6553, %v6567
        %v6597 = vadd.f32 %v6556, %v6567
        %v6598 = vadd.f32 %v6558, %v6567
        %v6599 = vadd.f32 %v6561, %v6567
        %v6600 = vadd.f32 %v6563, %v6567
        %vm6601 = vcmask 7168
        %6602 = vst.msk [vmem:[%s522] sm:$0xff] %vm6601, %v6569
        %6603 = vst.msk [vmem:[%s522 + $0x8] sm:$0xff] %vm6601, %v6570
        %6604 = vst.msk [vmem:[%s522 + $0x10] sm:$0xff] %vm6601, %v6571
        %6605 = vst.msk [vmem:[%s522 + $0x18] sm:$0xff] %vm6601, %v6572
        %6606 = vst.msk [vmem:[%s522 + $0x20] sm:$0xff] %vm6601, %v6573
        %6607 = vst.msk [vmem:[%s522 + $0x28] sm:$0xff] %vm6601, %v6574
        %6608 = vst.msk [vmem:[%s522 + $0x30] sm:$0xff] %vm6601, %v6575
        %6609 = vst.msk [vmem:[%s522 + $0x38] sm:$0xff] %vm6601, %v6576
        %6610 = vst.msk [vmem:[%s522 + $0x40] sm:$0xff] %vm6601, %v6577
        %6611 = vst.msk [vmem:[%s522 + $0x48] sm:$0xff] %vm6601, %v6578
        %6612 = vst.msk [vmem:[%s522 + $0x50] sm:$0xff] %vm6601, %v6579
        %6613 = vst.msk [vmem:[%s522 + $0x58] sm:$0xff] %vm6601, %v6580
        %6614 = vst.msk [vmem:[%s522 + $0x60] sm:$0xff] %vm6601, %v6581
        %6615 = vst.msk [vmem:[%s522 + $0x68] sm:$0xff] %vm6601, %v6582
        %6616 = vst.msk [vmem:[%s522 + $0x70] sm:$0xff] %vm6601, %v6583
        %6617 = vst.msk [vmem:[%s522 + $0x78] sm:$0xff] %vm6601, %v6584
        %6618 = vst.msk [vmem:[%s522 + $0x80] sm:$0xff] %vm6601, %v6585
        %6619 = vst.msk [vmem:[%s522 + $0x88] sm:$0xff] %vm6601, %v6586
        %6620 = vst.msk [vmem:[%s522 + $0x90] sm:$0xff] %vm6601, %v6587
        %6621 = vst.msk [vmem:[%s522 + $0x98] sm:$0xff] %vm6601, %v6588
        %6622 = vst.msk [vmem:[%s522 + $0xa0] sm:$0xff] %vm6601, %v6589
        %6623 = vst.msk [vmem:[%s522 + $0xa8] sm:$0xff] %vm6601, %v6590
        %6624 = vst.msk [vmem:[%s522 + $0xb0] sm:$0xff] %vm6601, %v6591
        %6625 = vst.msk [vmem:[%s522 + $0xb8] sm:$0xff] %vm6601, %v6592
        %6626 = vst.msk [vmem:[%s522 + $0xc0] sm:$0xff] %vm6601, %v6593
        %6627 = vst.msk [vmem:[%s522 + $0xc8] sm:$0xff] %vm6601, %v6594
        %6628 = vst.msk [vmem:[%s522 + $0xd0] sm:$0xff] %vm6601, %v6595
        %6629 = vst.msk [vmem:[%s522 + $0xd8] sm:$0xff] %vm6601, %v6596
        %6630 = vst.msk [vmem:[%s522 + $0xe0] sm:$0xff] %vm6601, %v6597
        %6631 = vst.msk [vmem:[%s522 + $0xe8] sm:$0xff] %vm6601, %v6598
        %6632 = vst.msk [vmem:[%s522 + $0xf0] sm:$0xff] %vm6601, %v6599
        %6633 = vst.msk [vmem:[%s522 + $0xf8] sm:$0xff] %vm6601, %v6600
        %s6634 = smul.u32 2, %s26
        %p6635 = scmp.lt.s32.totalorder %s6634, 3
        %s6636 = scalar_select %p6635, %s6634, 3
        %s6637 = smul.addr %s6636, 16
        %s6638 = smul.addr %s6637, 8
        %s6639 = scalar_lea.vmem %s12, %s6638
        // Predicated region
        $region89: #{tpu_custom_call.1} parent=67 // pred_check
          %p6640 = pneg %p306
        $region90: #{tpu_custom_call.1} parent=67 // pred_check_branch
          %6642 = sbr.rel (%p6640) target = $region92
        $region91: #{tpu_custom_call.1} parent=67 // pred_region
          %s6643 = smul.u32 2, %s26
        $region92: #{tpu_custom_call.1} parent=67 // pred_fallthru
          _
      $region68: #{tpu_custom_call.1} parent=5 // pred_fallthru
        _
      %p6644 = scmp.le.s32.totalorder 2, %s21
      // Predicated region
      $region93: #{tpu_custom_call.1} parent=5 // pred_check
        %p6645 = pneg %p6644
      $region94: #{tpu_custom_call.1} parent=5 // pred_check_branch
        %6647 = sbr.rel (%p6645) target = $region96
      $region95: #{tpu_custom_call.1} parent=5 // pred_region
        %s6648 = ssub.s32 %s21, 2
        // Predicated region
        $region97: #{tpu_custom_call.1} parent=95 // pred_check
          %p6649 = pneg %p312
        $region98: #{tpu_custom_call.1} parent=95 // pred_check_branch
          %6651 = sbr.rel (%p6649) target = $region100
        $region99: #{tpu_custom_call.1} parent=95 // pred_region
          %s6652 = smul.u32 2, %s27
          %p6653 = scmp.lt.s32.totalorder %s6652, 3
          %s6654 = scalar_select %p6653, %s6652, 3
          %s6655 = smul.addr %s6654, 16
          %s6656 = smul.addr %s6655, 8
          %s6657 = scalar_lea.vmem %s12, %s6656
        $region100: #{tpu_custom_call.1} parent=95 // pred_fallthru
          _
      $region96: #{tpu_custom_call.1} parent=5 // pred_fallthru
        _
    $region6: #{tpu_custom_call.1} parent=1 // loop_footer
      %s25 = sadd.s32 1, %s21
    $region7: #{tpu_custom_call.1} parent=1 // loop_footer_branch
      %20 = sbr.rel target = $region3
    $region8: #{tpu_custom_call.1} parent=1 // loop_exit
      _
    %6658 = vsyncpa [#allocation3], 1
    %s6659 = scalar_lea.sflag [#allocation3], 1
    %6660 = vsyncpa %s6659, 1
    %6661 = vsyncpa [#allocation5], 1
    %6662 = vsyncpa [#allocation8], 1

</llo_original>
